<compile_context>
chip_gen: v6e
topology: v6e:2x2x1
jax: 0.10.0
libtpu: 0.0.40
codegen_flags: <defaults>
</compile_context>

<pallas_src>
import functools

import jax
import jax.numpy as jnp
from jax.experimental import pallas as pl
from jax.experimental.pallas import tpu as pltpu

TM = 256      # row tile for the conv matmuls (>=2 grid steps for conv1/conv2)
LANE = 128    # pad output channels / FC widths to a multiple of this


# ----------------------------- Pallas kernels -------------------------------
def _matmul_shift_kernel(x_ref, w_ref, s_ref, o_ref, *, apply_relu):
    # x_ref: (bm, K) bf16, w_ref: (K, N) bf16 (BN scale folded in),
    # s_ref: (1, N) f32 (bias + BN shift folded), o_ref: (bm, N)
    acc = jnp.dot(x_ref[...], w_ref[...], preferred_element_type=jnp.float32)
    acc = acc + s_ref[...]
    if apply_relu:
        acc = jnp.maximum(acc, 0.0)
    o_ref[...] = acc.astype(o_ref.dtype)


def _fc_chain_kernel(x_ref, w1_ref, s1_ref, w2_ref, s2_ref, w3_ref, s3_ref,
                     o_ref):
    # fc1 -> ReLU -> fc2 -> ReLU -> dropout(eval: identity) -> fc3
    h = jnp.dot(x_ref[...], w1_ref[...],
                preferred_element_type=jnp.float32) + s1_ref[...]
    h = jnp.maximum(h, 0.0).astype(jnp.bfloat16)
    h = jnp.dot(h, w2_ref[...],
                preferred_element_type=jnp.float32) + s2_ref[...]
    h = jnp.maximum(h, 0.0).astype(jnp.bfloat16)
    o_ref[...] = jnp.dot(h, w3_ref[...],
                         preferred_element_type=jnp.float32) + s3_ref[...]


# ------------------------------ kernel wrappers ------------------------------
def fused_matmul(x, w, shift, *, apply_relu, out_dtype):
    """y = [relu](x @ w + shift); x: (M, K) bf16, w: (K, N) bf16, shift: (N,)."""
    M, K = x.shape
    Kw, N = w.shape
    assert K == Kw
    bm = min(TM, M)
    grid_m = pl.cdiv(M, bm)            # no jnp.pad: last partial block masked
    return pl.pallas_call(
        functools.partial(_matmul_shift_kernel, apply_relu=apply_relu),
        out_shape=jax.ShapeDtypeStruct((M, N), out_dtype),
        grid=(grid_m,),
        in_specs=[
            pl.BlockSpec((bm, K), lambda i: (i, 0)),
            pl.BlockSpec((K, N), lambda i: (0, 0)),
            pl.BlockSpec((1, N), lambda i: (0, 0)),
        ],
        out_specs=pl.BlockSpec((bm, N), lambda i: (i, 0)),
        compiler_params=pltpu.CompilerParams(
            dimension_semantics=("parallel",)),
    )(x, w, shift.reshape(1, N).astype(jnp.float32))


def fc_chain(x, fc1, fc2, fc3):
    """Fused fc1+ReLU -> fc2+ReLU -> (dropout=identity) -> fc3 in one call."""
    (w1, b1), (w2, b2), (w3, b3) = fc1, fc2, fc3
    M = x.shape[0]
    N = w3.shape[1]
    return pl.pallas_call(
        _fc_chain_kernel,
        out_shape=jax.ShapeDtypeStruct((M, N), jnp.float32),
    )(x, w1, b1.reshape(1, -1), w2, b2.reshape(1, -1), w3, b3.reshape(1, -1))


# ------------------------------- glue (JAX) ----------------------------------
def im2col_nhwc(x, kh, kw, sh, sw):
    """NHWC -> patch matrix (B*Ho*Wo, kh*kw*C), column order (i, j, c)."""
    B, H, W, C = x.shape
    Ho = (H - kh) // sh + 1
    Wo = (W - kw) // sw + 1
    cols = []
    for i in range(kh):
        for j in range(kw):
            cols.append(x[:, i:i + sh * Ho:sh, j:j + sw * Wo:sw, :])
    patches = jnp.stack(cols, axis=3)            # (B, Ho, Wo, kh*kw, C)
    return patches.reshape(B * Ho * Wo, kh * kw * C), Ho, Wo


def encoder_cnn_forward(prepped, x_3d):
    """x_3d: (B, T, 3, H, W) -> (B, T, CNN_embed_dim)."""
    B, T, C, H, W = x_3d.shape
    BT = B * T
    # Fold T into the batch; single transpose to channels-last; bf16 feed.
    x = x_3d.reshape(BT, C, H, W).transpose(0, 2, 3, 1).astype(jnp.bfloat16)
    for (w, shift, kh, kw, sh, sw) in prepped["convs"]:
        patches, Ho, Wo = im2col_nhwc(x, kh, kw, sh, sw)
        y = fused_matmul(patches, w, shift, apply_relu=True,
                         out_dtype=jnp.bfloat16)
        x = y.reshape(BT, Ho, Wo, w.shape[1])    # stay channels-last (no transpose)
    feat = x.reshape(BT, -1)                     # flatten (h, w, c) order
    out = fc_chain(feat, *prepped["fc"])         # (BT, 128*) f32
    out = out[:, :prepped["embed_dim"]]          # drop lane padding
    return out.reshape(B, T, prepped["embed_dim"])


# --------------------------- parameter handling ------------------------------
def _round_up(n, m):
    return ((n + m - 1) // m) * m


def make_params(key, fc_hidden1=32, fc_hidden2=32, embed_dim=16,
                conv4_flat=256):
    """Random params in PyTorch layout (Conv2d: (Cout,Cin,kh,kw), Linear: (out,in))."""
    ch = (3, 32, 64, 128, 256)
    ks = (5, 3, 3, 3)
    params = {}
    for li in range(4):
        key, k1, k2, k3, k4, k5, k6 = jax.random.split(key, 7)
        cin, cout, k = ch[li], ch[li + 1], ks[li]
        params[f"conv{li + 1}"] = dict(
            w=0.05 * jax.random.normal(k1, (cout, cin, k, k), jnp.float32),
            b=0.05 * jax.random.normal(k2, (cout,), jnp.float32),
            gamma=jax.random.uniform(k3, (cout,), jnp.float32, 0.5, 1.5),
            beta=0.05 * jax.random.normal(k4, (cout,), jnp.float32),
            mean=0.05 * jax.random.normal(k5, (cout,), jnp.float32),
            var=jax.random.uniform(k6, (cout,), jnp.float32, 0.5, 1.5),
        )
    dims = [(conv4_flat, fc_hidden1), (fc_hidden1, fc_hidden2),
            (fc_hidden2, embed_dim)]
    for li, (din, dout) in enumerate(dims):
        key, k1, k2 = jax.random.split(key, 3)
        params[f"fc{li + 1}"] = dict(
            w=0.05 * jax.random.normal(k1, (dout, din), jnp.float32),
            b=0.05 * jax.random.normal(k2, (dout,), jnp.float32),
        )
    return params


def prepare_params(params, conv4_outshape, embed_dim):
    """Fold eval-mode BN + bias into weights, go channels-last, pad output
    widths to multiples of 128, cast weights to bf16 (done once)."""
    eps = 1e-5
    strides = ((2, 2), (2, 2), (2, 2), (2, 2))
    convs = []
    cin_pad = 3                        # conv1 sees the raw 3-channel input
    for li in range(4):
        p = params[f"conv{li + 1}"]
        cout, cin, kh, kw = p["w"].shape
        cout_pad = _round_up(cout, LANE)
        scale = p["gamma"] / jnp.sqrt(p["var"] + eps)
        shift = (p["b"] - p["mean"]) * scale + p["beta"]
        w = (p["w"] * scale[:, None, None, None]).transpose(2, 3, 1, 0)
        w = jnp.pad(w, ((0, 0), (0, 0),
                        (0, cin_pad - cin), (0, cout_pad - cout)))
        convs.append((
            w.reshape(kh * kw * cin_pad, cout_pad).astype(jnp.bfloat16),
            jnp.pad(shift, (0, cout_pad - cout)).astype(jnp.float32),
            kh, kw, strides[li][0], strides[li][1]))
        cin_pad = cout_pad             # next layer's input channels are padded

    ho4, wo4 = conv4_outshape
    ch4 = params["conv4"]["w"].shape[0]
    ch4_pad = _round_up(ch4, LANE)

    # fc1: reorder columns from torch (c, h, w) flatten to channels-last (h, w, c)
    p1 = params["fc1"]
    d1_out = p1["w"].shape[0]
    n1 = _round_up(d1_out, LANE)
    w1 = p1["w"].reshape(d1_out, ch4, ho4, wo4)
    w1 = jnp.pad(w1, ((0, 0), (0, ch4_pad - ch4), (0, 0), (0, 0)))
    w1 = w1.transpose(0, 2, 3, 1).reshape(d1_out, ho4 * wo4 * ch4_pad).T
    w1 = jnp.pad(w1, ((0, 0), (0, n1 - d1_out))).astype(jnp.bfloat16)
    b1 = jnp.pad(p1["b"], (0, n1 - d1_out)).astype(jnp.float32)

    p2 = params["fc2"]
    d2_out, d2_in = p2["w"].shape
    n2 = _round_up(d2_out, LANE)
    w2 = jnp.pad(p2["w"].T, ((0, n1 - d2_in),
                             (0, n2 - d2_out))).astype(jnp.bfloat16)
    b2 = jnp.pad(p2["b"], (0, n2 - d2_out)).astype(jnp.float32)

    p3 = params["fc3"]
    d3_out, d3_in = p3["w"].shape
    n3 = _round_up(d3_out, LANE)
    w3 = jnp.pad(p3["w"].T, ((0, n2 - d3_in),
                             (0, n3 - d3_out))).astype(jnp.bfloat16)
    b3 = jnp.pad(p3["b"], (0, n3 - d3_out)).astype(jnp.float32)

    return {"convs": convs,
            "fc": ((w1, b1), (w2, b2), (w3, b3)),
            "embed_dim": embed_dim}


# --------------------------------- main --------------------------------------
if __name__ == "__main__":
    # Small shapes: B=2, T=3, 3x34x34 frames.
    # conv chain: 34 -> 15 -> 7 -> 3 -> 1, so flattened = 256*1*1 = 256.
    B, T, H, W = 2, 3, 34, 34
    key = jax.random.PRNGKey(0)
    key, kx = jax.random.split(key)
    x_3d = jax.random.normal(kx, (B, T, 3, H, W), jnp.float32)

    params = make_params(key, fc_hidden1=32, fc_hidden2=32, embed_dim=16,
                         conv4_flat=256)
    prepped = prepare_params(params, conv4_outshape=(1, 1), embed_dim=16)

    fwd = jax.jit(lambda xi: encoder_cnn_forward(prepped, xi))
    out = jax.block_until_ready(fwd(x_3d))
    assert out.shape == (B, T, 16), out.shape
    assert jnp.all(jnp.isfinite(out))
    print("KERNEL_OK")
</pallas_src>

<mosaic_0001>
module attributes {stable_mosaic.version = 11 : i64} {
  func.func @_matmul_shift_kernel(%arg0: i32, %arg1: memref<256x75xbf16, #tpu.memory_space<vmem>>, %arg2: memref<75x128xbf16, #tpu.memory_space<vmem>>, %arg3: memref<1x128xf32, #tpu.memory_space<vmem>>, %arg4: memref<256x128xbf16, #tpu.memory_space<vmem>>) attributes {dimension_semantics = [#tpu.dimension_semantics<parallel>], iteration_bounds = array<i64: 6>, scalar_prefetch = 0 : i64, scratch_operands = 0 : i64, tpu.core_type = #tpu.core_type<tc>, window_params = [{transform_indices = @transform_0, window_bounds = array<i64: 256, 75>}, {pipeline_mode = #tpu.pipeline_mode<synchronous>, transform_indices = @transform_1, window_bounds = array<i64: 75, 128>}, {pipeline_mode = #tpu.pipeline_mode<synchronous>, transform_indices = @transform_2, window_bounds = array<i64: 1, 128>}, {transform_indices = @transform_3, window_bounds = array<i64: 256, 128>}]} {
    %c0 = arith.constant 0 : index
    %c0_0 = arith.constant 0 : index
    %0 = vector.load %arg1[%c0, %c0_0] : memref<256x75xbf16, #tpu.memory_space<vmem>>, vector<256x75xbf16>
    %c0_1 = arith.constant 0 : index
    %c0_2 = arith.constant 0 : index
    %1 = vector.load %arg2[%c0_1, %c0_2] : memref<75x128xbf16, #tpu.memory_space<vmem>>, vector<75x128xbf16>
    %cst = arith.constant dense<0.000000e+00> : vector<256x128xf32>
    %2 = tpu.matmul %0, %1, %cst {dimension_numbers = #tpu.dot_dimension_numbers<[1], [0], [0], [1], [0, 0, 1, 1], [], []>} : vector<256x75xbf16>, vector<75x128xbf16>, vector<256x128xf32> -> vector<256x128xf32>
    %c0_3 = arith.constant 0 : index
    %c0_4 = arith.constant 0 : index
    %3 = vector.load %arg3[%c0_3, %c0_4] : memref<1x128xf32, #tpu.memory_space<vmem>>, vector<1x128xf32>
    %4 = vector.broadcast %3 : vector<1x128xf32> to vector<256x128xf32>
    %5 = arith.addf %2, %4 : vector<256x128xf32>
    %cst_5 = arith.constant 0.000000e+00 : f32
    %6 = vector.broadcast %cst_5 : f32 to vector<256x128xf32>
    %7 = arith.maximumf %5, %6 : vector<256x128xf32>
    %8 = arith.truncf %7 : vector<256x128xf32> to vector<256x128xbf16>
    %c0_6 = arith.constant 0 : index
    %c0_7 = arith.constant 0 : index
    %9 = vector.load %arg4[%c0_6, %c0_7] : memref<256x128xbf16, #tpu.memory_space<vmem>>, vector<256x128xbf16>
    tpu.vector_store %arg4[%c0_6, %c0_7], %8 {strides = array<i32>} : memref<256x128xbf16, #tpu.memory_space<vmem>>, vector<256x128xbf16>,
    return
  }
  func.func @transform_0(%arg0: i32) -> (i32, i32) {
    %c0_i32 = arith.constant 0 : i32
    %c0_i32_0 = arith.constant 0 : i32
    return %arg0, %c0_i32 : i32, i32
  }
  func.func @transform_1(%arg0: i32) -> (i32, i32) {
    %c0_i32 = arith.constant 0 : i32
    %c0_i32_0 = arith.constant 0 : i32
    %c0_i32_1 = arith.constant 0 : i32
    return %c0_i32, %c0_i32_0 : i32, i32
  }
  func.func @transform_2(%arg0: i32) -> (i32, i32) {
    %c0_i32 = arith.constant 0 : i32
    %c0_i32_0 = arith.constant 0 : i32
    %c0_i32_1 = arith.constant 0 : i32
    return %c0_i32, %c0_i32_0 : i32, i32
  }
  func.func @transform_3(%arg0: i32) -> (i32, i32) {
    %c0_i32 = arith.constant 0 : i32
    %c0_i32_0 = arith.constant 0 : i32
    return %arg0, %c0_i32 : i32, i32
  }
}

module attributes {stable_mosaic.version = 11 : i64} {
  func.func @_matmul_shift_kernel(%arg0: i32, %arg1: memref<256x1152xbf16, #tpu.memory_space<vmem>>, %arg2: memref<1152x128xbf16, #tpu.memory_space<vmem>>, %arg3: memref<1x128xf32, #tpu.memory_space<vmem>>, %arg4: memref<256x128xbf16, #tpu.memory_space<vmem>>) attributes {dimension_semantics = [#tpu.dimension_semantics<parallel>], iteration_bounds = array<i64: 2>, scalar_prefetch = 0 : i64, scratch_operands = 0 : i64, tpu.core_type = #tpu.core_type<tc>, window_params = [{transform_indices = @transform_0, window_bounds = array<i64: 256, 1152>}, {pipeline_mode = #tpu.pipeline_mode<synchronous>, transform_indices = @transform_1, window_bounds = array<i64: 1152, 128>}, {pipeline_mode = #tpu.pipeline_mode<synchronous>, transform_indices = @transform_2, window_bounds = array<i64: 1, 128>}, {transform_indices = @transform_3, window_bounds = array<i64: 256, 128>}]} {
    %c0 = arith.constant 0 : index
    %c0_0 = arith.constant 0 : index
    %0 = vector.load %arg1[%c0, %c0_0] : memref<256x1152xbf16, #tpu.memory_space<vmem>>, vector<256x1152xbf16>
    %c0_1 = arith.constant 0 : index
    %c0_2 = arith.constant 0 : index
    %1 = vector.load %arg2[%c0_1, %c0_2] : memref<1152x128xbf16, #tpu.memory_space<vmem>>, vector<1152x128xbf16>
    %cst = arith.constant dense<0.000000e+00> : vector<256x128xf32>
    %2 = tpu.matmul %0, %1, %cst {dimension_numbers = #tpu.dot_dimension_numbers<[1], [0], [0], [1], [0, 0, 1, 1], [], []>} : vector<256x1152xbf16>, vector<1152x128xbf16>, vector<256x128xf32> -> vector<256x128xf32>
    %c0_3 = arith.constant 0 : index
    %c0_4 = arith.constant 0 : index
    %3 = vector.load %arg3[%c0_3, %c0_4] : memref<1x128xf32, #tpu.memory_space<vmem>>, vector<1x128xf32>
    %4 = vector.broadcast %3 : vector<1x128xf32> to vector<256x128xf32>
    %5 = arith.addf %2, %4 : vector<256x128xf32>
    %cst_5 = arith.constant 0.000000e+00 : f32
    %6 = vector.broadcast %cst_5 : f32 to vector<256x128xf32>
    %7 = arith.maximumf %5, %6 : vector<256x128xf32>
    %8 = arith.truncf %7 : vector<256x128xf32> to vector<256x128xbf16>
    %c0_6 = arith.constant 0 : index
    %c0_7 = arith.constant 0 : index
    %9 = vector.load %arg4[%c0_6, %c0_7] : memref<256x128xbf16, #tpu.memory_space<vmem>>, vector<256x128xbf16>
    tpu.vector_store %arg4[%c0_6, %c0_7], %8 {strides = array<i32>} : memref<256x128xbf16, #tpu.memory_space<vmem>>, vector<256x128xbf16>,
    return
  }
  func.func @transform_0(%arg0: i32) -> (i32, i32) {
    %c0_i32 = arith.constant 0 : i32
    %c0_i32_0 = arith.constant 0 : i32
    return %arg0, %c0_i32 : i32, i32
  }
  func.func @transform_1(%arg0: i32) -> (i32, i32) {
    %c0_i32 = arith.constant 0 : i32
    %c0_i32_0 = arith.constant 0 : i32
    %c0_i32_1 = arith.constant 0 : i32
    return %c0_i32, %c0_i32_0 : i32, i32
  }
  func.func @transform_2(%arg0: i32) -> (i32, i32) {
    %c0_i32 = arith.constant 0 : i32
    %c0_i32_0 = arith.constant 0 : i32
    %c0_i32_1 = arith.constant 0 : i32
    return %c0_i32, %c0_i32_0 : i32, i32
  }
  func.func @transform_3(%arg0: i32) -> (i32, i32) {
    %c0_i32 = arith.constant 0 : i32
    %c0_i32_0 = arith.constant 0 : i32
    return %arg0, %c0_i32 : i32, i32
  }
}

module attributes {stable_mosaic.version = 11 : i64} {
  func.func @_matmul_shift_kernel(%arg0: i32, %arg1: memref<54x1152xbf16, #tpu.memory_space<vmem>>, %arg2: memref<1152x128xbf16, #tpu.memory_space<vmem>>, %arg3: memref<1x128xf32, #tpu.memory_space<vmem>>, %arg4: memref<54x128xbf16, #tpu.memory_space<vmem>>) attributes {dimension_semantics = [#tpu.dimension_semantics<parallel>], iteration_bounds = array<i64: 1>, scalar_prefetch = 0 : i64, scratch_operands = 0 : i64, tpu.core_type = #tpu.core_type<tc>, window_params = [{transform_indices = @transform_0, window_bounds = array<i64: 54, 1152>}, {pipeline_mode = #tpu.pipeline_mode<synchronous>, transform_indices = @transform_1, window_bounds = array<i64: 1152, 128>}, {pipeline_mode = #tpu.pipeline_mode<synchronous>, transform_indices = @transform_2, window_bounds = array<i64: 1, 128>}, {transform_indices = @transform_3, window_bounds = array<i64: 54, 128>}]} {
    %c0 = arith.constant 0 : index
    %c0_0 = arith.constant 0 : index
    %0 = vector.load %arg1[%c0, %c0_0] : memref<54x1152xbf16, #tpu.memory_space<vmem>>, vector<54x1152xbf16>
    %c0_1 = arith.constant 0 : index
    %c0_2 = arith.constant 0 : index
    %1 = vector.load %arg2[%c0_1, %c0_2] : memref<1152x128xbf16, #tpu.memory_space<vmem>>, vector<1152x128xbf16>
    %cst = arith.constant dense<0.000000e+00> : vector<54x128xf32>
    %2 = tpu.matmul %0, %1, %cst {dimension_numbers = #tpu.dot_dimension_numbers<[1], [0], [0], [1], [0, 0, 1, 1], [], []>} : vector<54x1152xbf16>, vector<1152x128xbf16>, vector<54x128xf32> -> vector<54x128xf32>
    %c0_3 = arith.constant 0 : index
    %c0_4 = arith.constant 0 : index
    %3 = vector.load %arg3[%c0_3, %c0_4] : memref<1x128xf32, #tpu.memory_space<vmem>>, vector<1x128xf32>
    %4 = vector.broadcast %3 : vector<1x128xf32> to vector<54x128xf32>
    %5 = arith.addf %2, %4 : vector<54x128xf32>
    %cst_5 = arith.constant 0.000000e+00 : f32
    %6 = vector.broadcast %cst_5 : f32 to vector<54x128xf32>
    %7 = arith.maximumf %5, %6 : vector<54x128xf32>
    %8 = arith.truncf %7 : vector<54x128xf32> to vector<54x128xbf16>
    %c0_6 = arith.constant 0 : index
    %c0_7 = arith.constant 0 : index
    %9 = vector.load %arg4[%c0_6, %c0_7] : memref<54x128xbf16, #tpu.memory_space<vmem>>, vector<54x128xbf16>
    tpu.vector_store %arg4[%c0_6, %c0_7], %8 {strides = array<i32>} : memref<54x128xbf16, #tpu.memory_space<vmem>>, vector<54x128xbf16>,
    return
  }
  func.func @transform_0(%arg0: i32) -> (i32, i32) {
    %c0_i32 = arith.constant 0 : i32
    %c0_i32_0 = arith.constant 0 : i32
    return %arg0, %c0_i32 : i32, i32
  }
  func.func @transform_1(%arg0: i32) -> (i32, i32) {
    %c0_i32 = arith.constant 0 : i32
    %c0_i32_0 = arith.constant 0 : i32
    %c0_i32_1 = arith.constant 0 : i32
    return %c0_i32, %c0_i32_0 : i32, i32
  }
  func.func @transform_2(%arg0: i32) -> (i32, i32) {
    %c0_i32 = arith.constant 0 : i32
    %c0_i32_0 = arith.constant 0 : i32
    %c0_i32_1 = arith.constant 0 : i32
    return %c0_i32, %c0_i32_0 : i32, i32
  }
  func.func @transform_3(%arg0: i32) -> (i32, i32) {
    %c0_i32 = arith.constant 0 : i32
    %c0_i32_0 = arith.constant 0 : i32
    return %arg0, %c0_i32 : i32, i32
  }
}

module attributes {stable_mosaic.version = 11 : i64} {
  func.func @_fc_chain_kernel(%arg0: memref<6x256xbf16, #tpu.memory_space<vmem>>, %arg1: memref<256x128xbf16, #tpu.memory_space<vmem>>, %arg2: memref<1x128xf32, #tpu.memory_space<vmem>>, %arg3: memref<128x128xbf16, #tpu.memory_space<vmem>>, %arg4: memref<1x128xf32, #tpu.memory_space<vmem>>, %arg5: memref<128x128xbf16, #tpu.memory_space<vmem>>, %arg6: memref<1x128xf32, #tpu.memory_space<vmem>>, %arg7: memref<6x128xf32, #tpu.memory_space<vmem>>) attributes {dimension_semantics = [], scalar_prefetch = 0 : i64, scratch_operands = 0 : i64, tpu.core_type = #tpu.core_type<tc>} {
    %c0 = arith.constant 0 : index
    %c0_0 = arith.constant 0 : index
    %0 = vector.load %arg0[%c0, %c0_0] : memref<6x256xbf16, #tpu.memory_space<vmem>>, vector<6x256xbf16>
    %c0_1 = arith.constant 0 : index
    %c0_2 = arith.constant 0 : index
    %1 = vector.load %arg1[%c0_1, %c0_2] : memref<256x128xbf16, #tpu.memory_space<vmem>>, vector<256x128xbf16>
    %cst = arith.constant dense<0.000000e+00> : vector<6x128xf32>
    %2 = tpu.matmul %0, %1, %cst {dimension_numbers = #tpu.dot_dimension_numbers<[1], [0], [0], [1], [0, 0, 1, 1], [], []>} : vector<6x256xbf16>, vector<256x128xbf16>, vector<6x128xf32> -> vector<6x128xf32>
    %c0_3 = arith.constant 0 : index
    %c0_4 = arith.constant 0 : index
    %3 = vector.load %arg2[%c0_3, %c0_4] : memref<1x128xf32, #tpu.memory_space<vmem>>, vector<1x128xf32>
    %4 = vector.broadcast %3 : vector<1x128xf32> to vector<6x128xf32>
    %5 = arith.addf %2, %4 : vector<6x128xf32>
    %cst_5 = arith.constant 0.000000e+00 : f32
    %6 = vector.broadcast %cst_5 : f32 to vector<6x128xf32>
    %7 = arith.maximumf %5, %6 : vector<6x128xf32>
    %8 = arith.truncf %7 : vector<6x128xf32> to vector<6x128xbf16>
    %c0_6 = arith.constant 0 : index
    %c0_7 = arith.constant 0 : index
    %9 = vector.load %arg3[%c0_6, %c0_7] : memref<128x128xbf16, #tpu.memory_space<vmem>>, vector<128x128xbf16>
    %cst_8 = arith.constant dense<0.000000e+00> : vector<6x128xf32>
    %10 = tpu.matmul %8, %9, %cst_8 {dimension_numbers = #tpu.dot_dimension_numbers<[1], [0], [0], [1], [0, 0, 1, 1], [], []>} : vector<6x128xbf16>, vector<128x128xbf16>, vector<6x128xf32> -> vector<6x128xf32>
    %c0_9 = arith.constant 0 : index
    %c0_10 = arith.constant 0 : index
    %11 = vector.load %arg4[%c0_9, %c0_10] : memref<1x128xf32, #tpu.memory_space<vmem>>, vector<1x128xf32>
    %12 = vector.broadcast %11 : vector<1x128xf32> to vector<6x128xf32>
    %13 = arith.addf %10, %12 : vector<6x128xf32>
    %cst_11 = arith.constant 0.000000e+00 : f32
    %14 = vector.broadcast %cst_11 : f32 to vector<6x128xf32>
    %15 = arith.maximumf %13, %14 : vector<6x128xf32>
    %16 = arith.truncf %15 : vector<6x128xf32> to vector<6x128xbf16>
    %c0_12 = arith.constant 0 : index
    %c0_13 = arith.constant 0 : index
    %17 = vector.load %arg5[%c0_12, %c0_13] : memref<128x128xbf16, #tpu.memory_space<vmem>>, vector<128x128xbf16>
    %cst_14 = arith.constant dense<0.000000e+00> : vector<6x128xf32>
    %18 = tpu.matmul %16, %17, %cst_14 {dimension_numbers = #tpu.dot_dimension_numbers<[1], [0], [0], [1], [0, 0, 1, 1], [], []>} : vector<6x128xbf16>, vector<128x128xbf16>, vector<6x128xf32> -> vector<6x128xf32>
    %c0_15 = arith.constant 0 : index
    %c0_16 = arith.constant 0 : index
    %19 = vector.load %arg6[%c0_15, %c0_16] : memref<1x128xf32, #tpu.memory_space<vmem>>, vector<1x128xf32>
    %20 = vector.broadcast %19 : vector<1x128xf32> to vector<6x128xf32>
    %21 = arith.addf %18, %20 : vector<6x128xf32>
    %c0_17 = arith.constant 0 : index
    %c0_18 = arith.constant 0 : index
    %22 = vector.load %arg7[%c0_17, %c0_18] : memref<6x128xf32, #tpu.memory_space<vmem>>, vector<6x128xf32>
    tpu.vector_store %arg7[%c0_17, %c0_18], %21 {strides = array<i32>} : memref<6x128xf32, #tpu.memory_space<vmem>>, vector<6x128xf32>,
    return
  }
}

module attributes {stable_mosaic.version = 11 : i64} {
  func.func @_matmul_shift_kernel(%arg0: i32, %arg1: memref<6x1152xbf16, #tpu.memory_space<vmem>>, %arg2: memref<1152x256xbf16, #tpu.memory_space<vmem>>, %arg3: memref<1x256xf32, #tpu.memory_space<vmem>>, %arg4: memref<6x256xbf16, #tpu.memory_space<vmem>>) attributes {dimension_semantics = [#tpu.dimension_semantics<parallel>], iteration_bounds = array<i64: 1>, scalar_prefetch = 0 : i64, scratch_operands = 0 : i64, tpu.core_type = #tpu.core_type<tc>, window_params = [{transform_indices = @transform_0, window_bounds = array<i64: 6, 1152>}, {pipeline_mode = #tpu.pipeline_mode<synchronous>, transform_indices = @transform_1, window_bounds = array<i64: 1152, 256>}, {pipeline_mode = #tpu.pipeline_mode<synchronous>, transform_indices = @transform_2, window_bounds = array<i64: 1, 256>}, {transform_indices = @transform_3, window_bounds = array<i64: 6, 256>}]} {
    %c0 = arith.constant 0 : index
    %c0_0 = arith.constant 0 : index
    %0 = vector.load %arg1[%c0, %c0_0] : memref<6x1152xbf16, #tpu.memory_space<vmem>>, vector<6x1152xbf16>
    %c0_1 = arith.constant 0 : index
    %c0_2 = arith.constant 0 : index
    %1 = vector.load %arg2[%c0_1, %c0_2] : memref<1152x256xbf16, #tpu.memory_space<vmem>>, vector<1152x256xbf16>
    %cst = arith.constant dense<0.000000e+00> : vector<6x256xf32>
    %2 = tpu.matmul %0, %1, %cst {dimension_numbers = #tpu.dot_dimension_numbers<[1], [0], [0], [1], [0, 0, 1, 1], [], []>} : vector<6x1152xbf16>, vector<1152x256xbf16>, vector<6x256xf32> -> vector<6x256xf32>
    %c0_3 = arith.constant 0 : index
    %c0_4 = arith.constant 0 : index
    %3 = vector.load %arg3[%c0_3, %c0_4] : memref<1x256xf32, #tpu.memory_space<vmem>>, vector<1x256xf32>
    %4 = vector.broadcast %3 : vector<1x256xf32> to vector<6x256xf32>
    %5 = arith.addf %2, %4 : vector<6x256xf32>
    %cst_5 = arith.constant 0.000000e+00 : f32
    %6 = vector.broadcast %cst_5 : f32 to vector<6x256xf32>
    %7 = arith.maximumf %5, %6 : vector<6x256xf32>
    %8 = arith.truncf %7 : vector<6x256xf32> to vector<6x256xbf16>
    %c0_6 = arith.constant 0 : index
    %c0_7 = arith.constant 0 : index
    %9 = vector.load %arg4[%c0_6, %c0_7] : memref<6x256xbf16, #tpu.memory_space<vmem>>, vector<6x256xbf16>
    tpu.vector_store %arg4[%c0_6, %c0_7], %8 {strides = array<i32>} : memref<6x256xbf16, #tpu.memory_space<vmem>>, vector<6x256xbf16>,
    return
  }
  func.func @transform_0(%arg0: i32) -> (i32, i32) {
    %c0_i32 = arith.constant 0 : i32
    %c0_i32_0 = arith.constant 0 : i32
    return %arg0, %c0_i32 : i32, i32
  }
  func.func @transform_1(%arg0: i32) -> (i32, i32) {
    %c0_i32 = arith.constant 0 : i32
    %c0_i32_0 = arith.constant 0 : i32
    %c0_i32_1 = arith.constant 0 : i32
    return %c0_i32, %c0_i32_0 : i32, i32
  }
  func.func @transform_2(%arg0: i32) -> (i32, i32) {
    %c0_i32 = arith.constant 0 : i32
    %c0_i32_0 = arith.constant 0 : i32
    %c0_i32_1 = arith.constant 0 : i32
    return %c0_i32, %c0_i32_0 : i32, i32
  }
  func.func @transform_3(%arg0: i32) -> (i32, i32) {
    %c0_i32 = arith.constant 0 : i32
    %c0_i32_0 = arith.constant 0 : i32
    return %arg0, %c0_i32 : i32, i32
  }
}

</mosaic_0001>

<llo_original>
// kernel: _lambda_.5
$region0: #{_lambda_.5}
  #allocation0 [shape = 'u32[]', space=smem, size = 0x4, offset = 0x4, fixed_abs, tag = 'smem constant byte address 0x4 - core index']
  #allocation1 [shape = 'u32[144,128]{1,0:T(1,128)}', space=vmem, size = 0x12000, scoped, tag = 'internal scratch']
  %s0 = inlined_call_operand.vmem [shape: bf16[1350,75], index: 0, kind: input, shape index: {}]
  %s1 = inlined_call_operand.vmem [shape: bf16[75,128], index: 1, kind: input, shape index: {}]
  %s2 = inlined_call_operand.vmem [shape: f32[1,128], index: 2, kind: input, shape index: {}]
  %s3 = inlined_call_operand.vmem [shape: bf16[1350,128], index: 3, kind: output, shape index: {}]
  %s4 = sld [smem:[#allocation0]]
  $region89: #{_lambda_.5} parent=0
    _
  %s6 = ssub.s32 1, %s4
  %s7 = scalar_select 0, %s6, %s4
  $region1: #{_lambda_.5} parent=0
    #allocation2 [shape = 'u8[131072]{0}', space=vmem, size = 0x20000, scoped, tag = 'output window, operand 0']
    loop: start=0, step=1, limit=8
    $region2: #{_lambda_.5} parent=1 // loop_pre_header
      _
    $region3: #{_lambda_.5} parent=1 // loop_header
      %s9 = sphi 0, %s13
      %p10 = scmp.ge.s32.totalorder %s9, 8
      %s19 = sphi 0, %s21
      %s22 = sphi 0, %s19
      %s23 = sphi 0, %s22
      %s39 = sphi 0, %s23
      %s43 = sphi 0, %s43
      %s45 = sphi 0, %s43
      %s46 = sphi 0, %s45
      %s60 = sphi 0, %s46
      %s64 = sphi 0, %s64
      %s66 = sphi 0, %s64
      %s67 = sphi 0, %s66
      %s81 = sphi 0, %s67
      %s87 = sphi 0, %s89
      %s90 = sphi 0, %s87
      %s91 = sphi 0, %s90
      %s107 = sphi 0, %s91
    $region4: #{_lambda_.5} parent=1 // loop_header_branch
      %12 = sbr.rel (%p10) target = $region8
    $region5: #{_lambda_.5} parent=1 // loop_body
      %s14 = ssub.s32 %s9, 1
      %s15 = ssub.s32 %s9, 2
      %s16 = sadd.s32 %s9, 1
      %s17 = ssub.s32 %s9, %s16
      %p18 = scmp.eq.s32.totalorder %s17, 0
      %s20 = sadd.s32 %s19, 1
      %s21 = scalar_select %p18, %s19, %s20
      %p24 = pneg %p18
      %p25 = scmp.eq.s32.totalorder %s9, 5
      %p26 = por %p24, %p25
      %p27 = scmp.ne.s32.totalorder %s19, %s22
      %p28 = scmp.eq.s32.totalorder %s9, 0
      %p29 = por %p27, %p28
      %p30 = scmp.ne.s32.totalorder %s19, %s22
      %p31 = scmp.eq.s32.totalorder %s14, 5
      %p32 = por %p30, %p31
      %p33 = scmp.ne.s32.totalorder %s22, %s23
      %p34 = scmp.eq.s32.totalorder %s14, 0
      %p35 = por %p33, %p34
      %p36 = scmp.ne.s32.totalorder %s22, %s23
      %p37 = scmp.eq.s32.totalorder %s15, 5
      %p38 = por %p36, %p37
      %p40 = scmp.ne.s32.totalorder %s23, %s39
      %p41 = scmp.eq.s32.totalorder %s15, 0
      %p42 = por %p40, %p41
      %s44 = sadd.s32 %s43, 1
      %p47 = scmp.eq.s32.totalorder %s9, 5
      %p48 = scmp.ne.s32.totalorder %s43, %s45
      %p49 = scmp.eq.s32.totalorder %s9, 0
      %p50 = por %p48, %p49
      %p51 = scmp.ne.s32.totalorder %s43, %s45
      %p52 = scmp.eq.s32.totalorder %s14, 5
      %p53 = por %p51, %p52
      %p54 = scmp.ne.s32.totalorder %s45, %s46
      %p55 = scmp.eq.s32.totalorder %s14, 0
      %p56 = por %p54, %p55
      %p57 = scmp.ne.s32.totalorder %s45, %s46
      %p58 = scmp.eq.s32.totalorder %s15, 5
      %p59 = por %p57, %p58
      %p61 = scmp.ne.s32.totalorder %s46, %s60
      %p62 = scmp.eq.s32.totalorder %s15, 0
      %p63 = por %p61, %p62
      %s65 = sadd.s32 %s64, 1
      %p68 = scmp.eq.s32.totalorder %s9, 5
      %p69 = scmp.ne.s32.totalorder %s64, %s66
      %p70 = scmp.eq.s32.totalorder %s9, 0
      %p71 = por %p69, %p70
      %p72 = scmp.ne.s32.totalorder %s64, %s66
      %p73 = scmp.eq.s32.totalorder %s14, 5
      %p74 = por %p72, %p73
      %p75 = scmp.ne.s32.totalorder %s66, %s67
      %p76 = scmp.eq.s32.totalorder %s14, 0
      %p77 = por %p75, %p76
      %p78 = scmp.ne.s32.totalorder %s66, %s67
      %p79 = scmp.eq.s32.totalorder %s15, 5
      %p80 = por %p78, %p79
      %p82 = scmp.ne.s32.totalorder %s67, %s81
      %p83 = scmp.eq.s32.totalorder %s15, 0
      %p84 = por %p82, %p83
      %s85 = ssub.s32 %s9, %s16
      %p86 = scmp.eq.s32.totalorder %s85, 0
      %s88 = sadd.s32 %s87, 1
      %s89 = scalar_select %p86, %s87, %s88
      %p92 = pneg %p86
      %p93 = scmp.eq.s32.totalorder %s9, 5
      %p94 = por %p92, %p93
      %p95 = scmp.ne.s32.totalorder %s87, %s90
      %p96 = scmp.eq.s32.totalorder %s9, 0
      %p97 = por %p95, %p96
      %p98 = scmp.ne.s32.totalorder %s87, %s90
      %p99 = scmp.eq.s32.totalorder %s14, 5
      %p100 = por %p98, %p99
      %p101 = scmp.ne.s32.totalorder %s90, %s91
      %p102 = scmp.eq.s32.totalorder %s14, 0
      %p103 = por %p101, %p102
      %p104 = scmp.ne.s32.totalorder %s90, %s91
      %p105 = scmp.eq.s32.totalorder %s15, 5
      %p106 = por %p104, %p105
      %p108 = scmp.ne.s32.totalorder %s91, %s107
      %p109 = scmp.eq.s32.totalorder %s15, 0
      %p110 = por %p108, %p109
      %p111 = scmp.le.s32.totalorder 1, %s9
      %p112 = scmp.lt.s32.totalorder %s9, 7
      %p113 = pnand %p111, %p112
      %p114 = pneg %p113
      // Predicated region
      $region9: #{_lambda_.5} parent=5 // pred_check
        _
      $region10: #{_lambda_.5} parent=5 // pred_check_branch
        %116 = sbr.rel (%p113) target = $region12
      $region11: #{_lambda_.5} parent=5 // pred_region
        %s117 = ssub.s32 %s9, 1
        // Predicated region
        $region13: #{_lambda_.5} parent=11 // pred_check
          %p118 = pneg %p56
        $region14: #{_lambda_.5} parent=11 // pred_check_branch
          %120 = sbr.rel (%p118) target = $region16
        $region15: #{_lambda_.5} parent=11 // pred_region
          _
        $region16: #{_lambda_.5} parent=11 // pred_fallthru
          _
        // Predicated region
        $region17: #{_lambda_.5} parent=11 // pred_check
          %p121 = pneg %p77
        $region18: #{_lambda_.5} parent=11 // pred_check_branch
          %123 = sbr.rel (%p121) target = $region20
        $region19: #{_lambda_.5} parent=11 // pred_region
          _
        $region20: #{_lambda_.5} parent=11 // pred_fallthru
          _
      $region12: #{_lambda_.5} parent=5 // pred_fallthru
        _
      %p124 = scmp.lt.s32.totalorder %s9, 6
      // Predicated region
      $region21: #{_lambda_.5} parent=5 // pred_check
        %p125 = pneg %p124
      $region22: #{_lambda_.5} parent=5 // pred_check_branch
        %127 = sbr.rel (%p125) target = $region24
      $region23: #{_lambda_.5} parent=5 // pred_region
        // Predicated region
        $region25: #{_lambda_.5} parent=23 // pred_check
          %p128 = pneg %p29
        $region26: #{_lambda_.5} parent=23 // pred_check_branch
          %130 = sbr.rel (%p128) target = $region28
        $region27: #{_lambda_.5} parent=23 // pred_region
          %s131 = smul.u32 32, %s9
          %s132 = ssub.s32 169, %s131
          %p133 = scmp.lt.s32.totalorder %s132, 32
          %s134 = scalar_select %p133, %s132, 32
          %s135 = smul.u32 64, %s134
          %p136 = scmp.lt.s32.totalorder %s131, 168
          %s137 = scalar_select %p136, %s131, 168
          %s138 = smul.addr %s137, 4
          %s139 = scalar_lea.vmem %s0, %s138
          %s140 = smul.u32 32, %s9
          %s141 = ssub.s32 169, %s140
          %p142 = scmp.lt.s32.totalorder %s141, 32
          %s143 = scalar_select %p142, %s141, 32
          %s144 = smul.u32 64, %s143
        $region28: #{_lambda_.5} parent=23 // pred_fallthru
          _
      $region24: #{_lambda_.5} parent=5 // pred_fallthru
        _
      %p145 = scmp.le.s32.totalorder 1, %s9
      %p146 = scmp.lt.s32.totalorder %s9, 7
      %p147 = pnand %p145, %p146
      %p148 = pneg %p147
      // Predicated region
      $region29: #{_lambda_.5} parent=5 // pred_check
        _
      $region30: #{_lambda_.5} parent=5 // pred_check_branch
        %150 = sbr.rel (%p147) target = $region32
      $region31: #{_lambda_.5} parent=5 // pred_region
        %s151 = ssub.s32 %s9, 1
        %s152 = smul.u32 32, %s14
        %s153 = ssub.s32 169, %s152
        %p154 = scmp.lt.s32.totalorder %s153, 32
        %s155 = scalar_select %p154, %s153, 32
        %s156 = smul.u32 64, %s155
        %p157 = scmp.lt.s32.totalorder %s152, 168
        %s158 = scalar_select %p157, %s152, 168
        %s159 = smul.addr %s158, 4
        %s160 = scalar_lea.vmem %s0, %s159
        %p161 = pneg %p35
        %p162 = pneg %p32
        %p163 = pneg %p56
        %p164 = pneg %p53
        %p165 = pneg %p77
        %p166 = pneg %p74
        %p167 = pneg %p103
        %p168 = pneg %p100
        %s169 = sand.u32 %s90, 1
        %s170 = sand.u32 %s90, 1
        %s171 = smul.addr %s170, 128
        %s172 = scalar_lea.vmem [#allocation2], %s171
        %s173 = smul.u32 32, %s14
        %s174 = ssub.s32 169, %s173
        %p175 = scmp.lt.s32.totalorder %s174, 32
        %s176 = scalar_select %p175, %s174, 32
        %s177 = smul.u32 64, %s176
        %p178 = scmp.lt.s32.totalorder %s173, 168
        %s179 = scalar_select %p178, %s173, 168
        %s180 = smul.addr %s179, 4
        %s181 = scalar_lea.vmem %s0, %s180
        %s182 = smul.u32 32, %s14
        %s183 = ssub.s32 169, %s182
        %p184 = scmp.lt.s32.totalorder %s183, 32
        %s185 = scalar_select %p184, %s183, 32
        %s186 = smul.u32 64, %s185
        %s187 = smul.u32 32, %s14
        %s188 = ssub.s32 169, %s187
        %p189 = scmp.lt.s32.totalorder %s188, 32
        %s190 = scalar_select %p189, %s188, 32
        %s191 = smul.u32 64, %s190
        %v193 = vld [vmem:[%s181] sm:$0xf]
        %v194 = vld [vmem:[%s181 + $0x4] sm:$0xf]
        %v195 = vld [vmem:[%s181 + $0x8] sm:$0xf]
        %v196 = vld [vmem:[%s181 + $0xc] sm:$0xf]
        %v197 = vld [vmem:[%s181 + $0x10] sm:$0xf]
        %v198 = vld [vmem:[%s181 + $0x14] sm:$0xf]
        %v199 = vld [vmem:[%s181 + $0x18] sm:$0xf]
        %v200 = vld [vmem:[%s181 + $0x1c] sm:$0xf]
        %v201 = vld [vmem:[%s181 + $0x20] sm:$0xf]
        %v202 = vld [vmem:[%s181 + $0x24] sm:$0xf]
        %v203 = vld [vmem:[%s181 + $0x28] sm:$0xf]
        %v204 = vld [vmem:[%s181 + $0x2c] sm:$0xf]
        %v205 = vld [vmem:[%s181 + $0x30] sm:$0xf]
        %v206 = vld [vmem:[%s181 + $0x34] sm:$0xf]
        %v207 = vld [vmem:[%s181 + $0x38] sm:$0xf]
        %v208 = vld [vmem:[%s181 + $0x3c] sm:$0xf]
        %v209 = vld [vmem:[%s181 + $0x40] sm:$0xf]
        %v210 = vld [vmem:[%s181 + $0x44] sm:$0xf]
        %v211 = vld [vmem:[%s181 + $0x48] sm:$0xf]
        %v212 = vld [vmem:[%s181 + $0x4c] sm:$0xf]
        %v213 = vld [vmem:[%s181 + $0x50] sm:$0xf]
        %v214 = vld [vmem:[%s181 + $0x54] sm:$0xf]
        %v215 = vld [vmem:[%s181 + $0x58] sm:$0xf]
        %v216 = vld [vmem:[%s181 + $0x5c] sm:$0xf]
        %v217 = vld [vmem:[%s181 + $0x60] sm:$0xf]
        %v218 = vld [vmem:[%s181 + $0x64] sm:$0xf]
        %v219 = vld [vmem:[%s181 + $0x68] sm:$0xf]
        %v220 = vld [vmem:[%s181 + $0x6c] sm:$0xf]
        %v221 = vld [vmem:[%s181 + $0x70] sm:$0xf]
        %v222 = vld [vmem:[%s181 + $0x74] sm:$0xf]
        %v223 = vld [vmem:[%s181 + $0x78] sm:$0xf]
        %v224 = vld [vmem:[%s181 + $0x7c] sm:$0xf]
        %v225 = vld [vmem:[%s1] sm:$0xf]
        %v226 = vld [vmem:[%s1 + $0x4] sm:$0xf]
        %v227 = vld [vmem:[%s1 + $0x8] sm:$0xf]
        %v228 = vld [vmem:[%s1 + $0xc] sm:$0xf]
        %v229 = vld [vmem:[%s1 + $0x10] sm:$0xf]
        %v230 = vld [vmem:[%s1 + $0x14] sm:$0xf]
        %v231 = vld [vmem:[%s1 + $0x18] sm:$0xf]
        %v232 = vld [vmem:[%s1 + $0x1c] sm:$0xf]
        %v233 = vld [vmem:[%s1 + $0x20] sm:$0xf]
        %v234 = vld [vmem:[%s1 + $0x24] sm:$0x3]
        %v235 = vld [vmem:[%s2] sm:$0x1]
        %v237 = vlaneseq
        %v238 = vshrl.u32 %v237, 7
        %v239 = vsub.s32 0, %v238
        %v240 = vrot.slane %v235, %v239
        %v274 = vunpack.c.l.b16 %v193
        %v275 = vunpack.c.l.b16 %v194
        %v276 = vunpack.c.l.b16 %v195
        %v277 = vunpack.c.l.b16 %v196
        %v278 = vunpack.c.l.b16 %v197
        %v279 = vunpack.c.l.b16 %v198
        %v280 = vunpack.c.l.b16 %v199
        %v281 = vunpack.c.l.b16 %v200
        %v282 = vunpack.c.l.b16 %v201
        %v283 = vunpack.c.l.b16 %v202
        %v284 = vunpack.c.l.b16 %v203
        %v285 = vunpack.c.l.b16 %v204
        %v286 = vunpack.c.l.b16 %v205
        %v287 = vunpack.c.l.b16 %v206
        %v288 = vunpack.c.l.b16 %v207
        %v289 = vunpack.c.l.b16 %v208
        %v290 = vunpack.c.l.b16 %v209
        %v291 = vunpack.c.l.b16 %v210
        %v292 = vunpack.c.l.b16 %v211
        %v293 = vunpack.c.l.b16 %v212
        %v294 = vunpack.c.l.b16 %v213
        %v295 = vunpack.c.l.b16 %v214
        %v296 = vunpack.c.l.b16 %v215
        %v297 = vunpack.c.l.b16 %v216
        %v298 = vunpack.c.l.b16 %v217
        %v299 = vunpack.c.l.b16 %v218
        %v300 = vunpack.c.l.b16 %v219
        %v301 = vunpack.c.l.b16 %v220
        %v302 = vunpack.c.l.b16 %v221
        %v303 = vunpack.c.l.b16 %v222
        %v304 = vunpack.c.l.b16 %v223
        %v305 = vunpack.c.l.b16 %v224
        %v306 = vpack.c.b16 %v275, %v274
        %v307 = vpack.c.b16 %v277, %v276
        %v308 = vpack.c.b16 %v279, %v278
        %v309 = vpack.c.b16 %v281, %v280
        %v310 = vpack.c.b16 %v283, %v282
        %v311 = vpack.c.b16 %v285, %v284
        %v312 = vpack.c.b16 %v287, %v286
        %v313 = vpack.c.b16 %v289, %v288
        %v314 = vpack.c.b16 %v291, %v290
        %v315 = vpack.c.b16 %v293, %v292
        %v316 = vpack.c.b16 %v295, %v294
        %v317 = vpack.c.b16 %v297, %v296
        %v318 = vpack.c.b16 %v299, %v298
        %v319 = vpack.c.b16 %v301, %v300
        %v320 = vpack.c.b16 %v303, %v302
        %v321 = vpack.c.b16 %v305, %v304
        %v332 = vunpack.c.l.b16 %v225
        %v333 = vunpack.c.l.b16 %v226
        %v334 = vunpack.c.l.b16 %v227
        %v335 = vunpack.c.l.b16 %v228
        %v336 = vunpack.c.l.b16 %v229
        %v337 = vunpack.c.l.b16 %v230
        %v338 = vunpack.c.l.b16 %v231
        %v339 = vunpack.c.l.b16 %v232
        %v340 = vunpack.c.l.b16 %v233
        %v341 = vunpack.c.l.b16 %v234
        %v342 = vpack.c.b16 %v333, %v332
        %v343 = vpack.c.b16 %v335, %v334
        %v344 = vpack.c.b16 %v337, %v336
        %v345 = vpack.c.b16 %v339, %v338
        %v346 = vpack.c.b16 %v341, %v340
        %vm351 = vcmask 613376
        %v353 = vsel %vm351, %v306, 0
        %v356 = vsel %vm351, %v307, 0
        %v359 = vsel %vm351, %v308, 0
        %v362 = vsel %vm351, %v309, 0
        %v365 = vsel %vm351, %v310, 0
        %v368 = vsel %vm351, %v311, 0
        %v371 = vsel %vm351, %v312, 0
        %v374 = vsel %vm351, %v313, 0
        %v377 = vsel %vm351, %v314, 0
        %v380 = vsel %vm351, %v315, 0
        %v383 = vsel %vm351, %v316, 0
        %v386 = vsel %vm351, %v317, 0
        %v389 = vsel %vm351, %v318, 0
        %v392 = vsel %vm351, %v319, 0
        %v395 = vsel %vm351, %v320, 0
        %v398 = vsel %vm351, %v321, 0
        %vm400 = vcmask 1044480
        %vm401 = vcmask 1045504
        %v402 = vsel %vm400, 4294967295, 65535
        %v403 = vsel %vm401, %v402, 0
        %v405 = vand.u32 %v346, %v403
        %407 = vmatprep.subr.bf16.mxu0 0
        %408 = vmatpush1.bf16.msra.mxu0 0
        %409 = vmatprep.subr.bf16.mxu0 0
        %410 = vmatpush1.bf16.msra.mxu0 0
        %411 = vmatprep.subr.bf16.mxu0 0
        %412 = vmatpush1.bf16.msra.mxu0 0
        %413 = vmatprep.subr.bf16.mxu0 0
        %414 = vmatpush1.bf16.msra.mxu0 %v405
        %415 = vmatprep.subr.bf16.mxu0 0
        %416 = vmatpush1.bf16.msra.mxu0 %v345
        %417 = vmatprep.subr.bf16.mxu0 0
        %418 = vmatpush1.bf16.msra.mxu0 %v344
        %419 = vmatprep.subr.bf16.mxu0 0
        %420 = vmatpush1.bf16.msra.mxu0 %v343
        %421 = vmatprep.subr.bf16.mxu0 0
        %422 = vmatpush1.bf16.msra.mxu0 %v342
        %423 = vmatprep.subr.bf16.mxu0 0
        %424 = vmatpush2.bf16.msra.mxu0 0
        %425 = vmatprep.subr.bf16.mxu0 0
        %426 = vmatpush2.bf16.msra.mxu0 0
        %427 = vmatprep.subr.bf16.mxu0 0
        %428 = vmatpush2.bf16.msra.mxu0 0
        %429 = vmatprep.subr.bf16.mxu0 0
        %430 = vmatpush2.bf16.msra.mxu0 0
        %431 = vmatprep.subr.bf16.mxu0 0
        %432 = vmatpush2.bf16.msra.mxu0 0
        %433 = vmatprep.subr.bf16.mxu0 0
        %434 = vmatpush2.bf16.msra.mxu0 0
        %435 = vmatprep.subr.bf16.mxu0 0
        %436 = vmatpush2.bf16.msra.mxu0 0
        %437 = vmatprep.subr.bf16.mxu0 0
        %438 = vmatpush2.bf16.msra.mxu0 0
        %439 = vmatprep.mubr.bf16.mxu0 0
        %440 = vmatmul.mubr.bf16.gmra.mxu0 %v353
        %v441 = vpop.f32.mrf.mxu0
        %v442 = vadd.f32 %v240, %v441
        %v443 = vpop.f32.mrf.mxu0
        %v444 = vpop.f32.mrf.mxu0
        %v445 = vadd.f32 %v240, %v444
        %v446 = vpop.f32.mrf.mxu0
        %447 = vmatprep.mubr.bf16.mxu0 0
        %448 = vmatmul.mubr.bf16.gmra.mxu0 %v356
        %v449 = vpop.f32.mrf.mxu0
        %v450 = vadd.f32 %v240, %v449
        %v451 = vpop.f32.mrf.mxu0
        %v452 = vpop.f32.mrf.mxu0
        %v453 = vadd.f32 %v240, %v452
        %v454 = vpop.f32.mrf.mxu0
        %455 = vmatprep.mubr.bf16.mxu0 0
        %456 = vmatmul.mubr.bf16.gmra.mxu0 %v359
        %v457 = vpop.f32.mrf.mxu0
        %v458 = vadd.f32 %v240, %v457
        %v459 = vpop.f32.mrf.mxu0
        %v460 = vpop.f32.mrf.mxu0
        %v461 = vadd.f32 %v240, %v460
        %v462 = vpop.f32.mrf.mxu0
        %463 = vmatprep.mubr.bf16.mxu0 0
        %464 = vmatmul.mubr.bf16.gmra.mxu0 %v362
        %v465 = vpop.f32.mrf.mxu0
        %v466 = vadd.f32 %v240, %v465
        %v467 = vpop.f32.mrf.mxu0
        %v468 = vpop.f32.mrf.mxu0
        %v469 = vadd.f32 %v240, %v468
        %v470 = vpop.f32.mrf.mxu0
        %471 = vmatprep.mubr.bf16.mxu0 0
        %472 = vmatmul.mubr.bf16.gmra.mxu0 %v365
        %v473 = vpop.f32.mrf.mxu0
        %v474 = vadd.f32 %v240, %v473
        %v475 = vpop.f32.mrf.mxu0
        %v476 = vpop.f32.mrf.mxu0
        %v477 = vadd.f32 %v240, %v476
        %v478 = vpop.f32.mrf.mxu0
        %479 = vmatprep.mubr.bf16.mxu0 0
        %480 = vmatmul.mubr.bf16.gmra.mxu0 %v368
        %v481 = vpop.f32.mrf.mxu0
        %v482 = vadd.f32 %v240, %v481
        %v483 = vpop.f32.mrf.mxu0
        %v484 = vpop.f32.mrf.mxu0
        %v485 = vadd.f32 %v240, %v484
        %v486 = vpop.f32.mrf.mxu0
        %487 = vmatprep.mubr.bf16.mxu0 0
        %488 = vmatmul.mubr.bf16.gmra.mxu0 %v371
        %v489 = vpop.f32.mrf.mxu0
        %v490 = vadd.f32 %v240, %v489
        %v491 = vpop.f32.mrf.mxu0
        %v492 = vpop.f32.mrf.mxu0
        %v493 = vadd.f32 %v240, %v492
        %v494 = vpop.f32.mrf.mxu0
        %495 = vmatprep.mubr.bf16.mxu0 0
        %496 = vmatmul.mubr.bf16.gmra.mxu0 %v374
        %v497 = vpop.f32.mrf.mxu0
        %v498 = vadd.f32 %v240, %v497
        %v499 = vpop.f32.mrf.mxu0
        %v500 = vpop.f32.mrf.mxu0
        %v501 = vadd.f32 %v240, %v500
        %v502 = vpop.f32.mrf.mxu0
        %503 = vmatprep.mubr.bf16.mxu0 0
        %504 = vmatmul.mubr.bf16.gmra.mxu0 %v377
        %v505 = vpop.f32.mrf.mxu0
        %v506 = vadd.f32 %v240, %v505
        %v507 = vpop.f32.mrf.mxu0
        %v508 = vpop.f32.mrf.mxu0
        %v509 = vadd.f32 %v240, %v508
        %v510 = vpop.f32.mrf.mxu0
        %511 = vmatprep.mubr.bf16.mxu0 0
        %512 = vmatmul.mubr.bf16.gmra.mxu0 %v380
        %v513 = vpop.f32.mrf.mxu0
        %v514 = vadd.f32 %v240, %v513
        %v515 = vpop.f32.mrf.mxu0
        %v516 = vpop.f32.mrf.mxu0
        %v517 = vadd.f32 %v240, %v516
        %v518 = vpop.f32.mrf.mxu0
        %519 = vmatprep.mubr.bf16.mxu0 0
        %520 = vmatmul.mubr.bf16.gmra.mxu0 %v383
        %v521 = vpop.f32.mrf.mxu0
        %v522 = vadd.f32 %v240, %v521
        %v523 = vpop.f32.mrf.mxu0
        %v524 = vpop.f32.mrf.mxu0
        %v525 = vadd.f32 %v240, %v524
        %v526 = vpop.f32.mrf.mxu0
        %527 = vmatprep.mubr.bf16.mxu0 0
        %528 = vmatmul.mubr.bf16.gmra.mxu0 %v386
        %v529 = vpop.f32.mrf.mxu0
        %v530 = vadd.f32 %v240, %v529
        %v531 = vpop.f32.mrf.mxu0
        %v532 = vpop.f32.mrf.mxu0
        %v533 = vadd.f32 %v240, %v532
        %v534 = vpop.f32.mrf.mxu0
        %535 = vmatprep.mubr.bf16.mxu0 0
        %536 = vmatmul.mubr.bf16.gmra.mxu0 %v389
        %v537 = vpop.f32.mrf.mxu0
        %v538 = vadd.f32 %v240, %v537
        %v539 = vpop.f32.mrf.mxu0
        %v540 = vpop.f32.mrf.mxu0
        %v541 = vadd.f32 %v240, %v540
        %v542 = vpop.f32.mrf.mxu0
        %543 = vmatprep.mubr.bf16.mxu0 0
        %544 = vmatmul.mubr.bf16.gmra.mxu0 %v392
        %v545 = vpop.f32.mrf.mxu0
        %v546 = vadd.f32 %v240, %v545
        %v547 = vpop.f32.mrf.mxu0
        %v548 = vpop.f32.mrf.mxu0
        %v549 = vadd.f32 %v240, %v548
        %v550 = vpop.f32.mrf.mxu0
        %551 = vmatprep.mubr.bf16.mxu0 0
        %552 = vmatmul.mubr.bf16.gmra.mxu0 %v395
        %v553 = vpop.f32.mrf.mxu0
        %v554 = vadd.f32 %v240, %v553
        %v555 = vpop.f32.mrf.mxu0
        %v556 = vpop.f32.mrf.mxu0
        %v557 = vadd.f32 %v240, %v556
        %v558 = vpop.f32.mrf.mxu0
        %559 = vmatprep.mubr.bf16.mxu0 0
        %560 = vmatmul.mubr.bf16.gmra.mxu0 %v398
        %v561 = vpop.f32.mrf.mxu0
        %v562 = vadd.f32 %v240, %v561
        %v563 = vpop.f32.mrf.mxu0
        %v564 = vpop.f32.mrf.mxu0
        %v565 = vadd.f32 %v240, %v564
        %v566 = vpop.f32.mrf.mxu0
        %567 = vdwg.mxu0
        %v568 = vmax.f32 %v442, 0.0
        %v569 = vmax.f32 %v445, 0.0
        %v570 = vmax.f32 %v450, 0.0
        %v571 = vmax.f32 %v453, 0.0
        %v572 = vmax.f32 %v458, 0.0
        %v573 = vmax.f32 %v461, 0.0
        %v574 = vmax.f32 %v466, 0.0
        %v575 = vmax.f32 %v469, 0.0
        %v576 = vmax.f32 %v474, 0.0
        %v577 = vmax.f32 %v477, 0.0
        %v578 = vmax.f32 %v482, 0.0
        %v579 = vmax.f32 %v485, 0.0
        %v580 = vmax.f32 %v490, 0.0
        %v581 = vmax.f32 %v493, 0.0
        %v582 = vmax.f32 %v498, 0.0
        %v583 = vmax.f32 %v501, 0.0
        %v584 = vmax.f32 %v506, 0.0
        %v585 = vmax.f32 %v509, 0.0
        %v586 = vmax.f32 %v514, 0.0
        %v587 = vmax.f32 %v517, 0.0
        %v588 = vmax.f32 %v522, 0.0
        %v589 = vmax.f32 %v525, 0.0
        %v590 = vmax.f32 %v530, 0.0
        %v591 = vmax.f32 %v533, 0.0
        %v592 = vmax.f32 %v538, 0.0
        %v593 = vmax.f32 %v541, 0.0
        %v594 = vmax.f32 %v546, 0.0
        %v595 = vmax.f32 %v549, 0.0
        %v596 = vmax.f32 %v554, 0.0
        %v597 = vmax.f32 %v557, 0.0
        %v598 = vmax.f32 %v562, 0.0
        %v599 = vmax.f32 %v565, 0.0
        %v600 = vpack.c.bf16 %v569, %v568
        %v601 = vpack.c.bf16 %v571, %v570
        %v602 = vpack.c.bf16 %v573, %v572
        %v603 = vpack.c.bf16 %v575, %v574
        %v604 = vpack.c.bf16 %v577, %v576
        %v605 = vpack.c.bf16 %v579, %v578
        %v606 = vpack.c.bf16 %v581, %v580
        %v607 = vpack.c.bf16 %v583, %v582
        %v608 = vpack.c.bf16 %v585, %v584
        %v609 = vpack.c.bf16 %v587, %v586
        %v610 = vpack.c.bf16 %v589, %v588
        %v611 = vpack.c.bf16 %v591, %v590
        %v612 = vpack.c.bf16 %v593, %v592
        %v613 = vpack.c.bf16 %v595, %v594
        %v614 = vpack.c.bf16 %v597, %v596
        %v615 = vpack.c.bf16 %v599, %v598
        %v632 = vunpack.c.l.b16 %v600
        %v633 = vunpack.c.h.b16 %v600
        %v634 = vunpack.c.l.b16 %v601
        %v635 = vunpack.c.h.b16 %v601
        %v636 = vunpack.c.l.b16 %v602
        %v637 = vunpack.c.h.b16 %v602
        %v638 = vunpack.c.l.b16 %v603
        %v639 = vunpack.c.h.b16 %v603
        %v640 = vunpack.c.l.b16 %v604
        %v641 = vunpack.c.h.b16 %v604
        %v642 = vunpack.c.l.b16 %v605
        %v643 = vunpack.c.h.b16 %v605
        %v644 = vunpack.c.l.b16 %v606
        %v645 = vunpack.c.h.b16 %v606
        %v646 = vunpack.c.l.b16 %v607
        %v647 = vunpack.c.h.b16 %v607
        %v648 = vunpack.c.l.b16 %v608
        %v649 = vunpack.c.h.b16 %v608
        %v650 = vunpack.c.l.b16 %v609
        %v651 = vunpack.c.h.b16 %v609
        %v652 = vunpack.c.l.b16 %v610
        %v653 = vunpack.c.h.b16 %v610
        %v654 = vunpack.c.l.b16 %v611
        %v655 = vunpack.c.h.b16 %v611
        %v656 = vunpack.c.l.b16 %v612
        %v657 = vunpack.c.h.b16 %v612
        %v658 = vunpack.c.l.b16 %v613
        %v659 = vunpack.c.h.b16 %v613
        %v660 = vunpack.c.l.b16 %v614
        %v661 = vunpack.c.h.b16 %v614
        %v662 = vunpack.c.l.b16 %v615
        %v663 = vunpack.c.h.b16 %v615
        %v664 = vpack.c.b16 %v632, %v632
        %v665 = vpack.c.b16 %v633, %v633
        %v666 = vpack.c.b16 %v634, %v634
        %v667 = vpack.c.b16 %v635, %v635
        %v668 = vpack.c.b16 %v636, %v636
        %v669 = vpack.c.b16 %v637, %v637
        %v670 = vpack.c.b16 %v638, %v638
        %v671 = vpack.c.b16 %v639, %v639
        %v672 = vpack.c.b16 %v640, %v640
        %v673 = vpack.c.b16 %v641, %v641
        %v674 = vpack.c.b16 %v642, %v642
        %v675 = vpack.c.b16 %v643, %v643
        %v676 = vpack.c.b16 %v644, %v644
        %v677 = vpack.c.b16 %v645, %v645
        %v678 = vpack.c.b16 %v646, %v646
        %v679 = vpack.c.b16 %v647, %v647
        %v680 = vpack.c.b16 %v648, %v648
        %v681 = vpack.c.b16 %v649, %v649
        %v682 = vpack.c.b16 %v650, %v650
        %v683 = vpack.c.b16 %v651, %v651
        %v684 = vpack.c.b16 %v652, %v652
        %v685 = vpack.c.b16 %v653, %v653
        %v686 = vpack.c.b16 %v654, %v654
        %v687 = vpack.c.b16 %v655, %v655
        %v688 = vpack.c.b16 %v656, %v656
        %v689 = vpack.c.b16 %v657, %v657
        %v690 = vpack.c.b16 %v658, %v658
        %v691 = vpack.c.b16 %v659, %v659
        %v692 = vpack.c.b16 %v660, %v660
        %v693 = vpack.c.b16 %v661, %v661
        %v694 = vpack.c.b16 %v662, %v662
        %v695 = vpack.c.b16 %v663, %v663
        %728 = vst [vmem:[%s172] sm:$0xf] %v664
        %729 = vst [vmem:[%s172 + $0x4] sm:$0xf] %v665
        %730 = vst [vmem:[%s172 + $0x8] sm:$0xf] %v666
        %731 = vst [vmem:[%s172 + $0xc] sm:$0xf] %v667
        %732 = vst [vmem:[%s172 + $0x10] sm:$0xf] %v668
        %733 = vst [vmem:[%s172 + $0x14] sm:$0xf] %v669
        %734 = vst [vmem:[%s172 + $0x18] sm:$0xf] %v670
        %735 = vst [vmem:[%s172 + $0x1c] sm:$0xf] %v671
        %736 = vst [vmem:[%s172 + $0x20] sm:$0xf] %v672
        %737 = vst [vmem:[%s172 + $0x24] sm:$0xf] %v673
        %738 = vst [vmem:[%s172 + $0x28] sm:$0xf] %v674
        %739 = vst [vmem:[%s172 + $0x2c] sm:$0xf] %v675
        %740 = vst [vmem:[%s172 + $0x30] sm:$0xf] %v676
        %741 = vst [vmem:[%s172 + $0x34] sm:$0xf] %v677
        %742 = vst [vmem:[%s172 + $0x38] sm:$0xf] %v678
        %743 = vst [vmem:[%s172 + $0x3c] sm:$0xf] %v679
        %744 = vst [vmem:[%s172 + $0x40] sm:$0xf] %v680
        %745 = vst [vmem:[%s172 + $0x44] sm:$0xf] %v681
        %746 = vst [vmem:[%s172 + $0x48] sm:$0xf] %v682
        %747 = vst [vmem:[%s172 + $0x4c] sm:$0xf] %v683
        %748 = vst [vmem:[%s172 + $0x50] sm:$0xf] %v684
        %749 = vst [vmem:[%s172 + $0x54] sm:$0xf] %v685
        %750 = vst [vmem:[%s172 + $0x58] sm:$0xf] %v686
        %751 = vst [vmem:[%s172 + $0x5c] sm:$0xf] %v687
        %752 = vst [vmem:[%s172 + $0x60] sm:$0xf] %v688
        %753 = vst [vmem:[%s172 + $0x64] sm:$0xf] %v689
        %754 = vst [vmem:[%s172 + $0x68] sm:$0xf] %v690
        %755 = vst [vmem:[%s172 + $0x6c] sm:$0xf] %v691
        %756 = vst [vmem:[%s172 + $0x70] sm:$0xf] %v692
        %757 = vst [vmem:[%s172 + $0x74] sm:$0xf] %v693
        %758 = vst [vmem:[%s172 + $0x78] sm:$0xf] %v694
        %759 = vst [vmem:[%s172 + $0x7c] sm:$0xf] %v695
        %s760 = sand.u32 %s90, 1
        %s761 = sand.u32 %s90, 1
        %s762 = smul.addr %s761, 128
        %s763 = scalar_lea.vmem [#allocation2], %s762
        // Predicated region
        $region33: #{_lambda_.5} parent=31 // pred_check
          %p764 = pneg %p100
        $region34: #{_lambda_.5} parent=31 // pred_check_branch
          %766 = sbr.rel (%p764) target = $region36
        $region35: #{_lambda_.5} parent=31 // pred_region
          %s767 = smul.u32 32, %s14
          %s768 = ssub.s32 169, %s767
          %p769 = scmp.lt.s32.totalorder %s768, 32
          %s770 = scalar_select %p769, %s768, 32
          %s771 = smul.u32 64, %s770
          %p772 = scmp.ne.s32.totalorder 0, %s771
          %s773 = smul.addr %s767, 4
          %s774 = scalar_lea.vmem %s3, %s773
          // Predicated region
          $region37: #{_lambda_.5} parent=35 // pred_check
            %p775 = pneg %p772
          $region38: #{_lambda_.5} parent=35 // pred_check_branch
            %777 = sbr.rel (%p775) target = $region40
          $region39: #{_lambda_.5} parent=35 // pred_region
            // Predicated region
            $region41: #{_lambda_.5} parent=39 // pred_check
              _
            $region42: #{_lambda_.5} parent=39 // pred_check_branch
              %779 = sbr.rel target = $region44
            $region43: #{_lambda_.5} parent=39 // pred_region
              // Predicated region
              $region63: #{_lambda_.5} parent=43 // pred_check
                _
              $region64: #{_lambda_.5} parent=43 // pred_check_branch
                %891 = sbr.rel (0) target = $region66
              $region65: #{_lambda_.5} parent=43 // pred_region
                %s893 = ssub.s32 16, 1
                %s894 = sshrl.u32 %s770, 5
                // While loop
                $region67: #{_lambda_.5} parent=65 // loop_pre_header
                  _
                $region68: #{_lambda_.5} parent=65 // loop_header
                  %s896 = sphi 0, %s898
                  %p897 = scmp.ge.s32.totalorder %s896, %s894
                  %s901 = sphi 0, %s970
                  %s902 = sphi %s763, %s973
                  %s903 = sphi %s774, %s974
                $region69: #{_lambda_.5} parent=65 // loop_header_branch
                  %900 = sbr.rel (%p897) target = $region73
                $region70: #{_lambda_.5} parent=65 // loop_body
                  %v904 = vld [vmem:[%s902] sm:%s893]
                  %905 = vst [vmem:[%s903] sm:%s893] %v904
                  %v906 = vld [vmem:[%s902 + $0x4] sm:%s893]
                  %907 = vst [vmem:[%s903 + $0x4] sm:%s893] %v906
                  %v908 = vld [vmem:[%s902 + $0x8] sm:%s893]
                  %909 = vst [vmem:[%s903 + $0x8] sm:%s893] %v908
                  %v910 = vld [vmem:[%s902 + $0xc] sm:%s893]
                  %911 = vst [vmem:[%s903 + $0xc] sm:%s893] %v910
                  %v912 = vld [vmem:[%s902 + $0x10] sm:%s893]
                  %913 = vst [vmem:[%s903 + $0x10] sm:%s893] %v912
                  %v914 = vld [vmem:[%s902 + $0x14] sm:%s893]
                  %915 = vst [vmem:[%s903 + $0x14] sm:%s893] %v914
                  %v916 = vld [vmem:[%s902 + $0x18] sm:%s893]
                  %917 = vst [vmem:[%s903 + $0x18] sm:%s893] %v916
                  %v918 = vld [vmem:[%s902 + $0x1c] sm:%s893]
                  %919 = vst [vmem:[%s903 + $0x1c] sm:%s893] %v918
                  %v920 = vld [vmem:[%s902 + $0x20] sm:%s893]
                  %921 = vst [vmem:[%s903 + $0x20] sm:%s893] %v920
                  %v922 = vld [vmem:[%s902 + $0x24] sm:%s893]
                  %923 = vst [vmem:[%s903 + $0x24] sm:%s893] %v922
                  %v924 = vld [vmem:[%s902 + $0x28] sm:%s893]
                  %925 = vst [vmem:[%s903 + $0x28] sm:%s893] %v924
                  %v926 = vld [vmem:[%s902 + $0x2c] sm:%s893]
                  %927 = vst [vmem:[%s903 + $0x2c] sm:%s893] %v926
                  %v928 = vld [vmem:[%s902 + $0x30] sm:%s893]
                  %929 = vst [vmem:[%s903 + $0x30] sm:%s893] %v928
                  %v930 = vld [vmem:[%s902 + $0x34] sm:%s893]
                  %931 = vst [vmem:[%s903 + $0x34] sm:%s893] %v930
                  %v932 = vld [vmem:[%s902 + $0x38] sm:%s893]
                  %933 = vst [vmem:[%s903 + $0x38] sm:%s893] %v932
                  %v934 = vld [vmem:[%s902 + $0x3c] sm:%s893]
                  %935 = vst [vmem:[%s903 + $0x3c] sm:%s893] %v934
                  %v936 = vld [vmem:[%s902 + $0x40] sm:%s893]
                  %937 = vst [vmem:[%s903 + $0x40] sm:%s893] %v936
                  %v938 = vld [vmem:[%s902 + $0x44] sm:%s893]
                  %939 = vst [vmem:[%s903 + $0x44] sm:%s893] %v938
                  %v940 = vld [vmem:[%s902 + $0x48] sm:%s893]
                  %941 = vst [vmem:[%s903 + $0x48] sm:%s893] %v940
                  %v942 = vld [vmem:[%s902 + $0x4c] sm:%s893]
                  %943 = vst [vmem:[%s903 + $0x4c] sm:%s893] %v942
                  %v944 = vld [vmem:[%s902 + $0x50] sm:%s893]
                  %945 = vst [vmem:[%s903 + $0x50] sm:%s893] %v944
                  %v946 = vld [vmem:[%s902 + $0x54] sm:%s893]
                  %947 = vst [vmem:[%s903 + $0x54] sm:%s893] %v946
                  %v948 = vld [vmem:[%s902 + $0x58] sm:%s893]
                  %949 = vst [vmem:[%s903 + $0x58] sm:%s893] %v948
                  %v950 = vld [vmem:[%s902 + $0x5c] sm:%s893]
                  %951 = vst [vmem:[%s903 + $0x5c] sm:%s893] %v950
                  %v952 = vld [vmem:[%s902 + $0x60] sm:%s893]
                  %953 = vst [vmem:[%s903 + $0x60] sm:%s893] %v952
                  %v954 = vld [vmem:[%s902 + $0x64] sm:%s893]
                  %955 = vst [vmem:[%s903 + $0x64] sm:%s893] %v954
                  %v956 = vld [vmem:[%s902 + $0x68] sm:%s893]
                  %957 = vst [vmem:[%s903 + $0x68] sm:%s893] %v956
                  %v958 = vld [vmem:[%s902 + $0x6c] sm:%s893]
                  %959 = vst [vmem:[%s903 + $0x6c] sm:%s893] %v958
                  %v960 = vld [vmem:[%s902 + $0x70] sm:%s893]
                  %961 = vst [vmem:[%s903 + $0x70] sm:%s893] %v960
                  %v962 = vld [vmem:[%s902 + $0x74] sm:%s893]
                  %963 = vst [vmem:[%s903 + $0x74] sm:%s893] %v962
                  %v964 = vld [vmem:[%s902 + $0x78] sm:%s893]
                  %965 = vst [vmem:[%s903 + $0x78] sm:%s893] %v964
                  %v966 = vld [vmem:[%s902 + $0x7c] sm:%s893]
                  %967 = vst [vmem:[%s903 + $0x7c] sm:%s893] %v966
                  %s968 = sadd.s32 1, %s901
                  %p969 = scmp.ge.s32.totalorder %s968, %s894
                  %s970 = scalar_select %p969, 0, %s968
                  %s971 = smul.u32 %s970, 128
                  %s972 = smul.u32 %s970, 128
                  %s973 = scalar_lea.vmem %s763, %s971 [#allocation2]
                  %s974 = scalar_lea.vmem %s774, %s972
                $region71: #{_lambda_.5} parent=65 // loop_footer
                  %s898 = sadd.s32 %s896, 1
                $region72: #{_lambda_.5} parent=65 // loop_footer_branch
                  %895 = sbr.rel target = $region68
                $region73: #{_lambda_.5} parent=65 // loop_exit
                  _
                %s975 = sshrl.u32 %s770, 5
                %s976 = sand.u32 %s770, 31
                %s977 = smul.u32 %s975, 32
                %s978 = smul.u32 4, %s977
                %s979 = scalar_lea.vmem %s763, %s978 [#allocation2]
                %s980 = smul.u32 4, %s977
                %s981 = scalar_lea.vmem %s774, %s980
                // While loop
                $region74: #{_lambda_.5} parent=65 // loop_pre_header
                  _
                $region75: #{_lambda_.5} parent=65 // loop_header
                  %s983 = sphi 0, %s985
                  %p984 = scmp.ge.s32.totalorder %s983, %s976
                  %s988 = sphi 0, %s995
                  %s989 = sphi %s979, %s998
                  %s990 = sphi %s981, %s999
                $region76: #{_lambda_.5} parent=65 // loop_header_branch
                  %987 = sbr.rel (%p984) target = $region80
                $region77: #{_lambda_.5} parent=65 // loop_body
                  %v991 = vld [vmem:[%s989] sm:%s893]
                  %992 = vst [vmem:[%s990] sm:%s893] %v991
                  %s993 = sadd.s32 1, %s988
                  %p994 = scmp.ge.s32.totalorder %s993, %s976
                  %s995 = scalar_select %p994, 0, %s993
                  %s996 = smul.u32 %s995, 4
                  %s997 = smul.u32 %s995, 4
                  %s998 = scalar_lea.vmem %s979, %s996 [#allocation2]
                  %s999 = scalar_lea.vmem %s981, %s997
                $region78: #{_lambda_.5} parent=65 // loop_footer
                  %s985 = sadd.s32 %s983, 1
                $region79: #{_lambda_.5} parent=65 // loop_footer_branch
                  %982 = sbr.rel target = $region75
                $region80: #{_lambda_.5} parent=65 // loop_exit
                  _
              $region66: #{_lambda_.5} parent=43 // pred_fallthru
                _
            $region44: #{_lambda_.5} parent=39 // pred_fallthru
              _
            // Predicated region
            $region45: #{_lambda_.5} parent=39 // pred_check
              _
            $region46: #{_lambda_.5} parent=39 // pred_check_branch
              %781 = sbr.rel (0) target = $region48
            $region47: #{_lambda_.5} parent=39 // pred_region
              %s783 = ssub.s32 16, 1
              %s784 = sshrl.u32 %s770, 5
              // While loop
              $region49: #{_lambda_.5} parent=47 // loop_pre_header
                _
              $region50: #{_lambda_.5} parent=47 // loop_header
                %s786 = sphi 0, %s788
                %p787 = scmp.ge.s32.totalorder %s786, %s784
                %s791 = sphi 0, %s860
                %s792 = sphi %s763, %s863
                %s793 = sphi %s774, %s864
              $region51: #{_lambda_.5} parent=47 // loop_header_branch
                %790 = sbr.rel (%p787) target = $region55
              $region52: #{_lambda_.5} parent=47 // loop_body
                %v794 = vld [vmem:[%s792] sm:%s783]
                %795 = vst [vmem:[%s793] sm:%s783] %v794
                %v796 = vld [vmem:[%s792 + $0x4] sm:%s783]
                %797 = vst [vmem:[%s793 + $0x4] sm:%s783] %v796
                %v798 = vld [vmem:[%s792 + $0x8] sm:%s783]
                %799 = vst [vmem:[%s793 + $0x8] sm:%s783] %v798
                %v800 = vld [vmem:[%s792 + $0xc] sm:%s783]
                %801 = vst [vmem:[%s793 + $0xc] sm:%s783] %v800
                %v802 = vld [vmem:[%s792 + $0x10] sm:%s783]
                %803 = vst [vmem:[%s793 + $0x10] sm:%s783] %v802
                %v804 = vld [vmem:[%s792 + $0x14] sm:%s783]
                %805 = vst [vmem:[%s793 + $0x14] sm:%s783] %v804
                %v806 = vld [vmem:[%s792 + $0x18] sm:%s783]
                %807 = vst [vmem:[%s793 + $0x18] sm:%s783] %v806
                %v808 = vld [vmem:[%s792 + $0x1c] sm:%s783]
                %809 = vst [vmem:[%s793 + $0x1c] sm:%s783] %v808
                %v810 = vld [vmem:[%s792 + $0x20] sm:%s783]
                %811 = vst [vmem:[%s793 + $0x20] sm:%s783] %v810
                %v812 = vld [vmem:[%s792 + $0x24] sm:%s783]
                %813 = vst [vmem:[%s793 + $0x24] sm:%s783] %v812
                %v814 = vld [vmem:[%s792 + $0x28] sm:%s783]
                %815 = vst [vmem:[%s793 + $0x28] sm:%s783] %v814
                %v816 = vld [vmem:[%s792 + $0x2c] sm:%s783]
                %817 = vst [vmem:[%s793 + $0x2c] sm:%s783] %v816
                %v818 = vld [vmem:[%s792 + $0x30] sm:%s783]
                %819 = vst [vmem:[%s793 + $0x30] sm:%s783] %v818
                %v820 = vld [vmem:[%s792 + $0x34] sm:%s783]
                %821 = vst [vmem:[%s793 + $0x34] sm:%s783] %v820
                %v822 = vld [vmem:[%s792 + $0x38] sm:%s783]
                %823 = vst [vmem:[%s793 + $0x38] sm:%s783] %v822
                %v824 = vld [vmem:[%s792 + $0x3c] sm:%s783]
                %825 = vst [vmem:[%s793 + $0x3c] sm:%s783] %v824
                %v826 = vld [vmem:[%s792 + $0x40] sm:%s783]
                %827 = vst [vmem:[%s793 + $0x40] sm:%s783] %v826
                %v828 = vld [vmem:[%s792 + $0x44] sm:%s783]
                %829 = vst [vmem:[%s793 + $0x44] sm:%s783] %v828
                %v830 = vld [vmem:[%s792 + $0x48] sm:%s783]
                %831 = vst [vmem:[%s793 + $0x48] sm:%s783] %v830
                %v832 = vld [vmem:[%s792 + $0x4c] sm:%s783]
                %833 = vst [vmem:[%s793 + $0x4c] sm:%s783] %v832
                %v834 = vld [vmem:[%s792 + $0x50] sm:%s783]
                %835 = vst [vmem:[%s793 + $0x50] sm:%s783] %v834
                %v836 = vld [vmem:[%s792 + $0x54] sm:%s783]
                %837 = vst [vmem:[%s793 + $0x54] sm:%s783] %v836
                %v838 = vld [vmem:[%s792 + $0x58] sm:%s783]
                %839 = vst [vmem:[%s793 + $0x58] sm:%s783] %v838
                %v840 = vld [vmem:[%s792 + $0x5c] sm:%s783]
                %841 = vst [vmem:[%s793 + $0x5c] sm:%s783] %v840
                %v842 = vld [vmem:[%s792 + $0x60] sm:%s783]
                %843 = vst [vmem:[%s793 + $0x60] sm:%s783] %v842
                %v844 = vld [vmem:[%s792 + $0x64] sm:%s783]
                %845 = vst [vmem:[%s793 + $0x64] sm:%s783] %v844
                %v846 = vld [vmem:[%s792 + $0x68] sm:%s783]
                %847 = vst [vmem:[%s793 + $0x68] sm:%s783] %v846
                %v848 = vld [vmem:[%s792 + $0x6c] sm:%s783]
                %849 = vst [vmem:[%s793 + $0x6c] sm:%s783] %v848
                %v850 = vld [vmem:[%s792 + $0x70] sm:%s783]
                %851 = vst [vmem:[%s793 + $0x70] sm:%s783] %v850
                %v852 = vld [vmem:[%s792 + $0x74] sm:%s783]
                %853 = vst [vmem:[%s793 + $0x74] sm:%s783] %v852
                %v854 = vld [vmem:[%s792 + $0x78] sm:%s783]
                %855 = vst [vmem:[%s793 + $0x78] sm:%s783] %v854
                %v856 = vld [vmem:[%s792 + $0x7c] sm:%s783]
                %857 = vst [vmem:[%s793 + $0x7c] sm:%s783] %v856
                %s858 = sadd.s32 1, %s791
                %p859 = scmp.ge.s32.totalorder %s858, %s784
                %s860 = scalar_select %p859, 0, %s858
                %s861 = smul.u32 %s860, 128
                %s862 = smul.u32 %s860, 128
                %s863 = scalar_lea.vmem %s763, %s861 [#allocation2]
                %s864 = scalar_lea.vmem %s774, %s862
              $region53: #{_lambda_.5} parent=47 // loop_footer
                %s788 = sadd.s32 %s786, 1
              $region54: #{_lambda_.5} parent=47 // loop_footer_branch
                %785 = sbr.rel target = $region50
              $region55: #{_lambda_.5} parent=47 // loop_exit
                _
              %s865 = sshrl.u32 %s770, 5
              %s866 = sand.u32 %s770, 31
              %s867 = smul.u32 %s865, 32
              %s868 = smul.u32 4, %s867
              %s869 = scalar_lea.vmem %s763, %s868 [#allocation2]
              %s870 = smul.u32 4, %s867
              %s871 = scalar_lea.vmem %s774, %s870
              // While loop
              $region56: #{_lambda_.5} parent=47 // loop_pre_header
                _
              $region57: #{_lambda_.5} parent=47 // loop_header
                %s873 = sphi 0, %s875
                %p874 = scmp.ge.s32.totalorder %s873, %s866
                %s878 = sphi 0, %s885
                %s879 = sphi %s869, %s888
                %s880 = sphi %s871, %s889
              $region58: #{_lambda_.5} parent=47 // loop_header_branch
                %877 = sbr.rel (%p874) target = $region62
              $region59: #{_lambda_.5} parent=47 // loop_body
                %v881 = vld [vmem:[%s879] sm:%s783]
                %882 = vst [vmem:[%s880] sm:%s783] %v881
                %s883 = sadd.s32 1, %s878
                %p884 = scmp.ge.s32.totalorder %s883, %s866
                %s885 = scalar_select %p884, 0, %s883
                %s886 = smul.u32 %s885, 4
                %s887 = smul.u32 %s885, 4
                %s888 = scalar_lea.vmem %s869, %s886 [#allocation2]
                %s889 = scalar_lea.vmem %s871, %s887
              $region60: #{_lambda_.5} parent=47 // loop_footer
                %s875 = sadd.s32 %s873, 1
              $region61: #{_lambda_.5} parent=47 // loop_footer_branch
                %872 = sbr.rel target = $region57
              $region62: #{_lambda_.5} parent=47 // loop_exit
                _
            $region48: #{_lambda_.5} parent=39 // pred_fallthru
              _
          $region40: #{_lambda_.5} parent=35 // pred_fallthru
            _
          %1000 = vnop
        $region36: #{_lambda_.5} parent=31 // pred_fallthru
          _
      $region32: #{_lambda_.5} parent=5 // pred_fallthru
        _
      %p1001 = scmp.le.s32.totalorder 2, %s9
      // Predicated region
      $region81: #{_lambda_.5} parent=5 // pred_check
        %p1002 = pneg %p1001
      $region82: #{_lambda_.5} parent=5 // pred_check_branch
        %1004 = sbr.rel (%p1002) target = $region84
      $region83: #{_lambda_.5} parent=5 // pred_region
        %s1005 = ssub.s32 %s9, 2
        // Predicated region
        $region85: #{_lambda_.5} parent=83 // pred_check
          %p1006 = pneg %p106
        $region86: #{_lambda_.5} parent=83 // pred_check_branch
          %1008 = sbr.rel (%p1006) target = $region88
        $region87: #{_lambda_.5} parent=83 // pred_region
          %s1009 = sand.u32 %s91, 1
          %s1010 = sand.u32 %s91, 1
          %s1011 = smul.addr %s1010, 128
          %s1012 = scalar_lea.vmem [#allocation2], %s1011
        $region88: #{_lambda_.5} parent=83 // pred_fallthru
          _
      $region84: #{_lambda_.5} parent=5 // pred_fallthru
        _
    $region6: #{_lambda_.5} parent=1 // loop_footer
      %s13 = sadd.s32 1, %s9
    $region7: #{_lambda_.5} parent=1 // loop_footer_branch
      %8 = sbr.rel target = $region3
    $region8: #{_lambda_.5} parent=1 // loop_exit
      _

// kernel: _lambda_.6
$region0: #{_lambda_.6}
  #allocation0 [shape = 'u32[]', space=smem, size = 0x4, offset = 0x4, fixed_abs, tag = 'smem constant byte address 0x4 - core index']
  #allocation1 [shape = 'u32[144,128]{1,0:T(1,128)}', space=vmem, size = 0x12000, scoped, tag = 'internal scratch']
  %s0 = inlined_call_operand.vmem [shape: bf16[294,1152], index: 0, kind: input, shape index: {}]
  %s1 = inlined_call_operand.vmem [shape: bf16[1152,128], index: 1, kind: input, shape index: {}]
  %s2 = inlined_call_operand.vmem [shape: f32[1,128], index: 2, kind: input, shape index: {}]
  %s3 = inlined_call_operand.vmem [shape: bf16[294,128], index: 3, kind: output, shape index: {}]
  %s4 = sld [smem:[#allocation0]]
  $region89: #{_lambda_.6} parent=0
    _
  %s6 = ssub.s32 1, %s4
  %s7 = scalar_select 0, %s6, %s4
  $region1: #{_lambda_.6} parent=0
    #allocation2 [shape = 'u8[131072]{0}', space=vmem, size = 0x20000, scoped, tag = 'output window, operand 0']
    loop: start=0, step=1, limit=4
    $region2: #{_lambda_.6} parent=1 // loop_pre_header
      _
    $region3: #{_lambda_.6} parent=1 // loop_header
      %s9 = sphi 0, %s13
      %p10 = scmp.ge.s32.totalorder %s9, 4
      %s19 = sphi 0, %s21
      %s22 = sphi 0, %s19
      %s23 = sphi 0, %s22
      %s39 = sphi 0, %s23
      %s43 = sphi 0, %s43
      %s45 = sphi 0, %s43
      %s46 = sphi 0, %s45
      %s60 = sphi 0, %s46
      %s64 = sphi 0, %s64
      %s66 = sphi 0, %s64
      %s67 = sphi 0, %s66
      %s81 = sphi 0, %s67
      %s87 = sphi 0, %s89
      %s90 = sphi 0, %s87
      %s91 = sphi 0, %s90
      %s107 = sphi 0, %s91
    $region4: #{_lambda_.6} parent=1 // loop_header_branch
      %12 = sbr.rel (%p10) target = $region8
    $region5: #{_lambda_.6} parent=1 // loop_body
      %s14 = ssub.s32 %s9, 1
      %s15 = ssub.s32 %s9, 2
      %s16 = sadd.s32 %s9, 1
      %s17 = ssub.s32 %s9, %s16
      %p18 = scmp.eq.s32.totalorder %s17, 0
      %s20 = sadd.s32 %s19, 1
      %s21 = scalar_select %p18, %s19, %s20
      %p24 = pneg %p18
      %p25 = scmp.eq.s32.totalorder %s9, 1
      %p26 = por %p24, %p25
      %p27 = scmp.ne.s32.totalorder %s19, %s22
      %p28 = scmp.eq.s32.totalorder %s9, 0
      %p29 = por %p27, %p28
      %p30 = scmp.ne.s32.totalorder %s19, %s22
      %p31 = scmp.eq.s32.totalorder %s14, 1
      %p32 = por %p30, %p31
      %p33 = scmp.ne.s32.totalorder %s22, %s23
      %p34 = scmp.eq.s32.totalorder %s14, 0
      %p35 = por %p33, %p34
      %p36 = scmp.ne.s32.totalorder %s22, %s23
      %p37 = scmp.eq.s32.totalorder %s15, 1
      %p38 = por %p36, %p37
      %p40 = scmp.ne.s32.totalorder %s23, %s39
      %p41 = scmp.eq.s32.totalorder %s15, 0
      %p42 = por %p40, %p41
      %s44 = sadd.s32 %s43, 1
      %p47 = scmp.eq.s32.totalorder %s9, 1
      %p48 = scmp.ne.s32.totalorder %s43, %s45
      %p49 = scmp.eq.s32.totalorder %s9, 0
      %p50 = por %p48, %p49
      %p51 = scmp.ne.s32.totalorder %s43, %s45
      %p52 = scmp.eq.s32.totalorder %s14, 1
      %p53 = por %p51, %p52
      %p54 = scmp.ne.s32.totalorder %s45, %s46
      %p55 = scmp.eq.s32.totalorder %s14, 0
      %p56 = por %p54, %p55
      %p57 = scmp.ne.s32.totalorder %s45, %s46
      %p58 = scmp.eq.s32.totalorder %s15, 1
      %p59 = por %p57, %p58
      %p61 = scmp.ne.s32.totalorder %s46, %s60
      %p62 = scmp.eq.s32.totalorder %s15, 0
      %p63 = por %p61, %p62
      %s65 = sadd.s32 %s64, 1
      %p68 = scmp.eq.s32.totalorder %s9, 1
      %p69 = scmp.ne.s32.totalorder %s64, %s66
      %p70 = scmp.eq.s32.totalorder %s9, 0
      %p71 = por %p69, %p70
      %p72 = scmp.ne.s32.totalorder %s64, %s66
      %p73 = scmp.eq.s32.totalorder %s14, 1
      %p74 = por %p72, %p73
      %p75 = scmp.ne.s32.totalorder %s66, %s67
      %p76 = scmp.eq.s32.totalorder %s14, 0
      %p77 = por %p75, %p76
      %p78 = scmp.ne.s32.totalorder %s66, %s67
      %p79 = scmp.eq.s32.totalorder %s15, 1
      %p80 = por %p78, %p79
      %p82 = scmp.ne.s32.totalorder %s67, %s81
      %p83 = scmp.eq.s32.totalorder %s15, 0
      %p84 = por %p82, %p83
      %s85 = ssub.s32 %s9, %s16
      %p86 = scmp.eq.s32.totalorder %s85, 0
      %s88 = sadd.s32 %s87, 1
      %s89 = scalar_select %p86, %s87, %s88
      %p92 = pneg %p86
      %p93 = scmp.eq.s32.totalorder %s9, 1
      %p94 = por %p92, %p93
      %p95 = scmp.ne.s32.totalorder %s87, %s90
      %p96 = scmp.eq.s32.totalorder %s9, 0
      %p97 = por %p95, %p96
      %p98 = scmp.ne.s32.totalorder %s87, %s90
      %p99 = scmp.eq.s32.totalorder %s14, 1
      %p100 = por %p98, %p99
      %p101 = scmp.ne.s32.totalorder %s90, %s91
      %p102 = scmp.eq.s32.totalorder %s14, 0
      %p103 = por %p101, %p102
      %p104 = scmp.ne.s32.totalorder %s90, %s91
      %p105 = scmp.eq.s32.totalorder %s15, 1
      %p106 = por %p104, %p105
      %p108 = scmp.ne.s32.totalorder %s91, %s107
      %p109 = scmp.eq.s32.totalorder %s15, 0
      %p110 = por %p108, %p109
      %p111 = scmp.le.s32.totalorder 1, %s9
      %p112 = scmp.lt.s32.totalorder %s9, 3
      %p113 = pnand %p111, %p112
      %p114 = pneg %p113
      // Predicated region
      $region9: #{_lambda_.6} parent=5 // pred_check
        _
      $region10: #{_lambda_.6} parent=5 // pred_check_branch
        %116 = sbr.rel (%p113) target = $region12
      $region11: #{_lambda_.6} parent=5 // pred_region
        %s117 = ssub.s32 %s9, 1
        // Predicated region
        $region13: #{_lambda_.6} parent=11 // pred_check
          %p118 = pneg %p56
        $region14: #{_lambda_.6} parent=11 // pred_check_branch
          %120 = sbr.rel (%p118) target = $region16
        $region15: #{_lambda_.6} parent=11 // pred_region
          _
        $region16: #{_lambda_.6} parent=11 // pred_fallthru
          _
        // Predicated region
        $region17: #{_lambda_.6} parent=11 // pred_check
          %p121 = pneg %p77
        $region18: #{_lambda_.6} parent=11 // pred_check_branch
          %123 = sbr.rel (%p121) target = $region20
        $region19: #{_lambda_.6} parent=11 // pred_region
          _
        $region20: #{_lambda_.6} parent=11 // pred_fallthru
          _
      $region12: #{_lambda_.6} parent=5 // pred_fallthru
        _
      %p124 = scmp.lt.s32.totalorder %s9, 2
      // Predicated region
      $region21: #{_lambda_.6} parent=5 // pred_check
        %p125 = pneg %p124
      $region22: #{_lambda_.6} parent=5 // pred_check_branch
        %127 = sbr.rel (%p125) target = $region24
      $region23: #{_lambda_.6} parent=5 // pred_region
        // Predicated region
        $region25: #{_lambda_.6} parent=23 // pred_check
          %p128 = pneg %p29
        $region26: #{_lambda_.6} parent=23 // pred_check_branch
          %130 = sbr.rel (%p128) target = $region28
        $region27: #{_lambda_.6} parent=23 // pred_region
          %s131 = smul.u32 32, %s9
          %s132 = ssub.s32 37, %s131
          %p133 = scmp.lt.s32.totalorder %s132, 32
          %s134 = scalar_select %p133, %s132, 32
          %s135 = smul.u32 64, %s134
          %s136 = smul.u32 %s135, 9
          %p137 = scmp.lt.s32.totalorder %s131, 36
          %s138 = scalar_select %p137, %s131, 36
          %s139 = smul.addr %s138, 9
          %s140 = smul.addr %s139, 4
          %s141 = scalar_lea.vmem %s0, %s140
          %s142 = smul.u32 32, %s9
          %s143 = ssub.s32 37, %s142
          %p144 = scmp.lt.s32.totalorder %s143, 32
          %s145 = scalar_select %p144, %s143, 32
          %s146 = smul.u32 64, %s145
          %s147 = smul.u32 %s146, 9
        $region28: #{_lambda_.6} parent=23 // pred_fallthru
          _
      $region24: #{_lambda_.6} parent=5 // pred_fallthru
        _
      %p148 = scmp.le.s32.totalorder 1, %s9
      %p149 = scmp.lt.s32.totalorder %s9, 3
      %p150 = pnand %p148, %p149
      %p151 = pneg %p150
      // Predicated region
      $region29: #{_lambda_.6} parent=5 // pred_check
        _
      $region30: #{_lambda_.6} parent=5 // pred_check_branch
        %153 = sbr.rel (%p150) target = $region32
      $region31: #{_lambda_.6} parent=5 // pred_region
        %s154 = ssub.s32 %s9, 1
        %s155 = smul.u32 32, %s14
        %s156 = ssub.s32 37, %s155
        %p157 = scmp.lt.s32.totalorder %s156, 32
        %s158 = scalar_select %p157, %s156, 32
        %s159 = smul.u32 64, %s158
        %s160 = smul.u32 %s159, 9
        %p161 = scmp.lt.s32.totalorder %s155, 36
        %s162 = scalar_select %p161, %s155, 36
        %s163 = smul.addr %s162, 9
        %s164 = smul.addr %s163, 4
        %s165 = scalar_lea.vmem %s0, %s164
        %p166 = pneg %p35
        %p167 = pneg %p32
        %p168 = pneg %p56
        %p169 = pneg %p53
        %p170 = pneg %p77
        %p171 = pneg %p74
        %p172 = pneg %p103
        %p173 = pneg %p100
        %s174 = sand.u32 %s90, 1
        %s175 = sand.u32 %s90, 1
        %s176 = smul.addr %s175, 128
        %s177 = scalar_lea.vmem [#allocation2], %s176
        %s178 = smul.u32 32, %s14
        %s179 = ssub.s32 37, %s178
        %p180 = scmp.lt.s32.totalorder %s179, 32
        %s181 = scalar_select %p180, %s179, 32
        %s182 = smul.u32 64, %s181
        %s183 = smul.u32 %s182, 9
        %p184 = scmp.lt.s32.totalorder %s178, 36
        %s185 = scalar_select %p184, %s178, 36
        %s186 = smul.addr %s185, 9
        %s187 = smul.addr %s186, 4
        %s188 = scalar_lea.vmem %s0, %s187
        %s189 = smul.u32 32, %s14
        %s190 = ssub.s32 37, %s189
        %p191 = scmp.lt.s32.totalorder %s190, 32
        %s192 = scalar_select %p191, %s190, 32
        %s193 = smul.u32 64, %s192
        %s194 = smul.u32 %s193, 9
        %s195 = smul.u32 32, %s14
        %s196 = ssub.s32 37, %s195
        %p197 = scmp.lt.s32.totalorder %s196, 32
        %s198 = scalar_select %p197, %s196, 32
        %s199 = smul.u32 64, %s198
        %v201 = vld [vmem:[%s188] sm:$0xff]
        %v202 = vld [vmem:[%s188 + $0x8] sm:$0xff]
        %v203 = vld [vmem:[%s188 + $0x10] sm:$0xff]
        %v204 = vld [vmem:[%s188 + $0x18] sm:$0xff]
        %v205 = vld [vmem:[%s188 + $0x20] sm:$0xf]
        %v206 = vld [vmem:[%s188 + $0x24] sm:$0xff]
        %v207 = vld [vmem:[%s188 + $0x2c] sm:$0xff]
        %v208 = vld [vmem:[%s188 + $0x34] sm:$0xff]
        %v209 = vld [vmem:[%s188 + $0x3c] sm:$0xff]
        %v210 = vld [vmem:[%s188 + $0x44] sm:$0xf]
        %v211 = vld [vmem:[%s188 + $0x48] sm:$0xff]
        %v212 = vld [vmem:[%s188 + $0x50] sm:$0xff]
        %v213 = vld [vmem:[%s188 + $0x58] sm:$0xff]
        %v214 = vld [vmem:[%s188 + $0x60] sm:$0xff]
        %v215 = vld [vmem:[%s188 + $0x68] sm:$0xf]
        %v216 = vld [vmem:[%s188 + $0x6c] sm:$0xff]
        %v217 = vld [vmem:[%s188 + $0x74] sm:$0xff]
        %v218 = vld [vmem:[%s188 + $0x7c] sm:$0xff]
        %v219 = vld [vmem:[%s188 + $0x84] sm:$0xff]
        %v220 = vld [vmem:[%s188 + $0x8c] sm:$0xf]
        %v221 = vld [vmem:[%s188 + $0x90] sm:$0xff]
        %v222 = vld [vmem:[%s188 + $0x98] sm:$0xff]
        %v223 = vld [vmem:[%s188 + $0xa0] sm:$0xff]
        %v224 = vld [vmem:[%s188 + $0xa8] sm:$0xff]
        %v225 = vld [vmem:[%s188 + $0xb0] sm:$0xf]
        %v226 = vld [vmem:[%s188 + $0xb4] sm:$0xff]
        %v227 = vld [vmem:[%s188 + $0xbc] sm:$0xff]
        %v228 = vld [vmem:[%s188 + $0xc4] sm:$0xff]
        %v229 = vld [vmem:[%s188 + $0xcc] sm:$0xff]
        %v230 = vld [vmem:[%s188 + $0xd4] sm:$0xf]
        %v231 = vld [vmem:[%s188 + $0xd8] sm:$0xff]
        %v232 = vld [vmem:[%s188 + $0xe0] sm:$0xff]
        %v233 = vld [vmem:[%s188 + $0xe8] sm:$0xff]
        %v234 = vld [vmem:[%s188 + $0xf0] sm:$0xff]
        %v235 = vld [vmem:[%s188 + $0xf8] sm:$0xf]
        %v236 = vld [vmem:[%s188 + $0xfc] sm:$0xff]
        %v237 = vld [vmem:[%s188 + $0x104] sm:$0xff]
        %v238 = vld [vmem:[%s188 + $0x10c] sm:$0xff]
        %v239 = vld [vmem:[%s188 + $0x114] sm:$0xff]
        %v240 = vld [vmem:[%s188 + $0x11c] sm:$0xf]
        %v241 = vld [vmem:[%s188 + $0x120] sm:$0xff]
        %v242 = vld [vmem:[%s188 + $0x128] sm:$0xff]
        %v243 = vld [vmem:[%s188 + $0x130] sm:$0xff]
        %v244 = vld [vmem:[%s188 + $0x138] sm:$0xff]
        %v245 = vld [vmem:[%s188 + $0x140] sm:$0xf]
        %v246 = vld [vmem:[%s188 + $0x144] sm:$0xff]
        %v247 = vld [vmem:[%s188 + $0x14c] sm:$0xff]
        %v248 = vld [vmem:[%s188 + $0x154] sm:$0xff]
        %v249 = vld [vmem:[%s188 + $0x15c] sm:$0xff]
        %v250 = vld [vmem:[%s188 + $0x164] sm:$0xf]
        %v251 = vld [vmem:[%s188 + $0x168] sm:$0xff]
        %v252 = vld [vmem:[%s188 + $0x170] sm:$0xff]
        %v253 = vld [vmem:[%s188 + $0x178] sm:$0xff]
        %v254 = vld [vmem:[%s188 + $0x180] sm:$0xff]
        %v255 = vld [vmem:[%s188 + $0x188] sm:$0xf]
        %v256 = vld [vmem:[%s188 + $0x18c] sm:$0xff]
        %v257 = vld [vmem:[%s188 + $0x194] sm:$0xff]
        %v258 = vld [vmem:[%s188 + $0x19c] sm:$0xff]
        %v259 = vld [vmem:[%s188 + $0x1a4] sm:$0xff]
        %v260 = vld [vmem:[%s188 + $0x1ac] sm:$0xf]
        %v261 = vld [vmem:[%s188 + $0x1b0] sm:$0xff]
        %v262 = vld [vmem:[%s188 + $0x1b8] sm:$0xff]
        %v263 = vld [vmem:[%s188 + $0x1c0] sm:$0xff]
        %v264 = vld [vmem:[%s188 + $0x1c8] sm:$0xff]
        %v265 = vld [vmem:[%s188 + $0x1d0] sm:$0xf]
        %v266 = vld [vmem:[%s188 + $0x1d4] sm:$0xff]
        %v267 = vld [vmem:[%s188 + $0x1dc] sm:$0xff]
        %v268 = vld [vmem:[%s188 + $0x1e4] sm:$0xff]
        %v269 = vld [vmem:[%s188 + $0x1ec] sm:$0xff]
        %v270 = vld [vmem:[%s188 + $0x1f4] sm:$0xf]
        %v271 = vld [vmem:[%s188 + $0x1f8] sm:$0xff]
        %v272 = vld [vmem:[%s188 + $0x200] sm:$0xff]
        %v273 = vld [vmem:[%s188 + $0x208] sm:$0xff]
        %v274 = vld [vmem:[%s188 + $0x210] sm:$0xff]
        %v275 = vld [vmem:[%s188 + $0x218] sm:$0xf]
        %v276 = vld [vmem:[%s188 + $0x21c] sm:$0xff]
        %v277 = vld [vmem:[%s188 + $0x224] sm:$0xff]
        %v278 = vld [vmem:[%s188 + $0x22c] sm:$0xff]
        %v279 = vld [vmem:[%s188 + $0x234] sm:$0xff]
        %v280 = vld [vmem:[%s188 + $0x23c] sm:$0xf]
        %v281 = vld [vmem:[%s188 + $0x240] sm:$0xff]
        %v282 = vld [vmem:[%s188 + $0x248] sm:$0xff]
        %v283 = vld [vmem:[%s188 + $0x250] sm:$0xff]
        %v284 = vld [vmem:[%s188 + $0x258] sm:$0xff]
        %v285 = vld [vmem:[%s188 + $0x260] sm:$0xf]
        %v286 = vld [vmem:[%s188 + $0x264] sm:$0xff]
        %v287 = vld [vmem:[%s188 + $0x26c] sm:$0xff]
        %v288 = vld [vmem:[%s188 + $0x274] sm:$0xff]
        %v289 = vld [vmem:[%s188 + $0x27c] sm:$0xff]
        %v290 = vld [vmem:[%s188 + $0x284] sm:$0xf]
        %v291 = vld [vmem:[%s188 + $0x288] sm:$0xff]
        %v292 = vld [vmem:[%s188 + $0x290] sm:$0xff]
        %v293 = vld [vmem:[%s188 + $0x298] sm:$0xff]
        %v294 = vld [vmem:[%s188 + $0x2a0] sm:$0xff]
        %v295 = vld [vmem:[%s188 + $0x2a8] sm:$0xf]
        %v296 = vld [vmem:[%s188 + $0x2ac] sm:$0xff]
        %v297 = vld [vmem:[%s188 + $0x2b4] sm:$0xff]
        %v298 = vld [vmem:[%s188 + $0x2bc] sm:$0xff]
        %v299 = vld [vmem:[%s188 + $0x2c4] sm:$0xff]
        %v300 = vld [vmem:[%s188 + $0x2cc] sm:$0xf]
        %v301 = vld [vmem:[%s188 + $0x2d0] sm:$0xff]
        %v302 = vld [vmem:[%s188 + $0x2d8] sm:$0xff]
        %v303 = vld [vmem:[%s188 + $0x2e0] sm:$0xff]
        %v304 = vld [vmem:[%s188 + $0x2e8] sm:$0xff]
        %v305 = vld [vmem:[%s188 + $0x2f0] sm:$0xf]
        %v306 = vld [vmem:[%s188 + $0x2f4] sm:$0xff]
        %v307 = vld [vmem:[%s188 + $0x2fc] sm:$0xff]
        %v308 = vld [vmem:[%s188 + $0x304] sm:$0xff]
        %v309 = vld [vmem:[%s188 + $0x30c] sm:$0xff]
        %v310 = vld [vmem:[%s188 + $0x314] sm:$0xf]
        %v311 = vld [vmem:[%s188 + $0x318] sm:$0xff]
        %v312 = vld [vmem:[%s188 + $0x320] sm:$0xff]
        %v313 = vld [vmem:[%s188 + $0x328] sm:$0xff]
        %v314 = vld [vmem:[%s188 + $0x330] sm:$0xff]
        %v315 = vld [vmem:[%s188 + $0x338] sm:$0xf]
        %v316 = vld [vmem:[%s188 + $0x33c] sm:$0xff]
        %v317 = vld [vmem:[%s188 + $0x344] sm:$0xff]
        %v318 = vld [vmem:[%s188 + $0x34c] sm:$0xff]
        %v319 = vld [vmem:[%s188 + $0x354] sm:$0xff]
        %v320 = vld [vmem:[%s188 + $0x35c] sm:$0xf]
        %v321 = vld [vmem:[%s188 + $0x360] sm:$0xff]
        %v322 = vld [vmem:[%s188 + $0x368] sm:$0xff]
        %v323 = vld [vmem:[%s188 + $0x370] sm:$0xff]
        %v324 = vld [vmem:[%s188 + $0x378] sm:$0xff]
        %v325 = vld [vmem:[%s188 + $0x380] sm:$0xf]
        %v326 = vld [vmem:[%s188 + $0x384] sm:$0xff]
        %v327 = vld [vmem:[%s188 + $0x38c] sm:$0xff]
        %v328 = vld [vmem:[%s188 + $0x394] sm:$0xff]
        %v329 = vld [vmem:[%s188 + $0x39c] sm:$0xff]
        %v330 = vld [vmem:[%s188 + $0x3a4] sm:$0xf]
        %v331 = vld [vmem:[%s188 + $0x3a8] sm:$0xff]
        %v332 = vld [vmem:[%s188 + $0x3b0] sm:$0xff]
        %v333 = vld [vmem:[%s188 + $0x3b8] sm:$0xff]
        %v334 = vld [vmem:[%s188 + $0x3c0] sm:$0xff]
        %v335 = vld [vmem:[%s188 + $0x3c8] sm:$0xf]
        %v336 = vld [vmem:[%s188 + $0x3cc] sm:$0xff]
        %v337 = vld [vmem:[%s188 + $0x3d4] sm:$0xff]
        %v338 = vld [vmem:[%s188 + $0x3dc] sm:$0xff]
        %v339 = vld [vmem:[%s188 + $0x3e4] sm:$0xff]
        %v340 = vld [vmem:[%s188 + $0x3ec] sm:$0xf]
        %v341 = vld [vmem:[%s188 + $0x3f0] sm:$0xff]
        %v342 = vld [vmem:[%s188 + $0x3f8] sm:$0xff]
        %v343 = vld [vmem:[%s188 + $0x400] sm:$0xff]
        %v344 = vld [vmem:[%s188 + $0x408] sm:$0xff]
        %v345 = vld [vmem:[%s188 + $0x410] sm:$0xf]
        %v346 = vld [vmem:[%s188 + $0x414] sm:$0xff]
        %v347 = vld [vmem:[%s188 + $0x41c] sm:$0xff]
        %v348 = vld [vmem:[%s188 + $0x424] sm:$0xff]
        %v349 = vld [vmem:[%s188 + $0x42c] sm:$0xff]
        %v350 = vld [vmem:[%s188 + $0x434] sm:$0xf]
        %v351 = vld [vmem:[%s188 + $0x438] sm:$0xff]
        %v352 = vld [vmem:[%s188 + $0x440] sm:$0xff]
        %v353 = vld [vmem:[%s188 + $0x448] sm:$0xff]
        %v354 = vld [vmem:[%s188 + $0x450] sm:$0xff]
        %v355 = vld [vmem:[%s188 + $0x458] sm:$0xf]
        %v356 = vld [vmem:[%s188 + $0x45c] sm:$0xff]
        %v357 = vld [vmem:[%s188 + $0x464] sm:$0xff]
        %v358 = vld [vmem:[%s188 + $0x46c] sm:$0xff]
        %v359 = vld [vmem:[%s188 + $0x474] sm:$0xff]
        %v360 = vld [vmem:[%s188 + $0x47c] sm:$0xf]
        %v361 = vld [vmem:[%s1] sm:$0xf]
        %v362 = vld [vmem:[%s1 + $0x4] sm:$0xf]
        %v363 = vld [vmem:[%s1 + $0x8] sm:$0xf]
        %v364 = vld [vmem:[%s1 + $0xc] sm:$0xf]
        %v365 = vld [vmem:[%s1 + $0x10] sm:$0xf]
        %v366 = vld [vmem:[%s1 + $0x14] sm:$0xf]
        %v367 = vld [vmem:[%s1 + $0x18] sm:$0xf]
        %v368 = vld [vmem:[%s1 + $0x1c] sm:$0xf]
        %v369 = vld [vmem:[%s1 + $0x20] sm:$0xf]
        %v370 = vld [vmem:[%s1 + $0x24] sm:$0xf]
        %v371 = vld [vmem:[%s1 + $0x28] sm:$0xf]
        %v372 = vld [vmem:[%s1 + $0x2c] sm:$0xf]
        %v373 = vld [vmem:[%s1 + $0x30] sm:$0xf]
        %v374 = vld [vmem:[%s1 + $0x34] sm:$0xf]
        %v375 = vld [vmem:[%s1 + $0x38] sm:$0xf]
        %v376 = vld [vmem:[%s1 + $0x3c] sm:$0xf]
        %v377 = vld [vmem:[%s1 + $0x40] sm:$0xf]
        %v378 = vld [vmem:[%s1 + $0x44] sm:$0xf]
        %v379 = vld [vmem:[%s1 + $0x48] sm:$0xf]
        %v380 = vld [vmem:[%s1 + $0x4c] sm:$0xf]
        %v381 = vld [vmem:[%s1 + $0x50] sm:$0xf]
        %v382 = vld [vmem:[%s1 + $0x54] sm:$0xf]
        %v383 = vld [vmem:[%s1 + $0x58] sm:$0xf]
        %v384 = vld [vmem:[%s1 + $0x5c] sm:$0xf]
        %v385 = vld [vmem:[%s1 + $0x60] sm:$0xf]
        %v386 = vld [vmem:[%s1 + $0x64] sm:$0xf]
        %v387 = vld [vmem:[%s1 + $0x68] sm:$0xf]
        %v388 = vld [vmem:[%s1 + $0x6c] sm:$0xf]
        %v389 = vld [vmem:[%s1 + $0x70] sm:$0xf]
        %v390 = vld [vmem:[%s1 + $0x74] sm:$0xf]
        %v391 = vld [vmem:[%s1 + $0x78] sm:$0xf]
        %v392 = vld [vmem:[%s1 + $0x7c] sm:$0xf]
        %v393 = vld [vmem:[%s1 + $0x80] sm:$0xf]
        %v394 = vld [vmem:[%s1 + $0x84] sm:$0xf]
        %v395 = vld [vmem:[%s1 + $0x88] sm:$0xf]
        %v396 = vld [vmem:[%s1 + $0x8c] sm:$0xf]
        %v397 = vld [vmem:[%s1 + $0x90] sm:$0xf]
        %v398 = vld [vmem:[%s1 + $0x94] sm:$0xf]
        %v399 = vld [vmem:[%s1 + $0x98] sm:$0xf]
        %v400 = vld [vmem:[%s1 + $0x9c] sm:$0xf]
        %v401 = vld [vmem:[%s1 + $0xa0] sm:$0xf]
        %v402 = vld [vmem:[%s1 + $0xa4] sm:$0xf]
        %v403 = vld [vmem:[%s1 + $0xa8] sm:$0xf]
        %v404 = vld [vmem:[%s1 + $0xac] sm:$0xf]
        %v405 = vld [vmem:[%s1 + $0xb0] sm:$0xf]
        %v406 = vld [vmem:[%s1 + $0xb4] sm:$0xf]
        %v407 = vld [vmem:[%s1 + $0xb8] sm:$0xf]
        %v408 = vld [vmem:[%s1 + $0xbc] sm:$0xf]
        %v409 = vld [vmem:[%s1 + $0xc0] sm:$0xf]
        %v410 = vld [vmem:[%s1 + $0xc4] sm:$0xf]
        %v411 = vld [vmem:[%s1 + $0xc8] sm:$0xf]
        %v412 = vld [vmem:[%s1 + $0xcc] sm:$0xf]
        %v413 = vld [vmem:[%s1 + $0xd0] sm:$0xf]
        %v414 = vld [vmem:[%s1 + $0xd4] sm:$0xf]
        %v415 = vld [vmem:[%s1 + $0xd8] sm:$0xf]
        %v416 = vld [vmem:[%s1 + $0xdc] sm:$0xf]
        %v417 = vld [vmem:[%s1 + $0xe0] sm:$0xf]
        %v418 = vld [vmem:[%s1 + $0xe4] sm:$0xf]
        %v419 = vld [vmem:[%s1 + $0xe8] sm:$0xf]
        %v420 = vld [vmem:[%s1 + $0xec] sm:$0xf]
        %v421 = vld [vmem:[%s1 + $0xf0] sm:$0xf]
        %v422 = vld [vmem:[%s1 + $0xf4] sm:$0xf]
        %v423 = vld [vmem:[%s1 + $0xf8] sm:$0xf]
        %v424 = vld [vmem:[%s1 + $0xfc] sm:$0xf]
        %v425 = vld [vmem:[%s1 + $0x100] sm:$0xf]
        %v426 = vld [vmem:[%s1 + $0x104] sm:$0xf]
        %v427 = vld [vmem:[%s1 + $0x108] sm:$0xf]
        %v428 = vld [vmem:[%s1 + $0x10c] sm:$0xf]
        %v429 = vld [vmem:[%s1 + $0x110] sm:$0xf]
        %v430 = vld [vmem:[%s1 + $0x114] sm:$0xf]
        %v431 = vld [vmem:[%s1 + $0x118] sm:$0xf]
        %v432 = vld [vmem:[%s1 + $0x11c] sm:$0xf]
        %v433 = vld [vmem:[%s1 + $0x120] sm:$0xf]
        %v434 = vld [vmem:[%s1 + $0x124] sm:$0xf]
        %v435 = vld [vmem:[%s1 + $0x128] sm:$0xf]
        %v436 = vld [vmem:[%s1 + $0x12c] sm:$0xf]
        %v437 = vld [vmem:[%s1 + $0x130] sm:$0xf]
        %v438 = vld [vmem:[%s1 + $0x134] sm:$0xf]
        %v439 = vld [vmem:[%s1 + $0x138] sm:$0xf]
        %v440 = vld [vmem:[%s1 + $0x13c] sm:$0xf]
        %v441 = vld [vmem:[%s1 + $0x140] sm:$0xf]
        %v442 = vld [vmem:[%s1 + $0x144] sm:$0xf]
        %v443 = vld [vmem:[%s1 + $0x148] sm:$0xf]
        %v444 = vld [vmem:[%s1 + $0x14c] sm:$0xf]
        %v445 = vld [vmem:[%s1 + $0x150] sm:$0xf]
        %v446 = vld [vmem:[%s1 + $0x154] sm:$0xf]
        %v447 = vld [vmem:[%s1 + $0x158] sm:$0xf]
        %v448 = vld [vmem:[%s1 + $0x15c] sm:$0xf]
        %v449 = vld [vmem:[%s1 + $0x160] sm:$0xf]
        %v450 = vld [vmem:[%s1 + $0x164] sm:$0xf]
        %v451 = vld [vmem:[%s1 + $0x168] sm:$0xf]
        %v452 = vld [vmem:[%s1 + $0x16c] sm:$0xf]
        %v453 = vld [vmem:[%s1 + $0x170] sm:$0xf]
        %v454 = vld [vmem:[%s1 + $0x174] sm:$0xf]
        %v455 = vld [vmem:[%s1 + $0x178] sm:$0xf]
        %v456 = vld [vmem:[%s1 + $0x17c] sm:$0xf]
        %v457 = vld [vmem:[%s1 + $0x180] sm:$0xf]
        %v458 = vld [vmem:[%s1 + $0x184] sm:$0xf]
        %v459 = vld [vmem:[%s1 + $0x188] sm:$0xf]
        %v460 = vld [vmem:[%s1 + $0x18c] sm:$0xf]
        %v461 = vld [vmem:[%s1 + $0x190] sm:$0xf]
        %v462 = vld [vmem:[%s1 + $0x194] sm:$0xf]
        %v463 = vld [vmem:[%s1 + $0x198] sm:$0xf]
        %v464 = vld [vmem:[%s1 + $0x19c] sm:$0xf]
        %v465 = vld [vmem:[%s1 + $0x1a0] sm:$0xf]
        %v466 = vld [vmem:[%s1 + $0x1a4] sm:$0xf]
        %v467 = vld [vmem:[%s1 + $0x1a8] sm:$0xf]
        %v468 = vld [vmem:[%s1 + $0x1ac] sm:$0xf]
        %v469 = vld [vmem:[%s1 + $0x1b0] sm:$0xf]
        %v470 = vld [vmem:[%s1 + $0x1b4] sm:$0xf]
        %v471 = vld [vmem:[%s1 + $0x1b8] sm:$0xf]
        %v472 = vld [vmem:[%s1 + $0x1bc] sm:$0xf]
        %v473 = vld [vmem:[%s1 + $0x1c0] sm:$0xf]
        %v474 = vld [vmem:[%s1 + $0x1c4] sm:$0xf]
        %v475 = vld [vmem:[%s1 + $0x1c8] sm:$0xf]
        %v476 = vld [vmem:[%s1 + $0x1cc] sm:$0xf]
        %v477 = vld [vmem:[%s1 + $0x1d0] sm:$0xf]
        %v478 = vld [vmem:[%s1 + $0x1d4] sm:$0xf]
        %v479 = vld [vmem:[%s1 + $0x1d8] sm:$0xf]
        %v480 = vld [vmem:[%s1 + $0x1dc] sm:$0xf]
        %v481 = vld [vmem:[%s1 + $0x1e0] sm:$0xf]
        %v482 = vld [vmem:[%s1 + $0x1e4] sm:$0xf]
        %v483 = vld [vmem:[%s1 + $0x1e8] sm:$0xf]
        %v484 = vld [vmem:[%s1 + $0x1ec] sm:$0xf]
        %v485 = vld [vmem:[%s1 + $0x1f0] sm:$0xf]
        %v486 = vld [vmem:[%s1 + $0x1f4] sm:$0xf]
        %v487 = vld [vmem:[%s1 + $0x1f8] sm:$0xf]
        %v488 = vld [vmem:[%s1 + $0x1fc] sm:$0xf]
        %v489 = vld [vmem:[%s1 + $0x200] sm:$0xf]
        %v490 = vld [vmem:[%s1 + $0x204] sm:$0xf]
        %v491 = vld [vmem:[%s1 + $0x208] sm:$0xf]
        %v492 = vld [vmem:[%s1 + $0x20c] sm:$0xf]
        %v493 = vld [vmem:[%s1 + $0x210] sm:$0xf]
        %v494 = vld [vmem:[%s1 + $0x214] sm:$0xf]
        %v495 = vld [vmem:[%s1 + $0x218] sm:$0xf]
        %v496 = vld [vmem:[%s1 + $0x21c] sm:$0xf]
        %v497 = vld [vmem:[%s1 + $0x220] sm:$0xf]
        %v498 = vld [vmem:[%s1 + $0x224] sm:$0xf]
        %v499 = vld [vmem:[%s1 + $0x228] sm:$0xf]
        %v500 = vld [vmem:[%s1 + $0x22c] sm:$0xf]
        %v501 = vld [vmem:[%s1 + $0x230] sm:$0xf]
        %v502 = vld [vmem:[%s1 + $0x234] sm:$0xf]
        %v503 = vld [vmem:[%s1 + $0x238] sm:$0xf]
        %v504 = vld [vmem:[%s1 + $0x23c] sm:$0xf]
        %v505 = vld [vmem:[%s2] sm:$0x1]
        %v507 = vlaneseq
        %v508 = vshrl.u32 %v507, 7
        %v509 = vsub.s32 0, %v508
        %v510 = vrot.slane %v505, %v509
        %v672 = vunpack.c.l.b16 %v201
        %v673 = vunpack.c.h.b16 %v201
        %v674 = vunpack.c.l.b16 %v202
        %v675 = vunpack.c.h.b16 %v202
        %v676 = vunpack.c.l.b16 %v203
        %v677 = vunpack.c.h.b16 %v203
        %v678 = vunpack.c.l.b16 %v204
        %v679 = vunpack.c.h.b16 %v204
        %v680 = vunpack.c.l.b16 %v205
        %v681 = vunpack.c.l.b16 %v206
        %v682 = vunpack.c.h.b16 %v206
        %v683 = vunpack.c.l.b16 %v207
        %v684 = vunpack.c.h.b16 %v207
        %v685 = vunpack.c.l.b16 %v208
        %v686 = vunpack.c.h.b16 %v208
        %v687 = vunpack.c.l.b16 %v209
        %v688 = vunpack.c.h.b16 %v209
        %v689 = vunpack.c.l.b16 %v210
        %v690 = vunpack.c.l.b16 %v211
        %v691 = vunpack.c.h.b16 %v211
        %v692 = vunpack.c.l.b16 %v212
        %v693 = vunpack.c.h.b16 %v212
        %v694 = vunpack.c.l.b16 %v213
        %v695 = vunpack.c.h.b16 %v213
        %v696 = vunpack.c.l.b16 %v214
        %v697 = vunpack.c.h.b16 %v214
        %v698 = vunpack.c.l.b16 %v215
        %v699 = vunpack.c.l.b16 %v216
        %v700 = vunpack.c.h.b16 %v216
        %v701 = vunpack.c.l.b16 %v217
        %v702 = vunpack.c.h.b16 %v217
        %v703 = vunpack.c.l.b16 %v218
        %v704 = vunpack.c.h.b16 %v218
        %v705 = vunpack.c.l.b16 %v219
        %v706 = vunpack.c.h.b16 %v219
        %v707 = vunpack.c.l.b16 %v220
        %v708 = vunpack.c.l.b16 %v221
        %v709 = vunpack.c.h.b16 %v221
        %v710 = vunpack.c.l.b16 %v222
        %v711 = vunpack.c.h.b16 %v222
        %v712 = vunpack.c.l.b16 %v223
        %v713 = vunpack.c.h.b16 %v223
        %v714 = vunpack.c.l.b16 %v224
        %v715 = vunpack.c.h.b16 %v224
        %v716 = vunpack.c.l.b16 %v225
        %v717 = vunpack.c.l.b16 %v226
        %v718 = vunpack.c.h.b16 %v226
        %v719 = vunpack.c.l.b16 %v227
        %v720 = vunpack.c.h.b16 %v227
        %v721 = vunpack.c.l.b16 %v228
        %v722 = vunpack.c.h.b16 %v228
        %v723 = vunpack.c.l.b16 %v229
        %v724 = vunpack.c.h.b16 %v229
        %v725 = vunpack.c.l.b16 %v230
        %v726 = vunpack.c.l.b16 %v231
        %v727 = vunpack.c.h.b16 %v231
        %v728 = vunpack.c.l.b16 %v232
        %v729 = vunpack.c.h.b16 %v232
        %v730 = vunpack.c.l.b16 %v233
        %v731 = vunpack.c.h.b16 %v233
        %v732 = vunpack.c.l.b16 %v234
        %v733 = vunpack.c.h.b16 %v234
        %v734 = vunpack.c.l.b16 %v235
        %v735 = vunpack.c.l.b16 %v236
        %v736 = vunpack.c.h.b16 %v236
        %v737 = vunpack.c.l.b16 %v237
        %v738 = vunpack.c.h.b16 %v237
        %v739 = vunpack.c.l.b16 %v238
        %v740 = vunpack.c.h.b16 %v238
        %v741 = vunpack.c.l.b16 %v239
        %v742 = vunpack.c.h.b16 %v239
        %v743 = vunpack.c.l.b16 %v240
        %v744 = vunpack.c.l.b16 %v241
        %v745 = vunpack.c.h.b16 %v241
        %v746 = vunpack.c.l.b16 %v242
        %v747 = vunpack.c.h.b16 %v242
        %v748 = vunpack.c.l.b16 %v243
        %v749 = vunpack.c.h.b16 %v243
        %v750 = vunpack.c.l.b16 %v244
        %v751 = vunpack.c.h.b16 %v244
        %v752 = vunpack.c.l.b16 %v245
        %v753 = vunpack.c.l.b16 %v246
        %v754 = vunpack.c.h.b16 %v246
        %v755 = vunpack.c.l.b16 %v247
        %v756 = vunpack.c.h.b16 %v247
        %v757 = vunpack.c.l.b16 %v248
        %v758 = vunpack.c.h.b16 %v248
        %v759 = vunpack.c.l.b16 %v249
        %v760 = vunpack.c.h.b16 %v249
        %v761 = vunpack.c.l.b16 %v250
        %v762 = vunpack.c.l.b16 %v251
        %v763 = vunpack.c.h.b16 %v251
        %v764 = vunpack.c.l.b16 %v252
        %v765 = vunpack.c.h.b16 %v252
        %v766 = vunpack.c.l.b16 %v253
        %v767 = vunpack.c.h.b16 %v253
        %v768 = vunpack.c.l.b16 %v254
        %v769 = vunpack.c.h.b16 %v254
        %v770 = vunpack.c.l.b16 %v255
        %v771 = vunpack.c.l.b16 %v256
        %v772 = vunpack.c.h.b16 %v256
        %v773 = vunpack.c.l.b16 %v257
        %v774 = vunpack.c.h.b16 %v257
        %v775 = vunpack.c.l.b16 %v258
        %v776 = vunpack.c.h.b16 %v258
        %v777 = vunpack.c.l.b16 %v259
        %v778 = vunpack.c.h.b16 %v259
        %v779 = vunpack.c.l.b16 %v260
        %v780 = vunpack.c.l.b16 %v261
        %v781 = vunpack.c.h.b16 %v261
        %v782 = vunpack.c.l.b16 %v262
        %v783 = vunpack.c.h.b16 %v262
        %v784 = vunpack.c.l.b16 %v263
        %v785 = vunpack.c.h.b16 %v263
        %v786 = vunpack.c.l.b16 %v264
        %v787 = vunpack.c.h.b16 %v264
        %v788 = vunpack.c.l.b16 %v265
        %v789 = vunpack.c.l.b16 %v266
        %v790 = vunpack.c.h.b16 %v266
        %v791 = vunpack.c.l.b16 %v267
        %v792 = vunpack.c.h.b16 %v267
        %v793 = vunpack.c.l.b16 %v268
        %v794 = vunpack.c.h.b16 %v268
        %v795 = vunpack.c.l.b16 %v269
        %v796 = vunpack.c.h.b16 %v269
        %v797 = vunpack.c.l.b16 %v270
        %v798 = vunpack.c.l.b16 %v271
        %v799 = vunpack.c.h.b16 %v271
        %v800 = vunpack.c.l.b16 %v272
        %v801 = vunpack.c.h.b16 %v272
        %v802 = vunpack.c.l.b16 %v273
        %v803 = vunpack.c.h.b16 %v273
        %v804 = vunpack.c.l.b16 %v274
        %v805 = vunpack.c.h.b16 %v274
        %v806 = vunpack.c.l.b16 %v275
        %v807 = vunpack.c.l.b16 %v276
        %v808 = vunpack.c.h.b16 %v276
        %v809 = vunpack.c.l.b16 %v277
        %v810 = vunpack.c.h.b16 %v277
        %v811 = vunpack.c.l.b16 %v278
        %v812 = vunpack.c.h.b16 %v278
        %v813 = vunpack.c.l.b16 %v279
        %v814 = vunpack.c.h.b16 %v279
        %v815 = vunpack.c.l.b16 %v280
        %v816 = vunpack.c.l.b16 %v281
        %v817 = vunpack.c.h.b16 %v281
        %v818 = vunpack.c.l.b16 %v282
        %v819 = vunpack.c.h.b16 %v282
        %v820 = vunpack.c.l.b16 %v283
        %v821 = vunpack.c.h.b16 %v283
        %v822 = vunpack.c.l.b16 %v284
        %v823 = vunpack.c.h.b16 %v284
        %v824 = vunpack.c.l.b16 %v285
        %v825 = vunpack.c.l.b16 %v286
        %v826 = vunpack.c.h.b16 %v286
        %v827 = vunpack.c.l.b16 %v287
        %v828 = vunpack.c.h.b16 %v287
        %v829 = vunpack.c.l.b16 %v288
        %v830 = vunpack.c.h.b16 %v288
        %v831 = vunpack.c.l.b16 %v289
        %v832 = vunpack.c.h.b16 %v289
        %v833 = vunpack.c.l.b16 %v290
        %v834 = vunpack.c.l.b16 %v291
        %v835 = vunpack.c.h.b16 %v291
        %v836 = vunpack.c.l.b16 %v292
        %v837 = vunpack.c.h.b16 %v292
        %v838 = vunpack.c.l.b16 %v293
        %v839 = vunpack.c.h.b16 %v293
        %v840 = vunpack.c.l.b16 %v294
        %v841 = vunpack.c.h.b16 %v294
        %v842 = vunpack.c.l.b16 %v295
        %v843 = vunpack.c.l.b16 %v296
        %v844 = vunpack.c.h.b16 %v296
        %v845 = vunpack.c.l.b16 %v297
        %v846 = vunpack.c.h.b16 %v297
        %v847 = vunpack.c.l.b16 %v298
        %v848 = vunpack.c.h.b16 %v298
        %v849 = vunpack.c.l.b16 %v299
        %v850 = vunpack.c.h.b16 %v299
        %v851 = vunpack.c.l.b16 %v300
        %v852 = vunpack.c.l.b16 %v301
        %v853 = vunpack.c.h.b16 %v301
        %v854 = vunpack.c.l.b16 %v302
        %v855 = vunpack.c.h.b16 %v302
        %v856 = vunpack.c.l.b16 %v303
        %v857 = vunpack.c.h.b16 %v303
        %v858 = vunpack.c.l.b16 %v304
        %v859 = vunpack.c.h.b16 %v304
        %v860 = vunpack.c.l.b16 %v305
        %v861 = vunpack.c.l.b16 %v306
        %v862 = vunpack.c.h.b16 %v306
        %v863 = vunpack.c.l.b16 %v307
        %v864 = vunpack.c.h.b16 %v307
        %v865 = vunpack.c.l.b16 %v308
        %v866 = vunpack.c.h.b16 %v308
        %v867 = vunpack.c.l.b16 %v309
        %v868 = vunpack.c.h.b16 %v309
        %v869 = vunpack.c.l.b16 %v310
        %v870 = vunpack.c.l.b16 %v311
        %v871 = vunpack.c.h.b16 %v311
        %v872 = vunpack.c.l.b16 %v312
        %v873 = vunpack.c.h.b16 %v312
        %v874 = vunpack.c.l.b16 %v313
        %v875 = vunpack.c.h.b16 %v313
        %v876 = vunpack.c.l.b16 %v314
        %v877 = vunpack.c.h.b16 %v314
        %v878 = vunpack.c.l.b16 %v315
        %v879 = vunpack.c.l.b16 %v316
        %v880 = vunpack.c.h.b16 %v316
        %v881 = vunpack.c.l.b16 %v317
        %v882 = vunpack.c.h.b16 %v317
        %v883 = vunpack.c.l.b16 %v318
        %v884 = vunpack.c.h.b16 %v318
        %v885 = vunpack.c.l.b16 %v319
        %v886 = vunpack.c.h.b16 %v319
        %v887 = vunpack.c.l.b16 %v320
        %v888 = vunpack.c.l.b16 %v321
        %v889 = vunpack.c.h.b16 %v321
        %v890 = vunpack.c.l.b16 %v322
        %v891 = vunpack.c.h.b16 %v322
        %v892 = vunpack.c.l.b16 %v323
        %v893 = vunpack.c.h.b16 %v323
        %v894 = vunpack.c.l.b16 %v324
        %v895 = vunpack.c.h.b16 %v324
        %v896 = vunpack.c.l.b16 %v325
        %v897 = vunpack.c.l.b16 %v326
        %v898 = vunpack.c.h.b16 %v326
        %v899 = vunpack.c.l.b16 %v327
        %v900 = vunpack.c.h.b16 %v327
        %v901 = vunpack.c.l.b16 %v328
        %v902 = vunpack.c.h.b16 %v328
        %v903 = vunpack.c.l.b16 %v329
        %v904 = vunpack.c.h.b16 %v329
        %v905 = vunpack.c.l.b16 %v330
        %v906 = vunpack.c.l.b16 %v331
        %v907 = vunpack.c.h.b16 %v331
        %v908 = vunpack.c.l.b16 %v332
        %v909 = vunpack.c.h.b16 %v332
        %v910 = vunpack.c.l.b16 %v333
        %v911 = vunpack.c.h.b16 %v333
        %v912 = vunpack.c.l.b16 %v334
        %v913 = vunpack.c.h.b16 %v334
        %v914 = vunpack.c.l.b16 %v335
        %v915 = vunpack.c.l.b16 %v336
        %v916 = vunpack.c.h.b16 %v336
        %v917 = vunpack.c.l.b16 %v337
        %v918 = vunpack.c.h.b16 %v337
        %v919 = vunpack.c.l.b16 %v338
        %v920 = vunpack.c.h.b16 %v338
        %v921 = vunpack.c.l.b16 %v339
        %v922 = vunpack.c.h.b16 %v339
        %v923 = vunpack.c.l.b16 %v340
        %v924 = vunpack.c.l.b16 %v341
        %v925 = vunpack.c.h.b16 %v341
        %v926 = vunpack.c.l.b16 %v342
        %v927 = vunpack.c.h.b16 %v342
        %v928 = vunpack.c.l.b16 %v343
        %v929 = vunpack.c.h.b16 %v343
        %v930 = vunpack.c.l.b16 %v344
        %v931 = vunpack.c.h.b16 %v344
        %v932 = vunpack.c.l.b16 %v345
        %v933 = vunpack.c.l.b16 %v346
        %v934 = vunpack.c.h.b16 %v346
        %v935 = vunpack.c.l.b16 %v347
        %v936 = vunpack.c.h.b16 %v347
        %v937 = vunpack.c.l.b16 %v348
        %v938 = vunpack.c.h.b16 %v348
        %v939 = vunpack.c.l.b16 %v349
        %v940 = vunpack.c.h.b16 %v349
        %v941 = vunpack.c.l.b16 %v350
        %v942 = vunpack.c.l.b16 %v351
        %v943 = vunpack.c.h.b16 %v351
        %v944 = vunpack.c.l.b16 %v352
        %v945 = vunpack.c.h.b16 %v352
        %v946 = vunpack.c.l.b16 %v353
        %v947 = vunpack.c.h.b16 %v353
        %v948 = vunpack.c.l.b16 %v354
        %v949 = vunpack.c.h.b16 %v354
        %v950 = vunpack.c.l.b16 %v355
        %v951 = vunpack.c.l.b16 %v356
        %v952 = vunpack.c.h.b16 %v356
        %v953 = vunpack.c.l.b16 %v357
        %v954 = vunpack.c.h.b16 %v357
        %v955 = vunpack.c.l.b16 %v358
        %v956 = vunpack.c.h.b16 %v358
        %v957 = vunpack.c.l.b16 %v359
        %v958 = vunpack.c.h.b16 %v359
        %v959 = vunpack.c.l.b16 %v360
        %v960 = vpack.c.b16 %v681, %v672
        %v961 = vpack.c.b16 %v682, %v673
        %v962 = vpack.c.b16 %v683, %v674
        %v963 = vpack.c.b16 %v684, %v675
        %v964 = vpack.c.b16 %v685, %v676
        %v965 = vpack.c.b16 %v686, %v677
        %v966 = vpack.c.b16 %v687, %v678
        %v967 = vpack.c.b16 %v688, %v679
        %v968 = vpack.c.b16 %v689, %v680
        %v969 = vpack.c.b16 %v699, %v690
        %v970 = vpack.c.b16 %v700, %v691
        %v971 = vpack.c.b16 %v701, %v692
        %v972 = vpack.c.b16 %v702, %v693
        %v973 = vpack.c.b16 %v703, %v694
        %v974 = vpack.c.b16 %v704, %v695
        %v975 = vpack.c.b16 %v705, %v696
        %v976 = vpack.c.b16 %v706, %v697
        %v977 = vpack.c.b16 %v707, %v698
        %v978 = vpack.c.b16 %v717, %v708
        %v979 = vpack.c.b16 %v718, %v709
        %v980 = vpack.c.b16 %v719, %v710
        %v981 = vpack.c.b16 %v720, %v711
        %v982 = vpack.c.b16 %v721, %v712
        %v983 = vpack.c.b16 %v722, %v713
        %v984 = vpack.c.b16 %v723, %v714
        %v985 = vpack.c.b16 %v724, %v715
        %v986 = vpack.c.b16 %v725, %v716
        %v987 = vpack.c.b16 %v735, %v726
        %v988 = vpack.c.b16 %v736, %v727
        %v989 = vpack.c.b16 %v737, %v728
        %v990 = vpack.c.b16 %v738, %v729
        %v991 = vpack.c.b16 %v739, %v730
        %v992 = vpack.c.b16 %v740, %v731
        %v993 = vpack.c.b16 %v741, %v732
        %v994 = vpack.c.b16 %v742, %v733
        %v995 = vpack.c.b16 %v743, %v734
        %v996 = vpack.c.b16 %v753, %v744
        %v997 = vpack.c.b16 %v754, %v745
        %v998 = vpack.c.b16 %v755, %v746
        %v999 = vpack.c.b16 %v756, %v747
        %v1000 = vpack.c.b16 %v757, %v748
        %v1001 = vpack.c.b16 %v758, %v749
        %v1002 = vpack.c.b16 %v759, %v750
        %v1003 = vpack.c.b16 %v760, %v751
        %v1004 = vpack.c.b16 %v761, %v752
        %v1005 = vpack.c.b16 %v771, %v762
        %v1006 = vpack.c.b16 %v772, %v763
        %v1007 = vpack.c.b16 %v773, %v764
        %v1008 = vpack.c.b16 %v774, %v765
        %v1009 = vpack.c.b16 %v775, %v766
        %v1010 = vpack.c.b16 %v776, %v767
        %v1011 = vpack.c.b16 %v777, %v768
        %v1012 = vpack.c.b16 %v778, %v769
        %v1013 = vpack.c.b16 %v779, %v770
        %v1014 = vpack.c.b16 %v789, %v780
        %v1015 = vpack.c.b16 %v790, %v781
        %v1016 = vpack.c.b16 %v791, %v782
        %v1017 = vpack.c.b16 %v792, %v783
        %v1018 = vpack.c.b16 %v793, %v784
        %v1019 = vpack.c.b16 %v794, %v785
        %v1020 = vpack.c.b16 %v795, %v786
        %v1021 = vpack.c.b16 %v796, %v787
        %v1022 = vpack.c.b16 %v797, %v788
        %v1023 = vpack.c.b16 %v807, %v798
        %v1024 = vpack.c.b16 %v808, %v799
        %v1025 = vpack.c.b16 %v809, %v800
        %v1026 = vpack.c.b16 %v810, %v801
        %v1027 = vpack.c.b16 %v811, %v802
        %v1028 = vpack.c.b16 %v812, %v803
        %v1029 = vpack.c.b16 %v813, %v804
        %v1030 = vpack.c.b16 %v814, %v805
        %v1031 = vpack.c.b16 %v815, %v806
        %v1032 = vpack.c.b16 %v825, %v816
        %v1033 = vpack.c.b16 %v826, %v817
        %v1034 = vpack.c.b16 %v827, %v818
        %v1035 = vpack.c.b16 %v828, %v819
        %v1036 = vpack.c.b16 %v829, %v820
        %v1037 = vpack.c.b16 %v830, %v821
        %v1038 = vpack.c.b16 %v831, %v822
        %v1039 = vpack.c.b16 %v832, %v823
        %v1040 = vpack.c.b16 %v833, %v824
        %v1041 = vpack.c.b16 %v843, %v834
        %v1042 = vpack.c.b16 %v844, %v835
        %v1043 = vpack.c.b16 %v845, %v836
        %v1044 = vpack.c.b16 %v846, %v837
        %v1045 = vpack.c.b16 %v847, %v838
        %v1046 = vpack.c.b16 %v848, %v839
        %v1047 = vpack.c.b16 %v849, %v840
        %v1048 = vpack.c.b16 %v850, %v841
        %v1049 = vpack.c.b16 %v851, %v842
        %v1050 = vpack.c.b16 %v861, %v852
        %v1051 = vpack.c.b16 %v862, %v853
        %v1052 = vpack.c.b16 %v863, %v854
        %v1053 = vpack.c.b16 %v864, %v855
        %v1054 = vpack.c.b16 %v865, %v856
        %v1055 = vpack.c.b16 %v866, %v857
        %v1056 = vpack.c.b16 %v867, %v858
        %v1057 = vpack.c.b16 %v868, %v859
        %v1058 = vpack.c.b16 %v869, %v860
        %v1059 = vpack.c.b16 %v879, %v870
        %v1060 = vpack.c.b16 %v880, %v871
        %v1061 = vpack.c.b16 %v881, %v872
        %v1062 = vpack.c.b16 %v882, %v873
        %v1063 = vpack.c.b16 %v883, %v874
        %v1064 = vpack.c.b16 %v884, %v875
        %v1065 = vpack.c.b16 %v885, %v876
        %v1066 = vpack.c.b16 %v886, %v877
        %v1067 = vpack.c.b16 %v887, %v878
        %v1068 = vpack.c.b16 %v897, %v888
        %v1069 = vpack.c.b16 %v898, %v889
        %v1070 = vpack.c.b16 %v899, %v890
        %v1071 = vpack.c.b16 %v900, %v891
        %v1072 = vpack.c.b16 %v901, %v892
        %v1073 = vpack.c.b16 %v902, %v893
        %v1074 = vpack.c.b16 %v903, %v894
        %v1075 = vpack.c.b16 %v904, %v895
        %v1076 = vpack.c.b16 %v905, %v896
        %v1077 = vpack.c.b16 %v915, %v906
        %v1078 = vpack.c.b16 %v916, %v907
        %v1079 = vpack.c.b16 %v917, %v908
        %v1080 = vpack.c.b16 %v918, %v909
        %v1081 = vpack.c.b16 %v919, %v910
        %v1082 = vpack.c.b16 %v920, %v911
        %v1083 = vpack.c.b16 %v921, %v912
        %v1084 = vpack.c.b16 %v922, %v913
        %v1085 = vpack.c.b16 %v923, %v914
        %v1086 = vpack.c.b16 %v933, %v924
        %v1087 = vpack.c.b16 %v934, %v925
        %v1088 = vpack.c.b16 %v935, %v926
        %v1089 = vpack.c.b16 %v936, %v927
        %v1090 = vpack.c.b16 %v937, %v928
        %v1091 = vpack.c.b16 %v938, %v929
        %v1092 = vpack.c.b16 %v939, %v930
        %v1093 = vpack.c.b16 %v940, %v931
        %v1094 = vpack.c.b16 %v941, %v932
        %v1095 = vpack.c.b16 %v951, %v942
        %v1096 = vpack.c.b16 %v952, %v943
        %v1097 = vpack.c.b16 %v953, %v944
        %v1098 = vpack.c.b16 %v954, %v945
        %v1099 = vpack.c.b16 %v955, %v946
        %v1100 = vpack.c.b16 %v956, %v947
        %v1101 = vpack.c.b16 %v957, %v948
        %v1102 = vpack.c.b16 %v958, %v949
        %v1103 = vpack.c.b16 %v959, %v950
        %v1392 = vunpack.c.l.b16 %v361
        %v1393 = vunpack.c.l.b16 %v362
        %v1394 = vunpack.c.l.b16 %v363
        %v1395 = vunpack.c.l.b16 %v364
        %v1396 = vunpack.c.l.b16 %v365
        %v1397 = vunpack.c.l.b16 %v366
        %v1398 = vunpack.c.l.b16 %v367
        %v1399 = vunpack.c.l.b16 %v368
        %v1400 = vunpack.c.l.b16 %v369
        %v1401 = vunpack.c.l.b16 %v370
        %v1402 = vunpack.c.l.b16 %v371
        %v1403 = vunpack.c.l.b16 %v372
        %v1404 = vunpack.c.l.b16 %v373
        %v1405 = vunpack.c.l.b16 %v374
        %v1406 = vunpack.c.l.b16 %v375
        %v1407 = vunpack.c.l.b16 %v376
        %v1408 = vunpack.c.l.b16 %v377
        %v1409 = vunpack.c.l.b16 %v378
        %v1410 = vunpack.c.l.b16 %v379
        %v1411 = vunpack.c.l.b16 %v380
        %v1412 = vunpack.c.l.b16 %v381
        %v1413 = vunpack.c.l.b16 %v382
        %v1414 = vunpack.c.l.b16 %v383
        %v1415 = vunpack.c.l.b16 %v384
        %v1416 = vunpack.c.l.b16 %v385
        %v1417 = vunpack.c.l.b16 %v386
        %v1418 = vunpack.c.l.b16 %v387
        %v1419 = vunpack.c.l.b16 %v388
        %v1420 = vunpack.c.l.b16 %v389
        %v1421 = vunpack.c.l.b16 %v390
        %v1422 = vunpack.c.l.b16 %v391
        %v1423 = vunpack.c.l.b16 %v392
        %v1424 = vunpack.c.l.b16 %v393
        %v1425 = vunpack.c.l.b16 %v394
        %v1426 = vunpack.c.l.b16 %v395
        %v1427 = vunpack.c.l.b16 %v396
        %v1428 = vunpack.c.l.b16 %v397
        %v1429 = vunpack.c.l.b16 %v398
        %v1430 = vunpack.c.l.b16 %v399
        %v1431 = vunpack.c.l.b16 %v400
        %v1432 = vunpack.c.l.b16 %v401
        %v1433 = vunpack.c.l.b16 %v402
        %v1434 = vunpack.c.l.b16 %v403
        %v1435 = vunpack.c.l.b16 %v404
        %v1436 = vunpack.c.l.b16 %v405
        %v1437 = vunpack.c.l.b16 %v406
        %v1438 = vunpack.c.l.b16 %v407
        %v1439 = vunpack.c.l.b16 %v408
        %v1440 = vunpack.c.l.b16 %v409
        %v1441 = vunpack.c.l.b16 %v410
        %v1442 = vunpack.c.l.b16 %v411
        %v1443 = vunpack.c.l.b16 %v412
        %v1444 = vunpack.c.l.b16 %v413
        %v1445 = vunpack.c.l.b16 %v414
        %v1446 = vunpack.c.l.b16 %v415
        %v1447 = vunpack.c.l.b16 %v416
        %v1448 = vunpack.c.l.b16 %v417
        %v1449 = vunpack.c.l.b16 %v418
        %v1450 = vunpack.c.l.b16 %v419
        %v1451 = vunpack.c.l.b16 %v420
        %v1452 = vunpack.c.l.b16 %v421
        %v1453 = vunpack.c.l.b16 %v422
        %v1454 = vunpack.c.l.b16 %v423
        %v1455 = vunpack.c.l.b16 %v424
        %v1456 = vunpack.c.l.b16 %v425
        %v1457 = vunpack.c.l.b16 %v426
        %v1458 = vunpack.c.l.b16 %v427
        %v1459 = vunpack.c.l.b16 %v428
        %v1460 = vunpack.c.l.b16 %v429
        %v1461 = vunpack.c.l.b16 %v430
        %v1462 = vunpack.c.l.b16 %v431
        %v1463 = vunpack.c.l.b16 %v432
        %v1464 = vunpack.c.l.b16 %v433
        %v1465 = vunpack.c.l.b16 %v434
        %v1466 = vunpack.c.l.b16 %v435
        %v1467 = vunpack.c.l.b16 %v436
        %v1468 = vunpack.c.l.b16 %v437
        %v1469 = vunpack.c.l.b16 %v438
        %v1470 = vunpack.c.l.b16 %v439
        %v1471 = vunpack.c.l.b16 %v440
        %v1472 = vunpack.c.l.b16 %v441
        %v1473 = vunpack.c.l.b16 %v442
        %v1474 = vunpack.c.l.b16 %v443
        %v1475 = vunpack.c.l.b16 %v444
        %v1476 = vunpack.c.l.b16 %v445
        %v1477 = vunpack.c.l.b16 %v446
        %v1478 = vunpack.c.l.b16 %v447
        %v1479 = vunpack.c.l.b16 %v448
        %v1480 = vunpack.c.l.b16 %v449
        %v1481 = vunpack.c.l.b16 %v450
        %v1482 = vunpack.c.l.b16 %v451
        %v1483 = vunpack.c.l.b16 %v452
        %v1484 = vunpack.c.l.b16 %v453
        %v1485 = vunpack.c.l.b16 %v454
        %v1486 = vunpack.c.l.b16 %v455
        %v1487 = vunpack.c.l.b16 %v456
        %v1488 = vunpack.c.l.b16 %v457
        %v1489 = vunpack.c.l.b16 %v458
        %v1490 = vunpack.c.l.b16 %v459
        %v1491 = vunpack.c.l.b16 %v460
        %v1492 = vunpack.c.l.b16 %v461
        %v1493 = vunpack.c.l.b16 %v462
        %v1494 = vunpack.c.l.b16 %v463
        %v1495 = vunpack.c.l.b16 %v464
        %v1496 = vunpack.c.l.b16 %v465
        %v1497 = vunpack.c.l.b16 %v466
        %v1498 = vunpack.c.l.b16 %v467
        %v1499 = vunpack.c.l.b16 %v468
        %v1500 = vunpack.c.l.b16 %v469
        %v1501 = vunpack.c.l.b16 %v470
        %v1502 = vunpack.c.l.b16 %v471
        %v1503 = vunpack.c.l.b16 %v472
        %v1504 = vunpack.c.l.b16 %v473
        %v1505 = vunpack.c.l.b16 %v474
        %v1506 = vunpack.c.l.b16 %v475
        %v1507 = vunpack.c.l.b16 %v476
        %v1508 = vunpack.c.l.b16 %v477
        %v1509 = vunpack.c.l.b16 %v478
        %v1510 = vunpack.c.l.b16 %v479
        %v1511 = vunpack.c.l.b16 %v480
        %v1512 = vunpack.c.l.b16 %v481
        %v1513 = vunpack.c.l.b16 %v482
        %v1514 = vunpack.c.l.b16 %v483
        %v1515 = vunpack.c.l.b16 %v484
        %v1516 = vunpack.c.l.b16 %v485
        %v1517 = vunpack.c.l.b16 %v486
        %v1518 = vunpack.c.l.b16 %v487
        %v1519 = vunpack.c.l.b16 %v488
        %v1520 = vunpack.c.l.b16 %v489
        %v1521 = vunpack.c.l.b16 %v490
        %v1522 = vunpack.c.l.b16 %v491
        %v1523 = vunpack.c.l.b16 %v492
        %v1524 = vunpack.c.l.b16 %v493
        %v1525 = vunpack.c.l.b16 %v494
        %v1526 = vunpack.c.l.b16 %v495
        %v1527 = vunpack.c.l.b16 %v496
        %v1528 = vunpack.c.l.b16 %v497
        %v1529 = vunpack.c.l.b16 %v498
        %v1530 = vunpack.c.l.b16 %v499
        %v1531 = vunpack.c.l.b16 %v500
        %v1532 = vunpack.c.l.b16 %v501
        %v1533 = vunpack.c.l.b16 %v502
        %v1534 = vunpack.c.l.b16 %v503
        %v1535 = vunpack.c.l.b16 %v504
        %v1536 = vpack.c.b16 %v1393, %v1392
        %v1537 = vpack.c.b16 %v1395, %v1394
        %v1538 = vpack.c.b16 %v1397, %v1396
        %v1539 = vpack.c.b16 %v1399, %v1398
        %v1540 = vpack.c.b16 %v1401, %v1400
        %v1541 = vpack.c.b16 %v1403, %v1402
        %v1542 = vpack.c.b16 %v1405, %v1404
        %v1543 = vpack.c.b16 %v1407, %v1406
        %v1544 = vpack.c.b16 %v1409, %v1408
        %v1545 = vpack.c.b16 %v1411, %v1410
        %v1546 = vpack.c.b16 %v1413, %v1412
        %v1547 = vpack.c.b16 %v1415, %v1414
        %v1548 = vpack.c.b16 %v1417, %v1416
        %v1549 = vpack.c.b16 %v1419, %v1418
        %v1550 = vpack.c.b16 %v1421, %v1420
        %v1551 = vpack.c.b16 %v1423, %v1422
        %v1552 = vpack.c.b16 %v1425, %v1424
        %v1553 = vpack.c.b16 %v1427, %v1426
        %v1554 = vpack.c.b16 %v1429, %v1428
        %v1555 = vpack.c.b16 %v1431, %v1430
        %v1556 = vpack.c.b16 %v1433, %v1432
        %v1557 = vpack.c.b16 %v1435, %v1434
        %v1558 = vpack.c.b16 %v1437, %v1436
        %v1559 = vpack.c.b16 %v1439, %v1438
        %v1560 = vpack.c.b16 %v1441, %v1440
        %v1561 = vpack.c.b16 %v1443, %v1442
        %v1562 = vpack.c.b16 %v1445, %v1444
        %v1563 = vpack.c.b16 %v1447, %v1446
        %v1564 = vpack.c.b16 %v1449, %v1448
        %v1565 = vpack.c.b16 %v1451, %v1450
        %v1566 = vpack.c.b16 %v1453, %v1452
        %v1567 = vpack.c.b16 %v1455, %v1454
        %v1568 = vpack.c.b16 %v1457, %v1456
        %v1569 = vpack.c.b16 %v1459, %v1458
        %v1570 = vpack.c.b16 %v1461, %v1460
        %v1571 = vpack.c.b16 %v1463, %v1462
        %v1572 = vpack.c.b16 %v1465, %v1464
        %v1573 = vpack.c.b16 %v1467, %v1466
        %v1574 = vpack.c.b16 %v1469, %v1468
        %v1575 = vpack.c.b16 %v1471, %v1470
        %v1576 = vpack.c.b16 %v1473, %v1472
        %v1577 = vpack.c.b16 %v1475, %v1474
        %v1578 = vpack.c.b16 %v1477, %v1476
        %v1579 = vpack.c.b16 %v1479, %v1478
        %v1580 = vpack.c.b16 %v1481, %v1480
        %v1581 = vpack.c.b16 %v1483, %v1482
        %v1582 = vpack.c.b16 %v1485, %v1484
        %v1583 = vpack.c.b16 %v1487, %v1486
        %v1584 = vpack.c.b16 %v1489, %v1488
        %v1585 = vpack.c.b16 %v1491, %v1490
        %v1586 = vpack.c.b16 %v1493, %v1492
        %v1587 = vpack.c.b16 %v1495, %v1494
        %v1588 = vpack.c.b16 %v1497, %v1496
        %v1589 = vpack.c.b16 %v1499, %v1498
        %v1590 = vpack.c.b16 %v1501, %v1500
        %v1591 = vpack.c.b16 %v1503, %v1502
        %v1592 = vpack.c.b16 %v1505, %v1504
        %v1593 = vpack.c.b16 %v1507, %v1506
        %v1594 = vpack.c.b16 %v1509, %v1508
        %v1595 = vpack.c.b16 %v1511, %v1510
        %v1596 = vpack.c.b16 %v1513, %v1512
        %v1597 = vpack.c.b16 %v1515, %v1514
        %v1598 = vpack.c.b16 %v1517, %v1516
        %v1599 = vpack.c.b16 %v1519, %v1518
        %v1600 = vpack.c.b16 %v1521, %v1520
        %v1601 = vpack.c.b16 %v1523, %v1522
        %v1602 = vpack.c.b16 %v1525, %v1524
        %v1603 = vpack.c.b16 %v1527, %v1526
        %v1604 = vpack.c.b16 %v1529, %v1528
        %v1605 = vpack.c.b16 %v1531, %v1530
        %v1606 = vpack.c.b16 %v1533, %v1532
        %v1607 = vpack.c.b16 %v1535, %v1534
        %1680 = vmatprep.subr.bf16.mxu0 0
        %1681 = vmatpush1.bf16.msra.mxu0 %v1543
        %1682 = vmatprep.subr.bf16.mxu0 0
        %1683 = vmatpush1.bf16.msra.mxu0 %v1542
        %1684 = vmatprep.subr.bf16.mxu0 0
        %1685 = vmatpush1.bf16.msra.mxu0 %v1541
        %1686 = vmatprep.subr.bf16.mxu0 0
        %1687 = vmatpush1.bf16.msra.mxu0 %v1540
        %1688 = vmatprep.subr.bf16.mxu0 0
        %1689 = vmatpush1.bf16.msra.mxu0 %v1539
        %1690 = vmatprep.subr.bf16.mxu0 0
        %1691 = vmatpush1.bf16.msra.mxu0 %v1538
        %1692 = vmatprep.subr.bf16.mxu0 0
        %1693 = vmatpush1.bf16.msra.mxu0 %v1537
        %1694 = vmatprep.subr.bf16.mxu0 0
        %1695 = vmatpush1.bf16.msra.mxu0 %v1536
        %1696 = vmatprep.subr.bf16.mxu0 0
        %1697 = vmatpush2.bf16.msra.mxu0 %v1551
        %1698 = vmatprep.subr.bf16.mxu0 0
        %1699 = vmatpush2.bf16.msra.mxu0 %v1550
        %1700 = vmatprep.subr.bf16.mxu0 0
        %1701 = vmatpush2.bf16.msra.mxu0 %v1549
        %1702 = vmatprep.subr.bf16.mxu0 0
        %1703 = vmatpush2.bf16.msra.mxu0 %v1548
        %1704 = vmatprep.subr.bf16.mxu0 0
        %1705 = vmatpush2.bf16.msra.mxu0 %v1547
        %1706 = vmatprep.subr.bf16.mxu0 0
        %1707 = vmatpush2.bf16.msra.mxu0 %v1546
        %1708 = vmatprep.subr.bf16.mxu0 0
        %1709 = vmatpush2.bf16.msra.mxu0 %v1545
        %1710 = vmatprep.subr.bf16.mxu0 0
        %1711 = vmatpush2.bf16.msra.mxu0 %v1544
        %1712 = vmatprep.mubr.bf16.mxu0 %v961
        %1713 = vmatmul.mubr.bf16.gmra.mxu0 %v960
        %v1714 = vpop.f32.mrf.mxu0
        %v1715 = vadd.f32 %v510, %v1714
        %v1716 = vpop.f32.mrf.mxu0
        %v1717 = vpop.f32.mrf.mxu0
        %v1718 = vadd.f32 %v510, %v1717
        %v1719 = vpop.f32.mrf.mxu0
        %1720 = vmatprep.mubr.bf16.mxu0 %v970
        %1721 = vmatmul.mubr.bf16.gmra.mxu0 %v969
        %v1722 = vpop.f32.mrf.mxu0
        %v1723 = vadd.f32 %v510, %v1722
        %v1724 = vpop.f32.mrf.mxu0
        %v1725 = vpop.f32.mrf.mxu0
        %v1726 = vadd.f32 %v510, %v1725
        %v1727 = vpop.f32.mrf.mxu0
        %1728 = vmatprep.mubr.bf16.mxu0 %v979
        %1729 = vmatmul.mubr.bf16.gmra.mxu0 %v978
        %v1730 = vpop.f32.mrf.mxu0
        %v1731 = vadd.f32 %v510, %v1730
        %v1732 = vpop.f32.mrf.mxu0
        %v1733 = vpop.f32.mrf.mxu0
        %v1734 = vadd.f32 %v510, %v1733
        %v1735 = vpop.f32.mrf.mxu0
        %1736 = vmatprep.mubr.bf16.mxu0 %v988
        %1737 = vmatmul.mubr.bf16.gmra.mxu0 %v987
        %v1738 = vpop.f32.mrf.mxu0
        %v1739 = vadd.f32 %v510, %v1738
        %v1740 = vpop.f32.mrf.mxu0
        %v1741 = vpop.f32.mrf.mxu0
        %v1742 = vadd.f32 %v510, %v1741
        %v1743 = vpop.f32.mrf.mxu0
        %1744 = vmatprep.mubr.bf16.mxu0 %v997
        %1745 = vmatmul.mubr.bf16.gmra.mxu0 %v996
        %v1746 = vpop.f32.mrf.mxu0
        %v1747 = vadd.f32 %v510, %v1746
        %v1748 = vpop.f32.mrf.mxu0
        %v1749 = vpop.f32.mrf.mxu0
        %v1750 = vadd.f32 %v510, %v1749
        %v1751 = vpop.f32.mrf.mxu0
        %1752 = vmatprep.mubr.bf16.mxu0 %v1006
        %1753 = vmatmul.mubr.bf16.gmra.mxu0 %v1005
        %v1754 = vpop.f32.mrf.mxu0
        %v1755 = vadd.f32 %v510, %v1754
        %v1756 = vpop.f32.mrf.mxu0
        %v1757 = vpop.f32.mrf.mxu0
        %v1758 = vadd.f32 %v510, %v1757
        %v1759 = vpop.f32.mrf.mxu0
        %1760 = vmatprep.mubr.bf16.mxu0 %v1015
        %1761 = vmatmul.mubr.bf16.gmra.mxu0 %v1014
        %v1762 = vpop.f32.mrf.mxu0
        %v1763 = vadd.f32 %v510, %v1762
        %v1764 = vpop.f32.mrf.mxu0
        %v1765 = vpop.f32.mrf.mxu0
        %v1766 = vadd.f32 %v510, %v1765
        %v1767 = vpop.f32.mrf.mxu0
        %1768 = vmatprep.mubr.bf16.mxu0 %v1024
        %1769 = vmatmul.mubr.bf16.gmra.mxu0 %v1023
        %v1770 = vpop.f32.mrf.mxu0
        %v1771 = vadd.f32 %v510, %v1770
        %v1772 = vpop.f32.mrf.mxu0
        %v1773 = vpop.f32.mrf.mxu0
        %v1774 = vadd.f32 %v510, %v1773
        %v1775 = vpop.f32.mrf.mxu0
        %1776 = vmatprep.mubr.bf16.mxu0 %v1033
        %1777 = vmatmul.mubr.bf16.gmra.mxu0 %v1032
        %v1778 = vpop.f32.mrf.mxu0
        %v1779 = vadd.f32 %v510, %v1778
        %v1780 = vpop.f32.mrf.mxu0
        %v1781 = vpop.f32.mrf.mxu0
        %v1782 = vadd.f32 %v510, %v1781
        %v1783 = vpop.f32.mrf.mxu0
        %1784 = vmatprep.mubr.bf16.mxu0 %v1042
        %1785 = vmatmul.mubr.bf16.gmra.mxu0 %v1041
        %v1786 = vpop.f32.mrf.mxu0
        %v1787 = vadd.f32 %v510, %v1786
        %v1788 = vpop.f32.mrf.mxu0
        %v1789 = vpop.f32.mrf.mxu0
        %v1790 = vadd.f32 %v510, %v1789
        %v1791 = vpop.f32.mrf.mxu0
        %1792 = vmatprep.mubr.bf16.mxu0 %v1051
        %1793 = vmatmul.mubr.bf16.gmra.mxu0 %v1050
        %v1794 = vpop.f32.mrf.mxu0
        %v1795 = vadd.f32 %v510, %v1794
        %v1796 = vpop.f32.mrf.mxu0
        %v1797 = vpop.f32.mrf.mxu0
        %v1798 = vadd.f32 %v510, %v1797
        %v1799 = vpop.f32.mrf.mxu0
        %1800 = vmatprep.mubr.bf16.mxu0 %v1060
        %1801 = vmatmul.mubr.bf16.gmra.mxu0 %v1059
        %v1802 = vpop.f32.mrf.mxu0
        %v1803 = vadd.f32 %v510, %v1802
        %v1804 = vpop.f32.mrf.mxu0
        %v1805 = vpop.f32.mrf.mxu0
        %v1806 = vadd.f32 %v510, %v1805
        %v1807 = vpop.f32.mrf.mxu0
        %1808 = vmatprep.mubr.bf16.mxu0 %v1069
        %1809 = vmatmul.mubr.bf16.gmra.mxu0 %v1068
        %v1810 = vpop.f32.mrf.mxu0
        %v1811 = vadd.f32 %v510, %v1810
        %v1812 = vpop.f32.mrf.mxu0
        %v1813 = vpop.f32.mrf.mxu0
        %v1814 = vadd.f32 %v510, %v1813
        %v1815 = vpop.f32.mrf.mxu0
        %1816 = vmatprep.mubr.bf16.mxu0 %v1078
        %1817 = vmatmul.mubr.bf16.gmra.mxu0 %v1077
        %v1818 = vpop.f32.mrf.mxu0
        %v1819 = vadd.f32 %v510, %v1818
        %v1820 = vpop.f32.mrf.mxu0
        %v1821 = vpop.f32.mrf.mxu0
        %v1822 = vadd.f32 %v510, %v1821
        %v1823 = vpop.f32.mrf.mxu0
        %1824 = vmatprep.mubr.bf16.mxu0 %v1087
        %1825 = vmatmul.mubr.bf16.gmra.mxu0 %v1086
        %v1826 = vpop.f32.mrf.mxu0
        %v1827 = vadd.f32 %v510, %v1826
        %v1828 = vpop.f32.mrf.mxu0
        %v1829 = vpop.f32.mrf.mxu0
        %v1830 = vadd.f32 %v510, %v1829
        %v1831 = vpop.f32.mrf.mxu0
        %1832 = vmatprep.mubr.bf16.mxu0 %v1096
        %1833 = vmatmul.mubr.bf16.gmra.mxu0 %v1095
        %v1834 = vpop.f32.mrf.mxu0
        %v1835 = vadd.f32 %v510, %v1834
        %v1836 = vpop.f32.mrf.mxu0
        %v1837 = vpop.f32.mrf.mxu0
        %v1838 = vadd.f32 %v510, %v1837
        %v1839 = vpop.f32.mrf.mxu0
        %1840 = vdwg.mxu0
        %1841 = vmatprep.subr.bf16.mxu0 0
        %1842 = vmatpush1.bf16.msra.mxu0 %v1559
        %1843 = vmatprep.subr.bf16.mxu0 0
        %1844 = vmatpush1.bf16.msra.mxu0 %v1558
        %1845 = vmatprep.subr.bf16.mxu0 0
        %1846 = vmatpush1.bf16.msra.mxu0 %v1557
        %1847 = vmatprep.subr.bf16.mxu0 0
        %1848 = vmatpush1.bf16.msra.mxu0 %v1556
        %1849 = vmatprep.subr.bf16.mxu0 0
        %1850 = vmatpush1.bf16.msra.mxu0 %v1555
        %1851 = vmatprep.subr.bf16.mxu0 0
        %1852 = vmatpush1.bf16.msra.mxu0 %v1554
        %1853 = vmatprep.subr.bf16.mxu0 0
        %1854 = vmatpush1.bf16.msra.mxu0 %v1553
        %1855 = vmatprep.subr.bf16.mxu0 0
        %1856 = vmatpush1.bf16.msra.mxu0 %v1552
        %1857 = vmatprep.subr.bf16.mxu0 0
        %1858 = vmatpush2.bf16.msra.mxu0 %v1567
        %1859 = vmatprep.subr.bf16.mxu0 0
        %1860 = vmatpush2.bf16.msra.mxu0 %v1566
        %1861 = vmatprep.subr.bf16.mxu0 0
        %1862 = vmatpush2.bf16.msra.mxu0 %v1565
        %1863 = vmatprep.subr.bf16.mxu0 0
        %1864 = vmatpush2.bf16.msra.mxu0 %v1564
        %1865 = vmatprep.subr.bf16.mxu0 0
        %1866 = vmatpush2.bf16.msra.mxu0 %v1563
        %1867 = vmatprep.subr.bf16.mxu0 0
        %1868 = vmatpush2.bf16.msra.mxu0 %v1562
        %1869 = vmatprep.subr.bf16.mxu0 0
        %1870 = vmatpush2.bf16.msra.mxu0 %v1561
        %1871 = vmatprep.subr.bf16.mxu0 0
        %1872 = vmatpush2.bf16.msra.mxu0 %v1560
        %1873 = vmatprep.mubr.bf16.mxu0 %v963
        %1874 = vmatmul.mubr.bf16.gmra.mxu0 %v962
        %v1875 = vpop.f32.mrf.mxu0
        %v1876 = vadd.f32 %v1715, %v1875
        %v1877 = vpop.f32.mrf.mxu0
        %v1878 = vpop.f32.mrf.mxu0
        %v1879 = vadd.f32 %v1718, %v1878
        %v1880 = vpop.f32.mrf.mxu0
        %1881 = vmatprep.mubr.bf16.mxu0 %v972
        %1882 = vmatmul.mubr.bf16.gmra.mxu0 %v971
        %v1883 = vpop.f32.mrf.mxu0
        %v1884 = vadd.f32 %v1723, %v1883
        %v1885 = vpop.f32.mrf.mxu0
        %v1886 = vpop.f32.mrf.mxu0
        %v1887 = vadd.f32 %v1726, %v1886
        %v1888 = vpop.f32.mrf.mxu0
        %1889 = vmatprep.mubr.bf16.mxu0 %v981
        %1890 = vmatmul.mubr.bf16.gmra.mxu0 %v980
        %v1891 = vpop.f32.mrf.mxu0
        %v1892 = vadd.f32 %v1731, %v1891
        %v1893 = vpop.f32.mrf.mxu0
        %v1894 = vpop.f32.mrf.mxu0
        %v1895 = vadd.f32 %v1734, %v1894
        %v1896 = vpop.f32.mrf.mxu0
        %1897 = vmatprep.mubr.bf16.mxu0 %v990
        %1898 = vmatmul.mubr.bf16.gmra.mxu0 %v989
        %v1899 = vpop.f32.mrf.mxu0
        %v1900 = vadd.f32 %v1739, %v1899
        %v1901 = vpop.f32.mrf.mxu0
        %v1902 = vpop.f32.mrf.mxu0
        %v1903 = vadd.f32 %v1742, %v1902
        %v1904 = vpop.f32.mrf.mxu0
        %1905 = vmatprep.mubr.bf16.mxu0 %v999
        %1906 = vmatmul.mubr.bf16.gmra.mxu0 %v998
        %v1907 = vpop.f32.mrf.mxu0
        %v1908 = vadd.f32 %v1747, %v1907
        %v1909 = vpop.f32.mrf.mxu0
        %v1910 = vpop.f32.mrf.mxu0
        %v1911 = vadd.f32 %v1750, %v1910
        %v1912 = vpop.f32.mrf.mxu0
        %1913 = vmatprep.mubr.bf16.mxu0 %v1008
        %1914 = vmatmul.mubr.bf16.gmra.mxu0 %v1007
        %v1915 = vpop.f32.mrf.mxu0
        %v1916 = vadd.f32 %v1755, %v1915
        %v1917 = vpop.f32.mrf.mxu0
        %v1918 = vpop.f32.mrf.mxu0
        %v1919 = vadd.f32 %v1758, %v1918
        %v1920 = vpop.f32.mrf.mxu0
        %1921 = vmatprep.mubr.bf16.mxu0 %v1017
        %1922 = vmatmul.mubr.bf16.gmra.mxu0 %v1016
        %v1923 = vpop.f32.mrf.mxu0
        %v1924 = vadd.f32 %v1763, %v1923
        %v1925 = vpop.f32.mrf.mxu0
        %v1926 = vpop.f32.mrf.mxu0
        %v1927 = vadd.f32 %v1766, %v1926
        %v1928 = vpop.f32.mrf.mxu0
        %1929 = vmatprep.mubr.bf16.mxu0 %v1026
        %1930 = vmatmul.mubr.bf16.gmra.mxu0 %v1025
        %v1931 = vpop.f32.mrf.mxu0
        %v1932 = vadd.f32 %v1771, %v1931
        %v1933 = vpop.f32.mrf.mxu0
        %v1934 = vpop.f32.mrf.mxu0
        %v1935 = vadd.f32 %v1774, %v1934
        %v1936 = vpop.f32.mrf.mxu0
        %1937 = vmatprep.mubr.bf16.mxu0 %v1035
        %1938 = vmatmul.mubr.bf16.gmra.mxu0 %v1034
        %v1939 = vpop.f32.mrf.mxu0
        %v1940 = vadd.f32 %v1779, %v1939
        %v1941 = vpop.f32.mrf.mxu0
        %v1942 = vpop.f32.mrf.mxu0
        %v1943 = vadd.f32 %v1782, %v1942
        %v1944 = vpop.f32.mrf.mxu0
        %1945 = vmatprep.mubr.bf16.mxu0 %v1044
        %1946 = vmatmul.mubr.bf16.gmra.mxu0 %v1043
        %v1947 = vpop.f32.mrf.mxu0
        %v1948 = vadd.f32 %v1787, %v1947
        %v1949 = vpop.f32.mrf.mxu0
        %v1950 = vpop.f32.mrf.mxu0
        %v1951 = vadd.f32 %v1790, %v1950
        %v1952 = vpop.f32.mrf.mxu0
        %1953 = vmatprep.mubr.bf16.mxu0 %v1053
        %1954 = vmatmul.mubr.bf16.gmra.mxu0 %v1052
        %v1955 = vpop.f32.mrf.mxu0
        %v1956 = vadd.f32 %v1795, %v1955
        %v1957 = vpop.f32.mrf.mxu0
        %v1958 = vpop.f32.mrf.mxu0
        %v1959 = vadd.f32 %v1798, %v1958
        %v1960 = vpop.f32.mrf.mxu0
        %1961 = vmatprep.mubr.bf16.mxu0 %v1062
        %1962 = vmatmul.mubr.bf16.gmra.mxu0 %v1061
        %v1963 = vpop.f32.mrf.mxu0
        %v1964 = vadd.f32 %v1803, %v1963
        %v1965 = vpop.f32.mrf.mxu0
        %v1966 = vpop.f32.mrf.mxu0
        %v1967 = vadd.f32 %v1806, %v1966
        %v1968 = vpop.f32.mrf.mxu0
        %1969 = vmatprep.mubr.bf16.mxu0 %v1071
        %1970 = vmatmul.mubr.bf16.gmra.mxu0 %v1070
        %v1971 = vpop.f32.mrf.mxu0
        %v1972 = vadd.f32 %v1811, %v1971
        %v1973 = vpop.f32.mrf.mxu0
        %v1974 = vpop.f32.mrf.mxu0
        %v1975 = vadd.f32 %v1814, %v1974
        %v1976 = vpop.f32.mrf.mxu0
        %1977 = vmatprep.mubr.bf16.mxu0 %v1080
        %1978 = vmatmul.mubr.bf16.gmra.mxu0 %v1079
        %v1979 = vpop.f32.mrf.mxu0
        %v1980 = vadd.f32 %v1819, %v1979
        %v1981 = vpop.f32.mrf.mxu0
        %v1982 = vpop.f32.mrf.mxu0
        %v1983 = vadd.f32 %v1822, %v1982
        %v1984 = vpop.f32.mrf.mxu0
        %1985 = vmatprep.mubr.bf16.mxu0 %v1089
        %1986 = vmatmul.mubr.bf16.gmra.mxu0 %v1088
        %v1987 = vpop.f32.mrf.mxu0
        %v1988 = vadd.f32 %v1827, %v1987
        %v1989 = vpop.f32.mrf.mxu0
        %v1990 = vpop.f32.mrf.mxu0
        %v1991 = vadd.f32 %v1830, %v1990
        %v1992 = vpop.f32.mrf.mxu0
        %1993 = vmatprep.mubr.bf16.mxu0 %v1098
        %1994 = vmatmul.mubr.bf16.gmra.mxu0 %v1097
        %v1995 = vpop.f32.mrf.mxu0
        %v1996 = vadd.f32 %v1835, %v1995
        %v1997 = vpop.f32.mrf.mxu0
        %v1998 = vpop.f32.mrf.mxu0
        %v1999 = vadd.f32 %v1838, %v1998
        %v2000 = vpop.f32.mrf.mxu0
        %2001 = vdwg.mxu0
        %2002 = vmatprep.subr.bf16.mxu0 0
        %2003 = vmatpush1.bf16.msra.mxu0 %v1575
        %2004 = vmatprep.subr.bf16.mxu0 0
        %2005 = vmatpush1.bf16.msra.mxu0 %v1574
        %2006 = vmatprep.subr.bf16.mxu0 0
        %2007 = vmatpush1.bf16.msra.mxu0 %v1573
        %2008 = vmatprep.subr.bf16.mxu0 0
        %2009 = vmatpush1.bf16.msra.mxu0 %v1572
        %2010 = vmatprep.subr.bf16.mxu0 0
        %2011 = vmatpush1.bf16.msra.mxu0 %v1571
        %2012 = vmatprep.subr.bf16.mxu0 0
        %2013 = vmatpush1.bf16.msra.mxu0 %v1570
        %2014 = vmatprep.subr.bf16.mxu0 0
        %2015 = vmatpush1.bf16.msra.mxu0 %v1569
        %2016 = vmatprep.subr.bf16.mxu0 0
        %2017 = vmatpush1.bf16.msra.mxu0 %v1568
        %2018 = vmatprep.subr.bf16.mxu0 0
        %2019 = vmatpush2.bf16.msra.mxu0 %v1583
        %2020 = vmatprep.subr.bf16.mxu0 0
        %2021 = vmatpush2.bf16.msra.mxu0 %v1582
        %2022 = vmatprep.subr.bf16.mxu0 0
        %2023 = vmatpush2.bf16.msra.mxu0 %v1581
        %2024 = vmatprep.subr.bf16.mxu0 0
        %2025 = vmatpush2.bf16.msra.mxu0 %v1580
        %2026 = vmatprep.subr.bf16.mxu0 0
        %2027 = vmatpush2.bf16.msra.mxu0 %v1579
        %2028 = vmatprep.subr.bf16.mxu0 0
        %2029 = vmatpush2.bf16.msra.mxu0 %v1578
        %2030 = vmatprep.subr.bf16.mxu0 0
        %2031 = vmatpush2.bf16.msra.mxu0 %v1577
        %2032 = vmatprep.subr.bf16.mxu0 0
        %2033 = vmatpush2.bf16.msra.mxu0 %v1576
        %2034 = vmatprep.mubr.bf16.mxu0 %v965
        %2035 = vmatmul.mubr.bf16.gmra.mxu0 %v964
        %v2036 = vpop.f32.mrf.mxu0
        %v2037 = vadd.f32 %v1876, %v2036
        %v2038 = vpop.f32.mrf.mxu0
        %v2039 = vpop.f32.mrf.mxu0
        %v2040 = vadd.f32 %v1879, %v2039
        %v2041 = vpop.f32.mrf.mxu0
        %2042 = vmatprep.mubr.bf16.mxu0 %v974
        %2043 = vmatmul.mubr.bf16.gmra.mxu0 %v973
        %v2044 = vpop.f32.mrf.mxu0
        %v2045 = vadd.f32 %v1884, %v2044
        %v2046 = vpop.f32.mrf.mxu0
        %v2047 = vpop.f32.mrf.mxu0
        %v2048 = vadd.f32 %v1887, %v2047
        %v2049 = vpop.f32.mrf.mxu0
        %2050 = vmatprep.mubr.bf16.mxu0 %v983
        %2051 = vmatmul.mubr.bf16.gmra.mxu0 %v982
        %v2052 = vpop.f32.mrf.mxu0
        %v2053 = vadd.f32 %v1892, %v2052
        %v2054 = vpop.f32.mrf.mxu0
        %v2055 = vpop.f32.mrf.mxu0
        %v2056 = vadd.f32 %v1895, %v2055
        %v2057 = vpop.f32.mrf.mxu0
        %2058 = vmatprep.mubr.bf16.mxu0 %v992
        %2059 = vmatmul.mubr.bf16.gmra.mxu0 %v991
        %v2060 = vpop.f32.mrf.mxu0
        %v2061 = vadd.f32 %v1900, %v2060
        %v2062 = vpop.f32.mrf.mxu0
        %v2063 = vpop.f32.mrf.mxu0
        %v2064 = vadd.f32 %v1903, %v2063
        %v2065 = vpop.f32.mrf.mxu0
        %2066 = vmatprep.mubr.bf16.mxu0 %v1001
        %2067 = vmatmul.mubr.bf16.gmra.mxu0 %v1000
        %v2068 = vpop.f32.mrf.mxu0
        %v2069 = vadd.f32 %v1908, %v2068
        %v2070 = vpop.f32.mrf.mxu0
        %v2071 = vpop.f32.mrf.mxu0
        %v2072 = vadd.f32 %v1911, %v2071
        %v2073 = vpop.f32.mrf.mxu0
        %2074 = vmatprep.mubr.bf16.mxu0 %v1010
        %2075 = vmatmul.mubr.bf16.gmra.mxu0 %v1009
        %v2076 = vpop.f32.mrf.mxu0
        %v2077 = vadd.f32 %v1916, %v2076
        %v2078 = vpop.f32.mrf.mxu0
        %v2079 = vpop.f32.mrf.mxu0
        %v2080 = vadd.f32 %v1919, %v2079
        %v2081 = vpop.f32.mrf.mxu0
        %2082 = vmatprep.mubr.bf16.mxu0 %v1019
        %2083 = vmatmul.mubr.bf16.gmra.mxu0 %v1018
        %v2084 = vpop.f32.mrf.mxu0
        %v2085 = vadd.f32 %v1924, %v2084
        %v2086 = vpop.f32.mrf.mxu0
        %v2087 = vpop.f32.mrf.mxu0
        %v2088 = vadd.f32 %v1927, %v2087
        %v2089 = vpop.f32.mrf.mxu0
        %2090 = vmatprep.mubr.bf16.mxu0 %v1028
        %2091 = vmatmul.mubr.bf16.gmra.mxu0 %v1027
        %v2092 = vpop.f32.mrf.mxu0
        %v2093 = vadd.f32 %v1932, %v2092
        %v2094 = vpop.f32.mrf.mxu0
        %v2095 = vpop.f32.mrf.mxu0
        %v2096 = vadd.f32 %v1935, %v2095
        %v2097 = vpop.f32.mrf.mxu0
        %2098 = vmatprep.mubr.bf16.mxu0 %v1037
        %2099 = vmatmul.mubr.bf16.gmra.mxu0 %v1036
        %v2100 = vpop.f32.mrf.mxu0
        %v2101 = vadd.f32 %v1940, %v2100
        %v2102 = vpop.f32.mrf.mxu0
        %v2103 = vpop.f32.mrf.mxu0
        %v2104 = vadd.f32 %v1943, %v2103
        %v2105 = vpop.f32.mrf.mxu0
        %2106 = vmatprep.mubr.bf16.mxu0 %v1046
        %2107 = vmatmul.mubr.bf16.gmra.mxu0 %v1045
        %v2108 = vpop.f32.mrf.mxu0
        %v2109 = vadd.f32 %v1948, %v2108
        %v2110 = vpop.f32.mrf.mxu0
        %v2111 = vpop.f32.mrf.mxu0
        %v2112 = vadd.f32 %v1951, %v2111
        %v2113 = vpop.f32.mrf.mxu0
        %2114 = vmatprep.mubr.bf16.mxu0 %v1055
        %2115 = vmatmul.mubr.bf16.gmra.mxu0 %v1054
        %v2116 = vpop.f32.mrf.mxu0
        %v2117 = vadd.f32 %v1956, %v2116
        %v2118 = vpop.f32.mrf.mxu0
        %v2119 = vpop.f32.mrf.mxu0
        %v2120 = vadd.f32 %v1959, %v2119
        %v2121 = vpop.f32.mrf.mxu0
        %2122 = vmatprep.mubr.bf16.mxu0 %v1064
        %2123 = vmatmul.mubr.bf16.gmra.mxu0 %v1063
        %v2124 = vpop.f32.mrf.mxu0
        %v2125 = vadd.f32 %v1964, %v2124
        %v2126 = vpop.f32.mrf.mxu0
        %v2127 = vpop.f32.mrf.mxu0
        %v2128 = vadd.f32 %v1967, %v2127
        %v2129 = vpop.f32.mrf.mxu0
        %2130 = vmatprep.mubr.bf16.mxu0 %v1073
        %2131 = vmatmul.mubr.bf16.gmra.mxu0 %v1072
        %v2132 = vpop.f32.mrf.mxu0
        %v2133 = vadd.f32 %v1972, %v2132
        %v2134 = vpop.f32.mrf.mxu0
        %v2135 = vpop.f32.mrf.mxu0
        %v2136 = vadd.f32 %v1975, %v2135
        %v2137 = vpop.f32.mrf.mxu0
        %2138 = vmatprep.mubr.bf16.mxu0 %v1082
        %2139 = vmatmul.mubr.bf16.gmra.mxu0 %v1081
        %v2140 = vpop.f32.mrf.mxu0
        %v2141 = vadd.f32 %v1980, %v2140
        %v2142 = vpop.f32.mrf.mxu0
        %v2143 = vpop.f32.mrf.mxu0
        %v2144 = vadd.f32 %v1983, %v2143
        %v2145 = vpop.f32.mrf.mxu0
        %2146 = vmatprep.mubr.bf16.mxu0 %v1091
        %2147 = vmatmul.mubr.bf16.gmra.mxu0 %v1090
        %v2148 = vpop.f32.mrf.mxu0
        %v2149 = vadd.f32 %v1988, %v2148
        %v2150 = vpop.f32.mrf.mxu0
        %v2151 = vpop.f32.mrf.mxu0
        %v2152 = vadd.f32 %v1991, %v2151
        %v2153 = vpop.f32.mrf.mxu0
        %2154 = vmatprep.mubr.bf16.mxu0 %v1100
        %2155 = vmatmul.mubr.bf16.gmra.mxu0 %v1099
        %v2156 = vpop.f32.mrf.mxu0
        %v2157 = vadd.f32 %v1996, %v2156
        %v2158 = vpop.f32.mrf.mxu0
        %v2159 = vpop.f32.mrf.mxu0
        %v2160 = vadd.f32 %v1999, %v2159
        %v2161 = vpop.f32.mrf.mxu0
        %2162 = vdwg.mxu0
        %2163 = vmatprep.subr.bf16.mxu0 0
        %2164 = vmatpush1.bf16.msra.mxu0 %v1591
        %2165 = vmatprep.subr.bf16.mxu0 0
        %2166 = vmatpush1.bf16.msra.mxu0 %v1590
        %2167 = vmatprep.subr.bf16.mxu0 0
        %2168 = vmatpush1.bf16.msra.mxu0 %v1589
        %2169 = vmatprep.subr.bf16.mxu0 0
        %2170 = vmatpush1.bf16.msra.mxu0 %v1588
        %2171 = vmatprep.subr.bf16.mxu0 0
        %2172 = vmatpush1.bf16.msra.mxu0 %v1587
        %2173 = vmatprep.subr.bf16.mxu0 0
        %2174 = vmatpush1.bf16.msra.mxu0 %v1586
        %2175 = vmatprep.subr.bf16.mxu0 0
        %2176 = vmatpush1.bf16.msra.mxu0 %v1585
        %2177 = vmatprep.subr.bf16.mxu0 0
        %2178 = vmatpush1.bf16.msra.mxu0 %v1584
        %2179 = vmatprep.subr.bf16.mxu0 0
        %2180 = vmatpush2.bf16.msra.mxu0 %v1599
        %2181 = vmatprep.subr.bf16.mxu0 0
        %2182 = vmatpush2.bf16.msra.mxu0 %v1598
        %2183 = vmatprep.subr.bf16.mxu0 0
        %2184 = vmatpush2.bf16.msra.mxu0 %v1597
        %2185 = vmatprep.subr.bf16.mxu0 0
        %2186 = vmatpush2.bf16.msra.mxu0 %v1596
        %2187 = vmatprep.subr.bf16.mxu0 0
        %2188 = vmatpush2.bf16.msra.mxu0 %v1595
        %2189 = vmatprep.subr.bf16.mxu0 0
        %2190 = vmatpush2.bf16.msra.mxu0 %v1594
        %2191 = vmatprep.subr.bf16.mxu0 0
        %2192 = vmatpush2.bf16.msra.mxu0 %v1593
        %2193 = vmatprep.subr.bf16.mxu0 0
        %2194 = vmatpush2.bf16.msra.mxu0 %v1592
        %2195 = vmatprep.mubr.bf16.mxu0 %v967
        %2196 = vmatmul.mubr.bf16.gmra.mxu0 %v966
        %v2197 = vpop.f32.mrf.mxu0
        %v2198 = vadd.f32 %v2037, %v2197
        %v2199 = vpop.f32.mrf.mxu0
        %v2200 = vpop.f32.mrf.mxu0
        %v2201 = vadd.f32 %v2040, %v2200
        %v2202 = vpop.f32.mrf.mxu0
        %2203 = vmatprep.mubr.bf16.mxu0 %v976
        %2204 = vmatmul.mubr.bf16.gmra.mxu0 %v975
        %v2205 = vpop.f32.mrf.mxu0
        %v2206 = vadd.f32 %v2045, %v2205
        %v2207 = vpop.f32.mrf.mxu0
        %v2208 = vpop.f32.mrf.mxu0
        %v2209 = vadd.f32 %v2048, %v2208
        %v2210 = vpop.f32.mrf.mxu0
        %2211 = vmatprep.mubr.bf16.mxu0 %v985
        %2212 = vmatmul.mubr.bf16.gmra.mxu0 %v984
        %v2213 = vpop.f32.mrf.mxu0
        %v2214 = vadd.f32 %v2053, %v2213
        %v2215 = vpop.f32.mrf.mxu0
        %v2216 = vpop.f32.mrf.mxu0
        %v2217 = vadd.f32 %v2056, %v2216
        %v2218 = vpop.f32.mrf.mxu0
        %2219 = vmatprep.mubr.bf16.mxu0 %v994
        %2220 = vmatmul.mubr.bf16.gmra.mxu0 %v993
        %v2221 = vpop.f32.mrf.mxu0
        %v2222 = vadd.f32 %v2061, %v2221
        %v2223 = vpop.f32.mrf.mxu0
        %v2224 = vpop.f32.mrf.mxu0
        %v2225 = vadd.f32 %v2064, %v2224
        %v2226 = vpop.f32.mrf.mxu0
        %2227 = vmatprep.mubr.bf16.mxu0 %v1003
        %2228 = vmatmul.mubr.bf16.gmra.mxu0 %v1002
        %v2229 = vpop.f32.mrf.mxu0
        %v2230 = vadd.f32 %v2069, %v2229
        %v2231 = vpop.f32.mrf.mxu0
        %v2232 = vpop.f32.mrf.mxu0
        %v2233 = vadd.f32 %v2072, %v2232
        %v2234 = vpop.f32.mrf.mxu0
        %2235 = vmatprep.mubr.bf16.mxu0 %v1012
        %2236 = vmatmul.mubr.bf16.gmra.mxu0 %v1011
        %v2237 = vpop.f32.mrf.mxu0
        %v2238 = vadd.f32 %v2077, %v2237
        %v2239 = vpop.f32.mrf.mxu0
        %v2240 = vpop.f32.mrf.mxu0
        %v2241 = vadd.f32 %v2080, %v2240
        %v2242 = vpop.f32.mrf.mxu0
        %2243 = vmatprep.mubr.bf16.mxu0 %v1021
        %2244 = vmatmul.mubr.bf16.gmra.mxu0 %v1020
        %v2245 = vpop.f32.mrf.mxu0
        %v2246 = vadd.f32 %v2085, %v2245
        %v2247 = vpop.f32.mrf.mxu0
        %v2248 = vpop.f32.mrf.mxu0
        %v2249 = vadd.f32 %v2088, %v2248
        %v2250 = vpop.f32.mrf.mxu0
        %2251 = vmatprep.mubr.bf16.mxu0 %v1030
        %2252 = vmatmul.mubr.bf16.gmra.mxu0 %v1029
        %v2253 = vpop.f32.mrf.mxu0
        %v2254 = vadd.f32 %v2093, %v2253
        %v2255 = vpop.f32.mrf.mxu0
        %v2256 = vpop.f32.mrf.mxu0
        %v2257 = vadd.f32 %v2096, %v2256
        %v2258 = vpop.f32.mrf.mxu0
        %2259 = vmatprep.mubr.bf16.mxu0 %v1039
        %2260 = vmatmul.mubr.bf16.gmra.mxu0 %v1038
        %v2261 = vpop.f32.mrf.mxu0
        %v2262 = vadd.f32 %v2101, %v2261
        %v2263 = vpop.f32.mrf.mxu0
        %v2264 = vpop.f32.mrf.mxu0
        %v2265 = vadd.f32 %v2104, %v2264
        %v2266 = vpop.f32.mrf.mxu0
        %2267 = vmatprep.mubr.bf16.mxu0 %v1048
        %2268 = vmatmul.mubr.bf16.gmra.mxu0 %v1047
        %v2269 = vpop.f32.mrf.mxu0
        %v2270 = vadd.f32 %v2109, %v2269
        %v2271 = vpop.f32.mrf.mxu0
        %v2272 = vpop.f32.mrf.mxu0
        %v2273 = vadd.f32 %v2112, %v2272
        %v2274 = vpop.f32.mrf.mxu0
        %2275 = vmatprep.mubr.bf16.mxu0 %v1057
        %2276 = vmatmul.mubr.bf16.gmra.mxu0 %v1056
        %v2277 = vpop.f32.mrf.mxu0
        %v2278 = vadd.f32 %v2117, %v2277
        %v2279 = vpop.f32.mrf.mxu0
        %v2280 = vpop.f32.mrf.mxu0
        %v2281 = vadd.f32 %v2120, %v2280
        %v2282 = vpop.f32.mrf.mxu0
        %2283 = vmatprep.mubr.bf16.mxu0 %v1066
        %2284 = vmatmul.mubr.bf16.gmra.mxu0 %v1065
        %v2285 = vpop.f32.mrf.mxu0
        %v2286 = vadd.f32 %v2125, %v2285
        %v2287 = vpop.f32.mrf.mxu0
        %v2288 = vpop.f32.mrf.mxu0
        %v2289 = vadd.f32 %v2128, %v2288
        %v2290 = vpop.f32.mrf.mxu0
        %2291 = vmatprep.mubr.bf16.mxu0 %v1075
        %2292 = vmatmul.mubr.bf16.gmra.mxu0 %v1074
        %v2293 = vpop.f32.mrf.mxu0
        %v2294 = vadd.f32 %v2133, %v2293
        %v2295 = vpop.f32.mrf.mxu0
        %v2296 = vpop.f32.mrf.mxu0
        %v2297 = vadd.f32 %v2136, %v2296
        %v2298 = vpop.f32.mrf.mxu0
        %2299 = vmatprep.mubr.bf16.mxu0 %v1084
        %2300 = vmatmul.mubr.bf16.gmra.mxu0 %v1083
        %v2301 = vpop.f32.mrf.mxu0
        %v2302 = vadd.f32 %v2141, %v2301
        %v2303 = vpop.f32.mrf.mxu0
        %v2304 = vpop.f32.mrf.mxu0
        %v2305 = vadd.f32 %v2144, %v2304
        %v2306 = vpop.f32.mrf.mxu0
        %2307 = vmatprep.mubr.bf16.mxu0 %v1093
        %2308 = vmatmul.mubr.bf16.gmra.mxu0 %v1092
        %v2309 = vpop.f32.mrf.mxu0
        %v2310 = vadd.f32 %v2149, %v2309
        %v2311 = vpop.f32.mrf.mxu0
        %v2312 = vpop.f32.mrf.mxu0
        %v2313 = vadd.f32 %v2152, %v2312
        %v2314 = vpop.f32.mrf.mxu0
        %2315 = vmatprep.mubr.bf16.mxu0 %v1102
        %2316 = vmatmul.mubr.bf16.gmra.mxu0 %v1101
        %v2317 = vpop.f32.mrf.mxu0
        %v2318 = vadd.f32 %v2157, %v2317
        %v2319 = vpop.f32.mrf.mxu0
        %v2320 = vpop.f32.mrf.mxu0
        %v2321 = vadd.f32 %v2160, %v2320
        %v2322 = vpop.f32.mrf.mxu0
        %2323 = vdwg.mxu0
        %2324 = vmatprep.subr.bf16.mxu0 0
        %2325 = vmatpush1.bf16.msra.mxu0 %v1607
        %2326 = vmatprep.subr.bf16.mxu0 0
        %2327 = vmatpush1.bf16.msra.mxu0 %v1606
        %2328 = vmatprep.subr.bf16.mxu0 0
        %2329 = vmatpush1.bf16.msra.mxu0 %v1605
        %2330 = vmatprep.subr.bf16.mxu0 0
        %2331 = vmatpush1.bf16.msra.mxu0 %v1604
        %2332 = vmatprep.subr.bf16.mxu0 0
        %2333 = vmatpush1.bf16.msra.mxu0 %v1603
        %2334 = vmatprep.subr.bf16.mxu0 0
        %2335 = vmatpush1.bf16.msra.mxu0 %v1602
        %2336 = vmatprep.subr.bf16.mxu0 0
        %2337 = vmatpush1.bf16.msra.mxu0 %v1601
        %2338 = vmatprep.subr.bf16.mxu0 0
        %2339 = vmatpush1.bf16.msra.mxu0 %v1600
        %2340 = vmatprep.subr.bf16.mxu0 0
        %2341 = vmatpush2.bf16.msra.mxu0 0
        %2342 = vmatprep.subr.bf16.mxu0 0
        %2343 = vmatpush2.bf16.msra.mxu0 0
        %2344 = vmatprep.subr.bf16.mxu0 0
        %2345 = vmatpush2.bf16.msra.mxu0 0
        %2346 = vmatprep.subr.bf16.mxu0 0
        %2347 = vmatpush2.bf16.msra.mxu0 0
        %2348 = vmatprep.subr.bf16.mxu0 0
        %2349 = vmatpush2.bf16.msra.mxu0 0
        %2350 = vmatprep.subr.bf16.mxu0 0
        %2351 = vmatpush2.bf16.msra.mxu0 0
        %2352 = vmatprep.subr.bf16.mxu0 0
        %2353 = vmatpush2.bf16.msra.mxu0 0
        %2354 = vmatprep.subr.bf16.mxu0 0
        %2355 = vmatpush2.bf16.msra.mxu0 0
        %2356 = vmatprep.mubr.bf16.mxu0 0
        %2357 = vmatmul.mubr.bf16.gmra.mxu0 %v968
        %v2358 = vpop.f32.mrf.mxu0
        %v2359 = vadd.f32 %v2198, %v2358
        %v2360 = vpop.f32.mrf.mxu0
        %v2361 = vpop.f32.mrf.mxu0
        %v2362 = vadd.f32 %v2201, %v2361
        %v2363 = vpop.f32.mrf.mxu0
        %2364 = vmatprep.mubr.bf16.mxu0 0
        %2365 = vmatmul.mubr.bf16.gmra.mxu0 %v977
        %v2366 = vpop.f32.mrf.mxu0
        %v2367 = vadd.f32 %v2206, %v2366
        %v2368 = vpop.f32.mrf.mxu0
        %v2369 = vpop.f32.mrf.mxu0
        %v2370 = vadd.f32 %v2209, %v2369
        %v2371 = vpop.f32.mrf.mxu0
        %2372 = vmatprep.mubr.bf16.mxu0 0
        %2373 = vmatmul.mubr.bf16.gmra.mxu0 %v986
        %v2374 = vpop.f32.mrf.mxu0
        %v2375 = vadd.f32 %v2214, %v2374
        %v2376 = vpop.f32.mrf.mxu0
        %v2377 = vpop.f32.mrf.mxu0
        %v2378 = vadd.f32 %v2217, %v2377
        %v2379 = vpop.f32.mrf.mxu0
        %2380 = vmatprep.mubr.bf16.mxu0 0
        %2381 = vmatmul.mubr.bf16.gmra.mxu0 %v995
        %v2382 = vpop.f32.mrf.mxu0
        %v2383 = vadd.f32 %v2222, %v2382
        %v2384 = vpop.f32.mrf.mxu0
        %v2385 = vpop.f32.mrf.mxu0
        %v2386 = vadd.f32 %v2225, %v2385
        %v2387 = vpop.f32.mrf.mxu0
        %2388 = vmatprep.mubr.bf16.mxu0 0
        %2389 = vmatmul.mubr.bf16.gmra.mxu0 %v1004
        %v2390 = vpop.f32.mrf.mxu0
        %v2391 = vadd.f32 %v2230, %v2390
        %v2392 = vpop.f32.mrf.mxu0
        %v2393 = vpop.f32.mrf.mxu0
        %v2394 = vadd.f32 %v2233, %v2393
        %v2395 = vpop.f32.mrf.mxu0
        %2396 = vmatprep.mubr.bf16.mxu0 0
        %2397 = vmatmul.mubr.bf16.gmra.mxu0 %v1013
        %v2398 = vpop.f32.mrf.mxu0
        %v2399 = vadd.f32 %v2238, %v2398
        %v2400 = vpop.f32.mrf.mxu0
        %v2401 = vpop.f32.mrf.mxu0
        %v2402 = vadd.f32 %v2241, %v2401
        %v2403 = vpop.f32.mrf.mxu0
        %2404 = vmatprep.mubr.bf16.mxu0 0
        %2405 = vmatmul.mubr.bf16.gmra.mxu0 %v1022
        %v2406 = vpop.f32.mrf.mxu0
        %v2407 = vadd.f32 %v2246, %v2406
        %v2408 = vpop.f32.mrf.mxu0
        %v2409 = vpop.f32.mrf.mxu0
        %v2410 = vadd.f32 %v2249, %v2409
        %v2411 = vpop.f32.mrf.mxu0
        %2412 = vmatprep.mubr.bf16.mxu0 0
        %2413 = vmatmul.mubr.bf16.gmra.mxu0 %v1031
        %v2414 = vpop.f32.mrf.mxu0
        %v2415 = vadd.f32 %v2254, %v2414
        %v2416 = vpop.f32.mrf.mxu0
        %v2417 = vpop.f32.mrf.mxu0
        %v2418 = vadd.f32 %v2257, %v2417
        %v2419 = vpop.f32.mrf.mxu0
        %2420 = vmatprep.mubr.bf16.mxu0 0
        %2421 = vmatmul.mubr.bf16.gmra.mxu0 %v1040
        %v2422 = vpop.f32.mrf.mxu0
        %v2423 = vadd.f32 %v2262, %v2422
        %v2424 = vpop.f32.mrf.mxu0
        %v2425 = vpop.f32.mrf.mxu0
        %v2426 = vadd.f32 %v2265, %v2425
        %v2427 = vpop.f32.mrf.mxu0
        %2428 = vmatprep.mubr.bf16.mxu0 0
        %2429 = vmatmul.mubr.bf16.gmra.mxu0 %v1049
        %v2430 = vpop.f32.mrf.mxu0
        %v2431 = vadd.f32 %v2270, %v2430
        %v2432 = vpop.f32.mrf.mxu0
        %v2433 = vpop.f32.mrf.mxu0
        %v2434 = vadd.f32 %v2273, %v2433
        %v2435 = vpop.f32.mrf.mxu0
        %2436 = vmatprep.mubr.bf16.mxu0 0
        %2437 = vmatmul.mubr.bf16.gmra.mxu0 %v1058
        %v2438 = vpop.f32.mrf.mxu0
        %v2439 = vadd.f32 %v2278, %v2438
        %v2440 = vpop.f32.mrf.mxu0
        %v2441 = vpop.f32.mrf.mxu0
        %v2442 = vadd.f32 %v2281, %v2441
        %v2443 = vpop.f32.mrf.mxu0
        %2444 = vmatprep.mubr.bf16.mxu0 0
        %2445 = vmatmul.mubr.bf16.gmra.mxu0 %v1067
        %v2446 = vpop.f32.mrf.mxu0
        %v2447 = vadd.f32 %v2286, %v2446
        %v2448 = vpop.f32.mrf.mxu0
        %v2449 = vpop.f32.mrf.mxu0
        %v2450 = vadd.f32 %v2289, %v2449
        %v2451 = vpop.f32.mrf.mxu0
        %2452 = vmatprep.mubr.bf16.mxu0 0
        %2453 = vmatmul.mubr.bf16.gmra.mxu0 %v1076
        %v2454 = vpop.f32.mrf.mxu0
        %v2455 = vadd.f32 %v2294, %v2454
        %v2456 = vpop.f32.mrf.mxu0
        %v2457 = vpop.f32.mrf.mxu0
        %v2458 = vadd.f32 %v2297, %v2457
        %v2459 = vpop.f32.mrf.mxu0
        %2460 = vmatprep.mubr.bf16.mxu0 0
        %2461 = vmatmul.mubr.bf16.gmra.mxu0 %v1085
        %v2462 = vpop.f32.mrf.mxu0
        %v2463 = vadd.f32 %v2302, %v2462
        %v2464 = vpop.f32.mrf.mxu0
        %v2465 = vpop.f32.mrf.mxu0
        %v2466 = vadd.f32 %v2305, %v2465
        %v2467 = vpop.f32.mrf.mxu0
        %2468 = vmatprep.mubr.bf16.mxu0 0
        %2469 = vmatmul.mubr.bf16.gmra.mxu0 %v1094
        %v2470 = vpop.f32.mrf.mxu0
        %v2471 = vadd.f32 %v2310, %v2470
        %v2472 = vpop.f32.mrf.mxu0
        %v2473 = vpop.f32.mrf.mxu0
        %v2474 = vadd.f32 %v2313, %v2473
        %v2475 = vpop.f32.mrf.mxu0
        %2476 = vmatprep.mubr.bf16.mxu0 0
        %2477 = vmatmul.mubr.bf16.gmra.mxu0 %v1103
        %v2478 = vpop.f32.mrf.mxu0
        %v2479 = vadd.f32 %v2318, %v2478
        %v2480 = vpop.f32.mrf.mxu0
        %v2481 = vpop.f32.mrf.mxu0
        %v2482 = vadd.f32 %v2321, %v2481
        %v2483 = vpop.f32.mrf.mxu0
        %2484 = vdwg.mxu0
        %v2485 = vmax.f32 %v2359, 0.0
        %v2486 = vmax.f32 %v2362, 0.0
        %v2487 = vmax.f32 %v2367, 0.0
        %v2488 = vmax.f32 %v2370, 0.0
        %v2489 = vmax.f32 %v2375, 0.0
        %v2490 = vmax.f32 %v2378, 0.0
        %v2491 = vmax.f32 %v2383, 0.0
        %v2492 = vmax.f32 %v2386, 0.0
        %v2493 = vmax.f32 %v2391, 0.0
        %v2494 = vmax.f32 %v2394, 0.0
        %v2495 = vmax.f32 %v2399, 0.0
        %v2496 = vmax.f32 %v2402, 0.0
        %v2497 = vmax.f32 %v2407, 0.0
        %v2498 = vmax.f32 %v2410, 0.0
        %v2499 = vmax.f32 %v2415, 0.0
        %v2500 = vmax.f32 %v2418, 0.0
        %v2501 = vmax.f32 %v2423, 0.0
        %v2502 = vmax.f32 %v2426, 0.0
        %v2503 = vmax.f32 %v2431, 0.0
        %v2504 = vmax.f32 %v2434, 0.0
        %v2505 = vmax.f32 %v2439, 0.0
        %v2506 = vmax.f32 %v2442, 0.0
        %v2507 = vmax.f32 %v2447, 0.0
        %v2508 = vmax.f32 %v2450, 0.0
        %v2509 = vmax.f32 %v2455, 0.0
        %v2510 = vmax.f32 %v2458, 0.0
        %v2511 = vmax.f32 %v2463, 0.0
        %v2512 = vmax.f32 %v2466, 0.0
        %v2513 = vmax.f32 %v2471, 0.0
        %v2514 = vmax.f32 %v2474, 0.0
        %v2515 = vmax.f32 %v2479, 0.0
        %v2516 = vmax.f32 %v2482, 0.0
        %v2517 = vpack.c.bf16 %v2486, %v2485
        %v2518 = vpack.c.bf16 %v2488, %v2487
        %v2519 = vpack.c.bf16 %v2490, %v2489
        %v2520 = vpack.c.bf16 %v2492, %v2491
        %v2521 = vpack.c.bf16 %v2494, %v2493
        %v2522 = vpack.c.bf16 %v2496, %v2495
        %v2523 = vpack.c.bf16 %v2498, %v2497
        %v2524 = vpack.c.bf16 %v2500, %v2499
        %v2525 = vpack.c.bf16 %v2502, %v2501
        %v2526 = vpack.c.bf16 %v2504, %v2503
        %v2527 = vpack.c.bf16 %v2506, %v2505
        %v2528 = vpack.c.bf16 %v2508, %v2507
        %v2529 = vpack.c.bf16 %v2510, %v2509
        %v2530 = vpack.c.bf16 %v2512, %v2511
        %v2531 = vpack.c.bf16 %v2514, %v2513
        %v2532 = vpack.c.bf16 %v2516, %v2515
        %v2549 = vunpack.c.l.b16 %v2517
        %v2550 = vunpack.c.h.b16 %v2517
        %v2551 = vunpack.c.l.b16 %v2518
        %v2552 = vunpack.c.h.b16 %v2518
        %v2553 = vunpack.c.l.b16 %v2519
        %v2554 = vunpack.c.h.b16 %v2519
        %v2555 = vunpack.c.l.b16 %v2520
        %v2556 = vunpack.c.h.b16 %v2520
        %v2557 = vunpack.c.l.b16 %v2521
        %v2558 = vunpack.c.h.b16 %v2521
        %v2559 = vunpack.c.l.b16 %v2522
        %v2560 = vunpack.c.h.b16 %v2522
        %v2561 = vunpack.c.l.b16 %v2523
        %v2562 = vunpack.c.h.b16 %v2523
        %v2563 = vunpack.c.l.b16 %v2524
        %v2564 = vunpack.c.h.b16 %v2524
        %v2565 = vunpack.c.l.b16 %v2525
        %v2566 = vunpack.c.h.b16 %v2525
        %v2567 = vunpack.c.l.b16 %v2526
        %v2568 = vunpack.c.h.b16 %v2526
        %v2569 = vunpack.c.l.b16 %v2527
        %v2570 = vunpack.c.h.b16 %v2527
        %v2571 = vunpack.c.l.b16 %v2528
        %v2572 = vunpack.c.h.b16 %v2528
        %v2573 = vunpack.c.l.b16 %v2529
        %v2574 = vunpack.c.h.b16 %v2529
        %v2575 = vunpack.c.l.b16 %v2530
        %v2576 = vunpack.c.h.b16 %v2530
        %v2577 = vunpack.c.l.b16 %v2531
        %v2578 = vunpack.c.h.b16 %v2531
        %v2579 = vunpack.c.l.b16 %v2532
        %v2580 = vunpack.c.h.b16 %v2532
        %v2581 = vpack.c.b16 %v2549, %v2549
        %v2582 = vpack.c.b16 %v2550, %v2550
        %v2583 = vpack.c.b16 %v2551, %v2551
        %v2584 = vpack.c.b16 %v2552, %v2552
        %v2585 = vpack.c.b16 %v2553, %v2553
        %v2586 = vpack.c.b16 %v2554, %v2554
        %v2587 = vpack.c.b16 %v2555, %v2555
        %v2588 = vpack.c.b16 %v2556, %v2556
        %v2589 = vpack.c.b16 %v2557, %v2557
        %v2590 = vpack.c.b16 %v2558, %v2558
        %v2591 = vpack.c.b16 %v2559, %v2559
        %v2592 = vpack.c.b16 %v2560, %v2560
        %v2593 = vpack.c.b16 %v2561, %v2561
        %v2594 = vpack.c.b16 %v2562, %v2562
        %v2595 = vpack.c.b16 %v2563, %v2563
        %v2596 = vpack.c.b16 %v2564, %v2564
        %v2597 = vpack.c.b16 %v2565, %v2565
        %v2598 = vpack.c.b16 %v2566, %v2566
        %v2599 = vpack.c.b16 %v2567, %v2567
        %v2600 = vpack.c.b16 %v2568, %v2568
        %v2601 = vpack.c.b16 %v2569, %v2569
        %v2602 = vpack.c.b16 %v2570, %v2570
        %v2603 = vpack.c.b16 %v2571, %v2571
        %v2604 = vpack.c.b16 %v2572, %v2572
        %v2605 = vpack.c.b16 %v2573, %v2573
        %v2606 = vpack.c.b16 %v2574, %v2574
        %v2607 = vpack.c.b16 %v2575, %v2575
        %v2608 = vpack.c.b16 %v2576, %v2576
        %v2609 = vpack.c.b16 %v2577, %v2577
        %v2610 = vpack.c.b16 %v2578, %v2578
        %v2611 = vpack.c.b16 %v2579, %v2579
        %v2612 = vpack.c.b16 %v2580, %v2580
        %2645 = vst [vmem:[%s177] sm:$0xf] %v2581
        %2646 = vst [vmem:[%s177 + $0x4] sm:$0xf] %v2582
        %2647 = vst [vmem:[%s177 + $0x8] sm:$0xf] %v2583
        %2648 = vst [vmem:[%s177 + $0xc] sm:$0xf] %v2584
        %2649 = vst [vmem:[%s177 + $0x10] sm:$0xf] %v2585
        %2650 = vst [vmem:[%s177 + $0x14] sm:$0xf] %v2586
        %2651 = vst [vmem:[%s177 + $0x18] sm:$0xf] %v2587
        %2652 = vst [vmem:[%s177 + $0x1c] sm:$0xf] %v2588
        %2653 = vst [vmem:[%s177 + $0x20] sm:$0xf] %v2589
        %2654 = vst [vmem:[%s177 + $0x24] sm:$0xf] %v2590
        %2655 = vst [vmem:[%s177 + $0x28] sm:$0xf] %v2591
        %2656 = vst [vmem:[%s177 + $0x2c] sm:$0xf] %v2592
        %2657 = vst [vmem:[%s177 + $0x30] sm:$0xf] %v2593
        %2658 = vst [vmem:[%s177 + $0x34] sm:$0xf] %v2594
        %2659 = vst [vmem:[%s177 + $0x38] sm:$0xf] %v2595
        %2660 = vst [vmem:[%s177 + $0x3c] sm:$0xf] %v2596
        %2661 = vst [vmem:[%s177 + $0x40] sm:$0xf] %v2597
        %2662 = vst [vmem:[%s177 + $0x44] sm:$0xf] %v2598
        %2663 = vst [vmem:[%s177 + $0x48] sm:$0xf] %v2599
        %2664 = vst [vmem:[%s177 + $0x4c] sm:$0xf] %v2600
        %2665 = vst [vmem:[%s177 + $0x50] sm:$0xf] %v2601
        %2666 = vst [vmem:[%s177 + $0x54] sm:$0xf] %v2602
        %2667 = vst [vmem:[%s177 + $0x58] sm:$0xf] %v2603
        %2668 = vst [vmem:[%s177 + $0x5c] sm:$0xf] %v2604
        %2669 = vst [vmem:[%s177 + $0x60] sm:$0xf] %v2605
        %2670 = vst [vmem:[%s177 + $0x64] sm:$0xf] %v2606
        %2671 = vst [vmem:[%s177 + $0x68] sm:$0xf] %v2607
        %2672 = vst [vmem:[%s177 + $0x6c] sm:$0xf] %v2608
        %2673 = vst [vmem:[%s177 + $0x70] sm:$0xf] %v2609
        %2674 = vst [vmem:[%s177 + $0x74] sm:$0xf] %v2610
        %2675 = vst [vmem:[%s177 + $0x78] sm:$0xf] %v2611
        %2676 = vst [vmem:[%s177 + $0x7c] sm:$0xf] %v2612
        %s2677 = sand.u32 %s90, 1
        %s2678 = sand.u32 %s90, 1
        %s2679 = smul.addr %s2678, 128
        %s2680 = scalar_lea.vmem [#allocation2], %s2679
        // Predicated region
        $region33: #{_lambda_.6} parent=31 // pred_check
          %p2681 = pneg %p100
        $region34: #{_lambda_.6} parent=31 // pred_check_branch
          %2683 = sbr.rel (%p2681) target = $region36
        $region35: #{_lambda_.6} parent=31 // pred_region
          %s2684 = smul.u32 32, %s14
          %s2685 = ssub.s32 37, %s2684
          %p2686 = scmp.lt.s32.totalorder %s2685, 32
          %s2687 = scalar_select %p2686, %s2685, 32
          %s2688 = smul.u32 64, %s2687
          %p2689 = scmp.ne.s32.totalorder 0, %s2688
          %s2690 = smul.addr %s2684, 4
          %s2691 = scalar_lea.vmem %s3, %s2690
          // Predicated region
          $region37: #{_lambda_.6} parent=35 // pred_check
            %p2692 = pneg %p2689
          $region38: #{_lambda_.6} parent=35 // pred_check_branch
            %2694 = sbr.rel (%p2692) target = $region40
          $region39: #{_lambda_.6} parent=35 // pred_region
            // Predicated region
            $region41: #{_lambda_.6} parent=39 // pred_check
              _
            $region42: #{_lambda_.6} parent=39 // pred_check_branch
              %2696 = sbr.rel target = $region44
            $region43: #{_lambda_.6} parent=39 // pred_region
              // Predicated region
              $region63: #{_lambda_.6} parent=43 // pred_check
                _
              $region64: #{_lambda_.6} parent=43 // pred_check_branch
                %2808 = sbr.rel (0) target = $region66
              $region65: #{_lambda_.6} parent=43 // pred_region
                %s2810 = ssub.s32 16, 1
                %s2811 = sshrl.u32 %s2687, 5
                // While loop
                $region67: #{_lambda_.6} parent=65 // loop_pre_header
                  _
                $region68: #{_lambda_.6} parent=65 // loop_header
                  %s2813 = sphi 0, %s2815
                  %p2814 = scmp.ge.s32.totalorder %s2813, %s2811
                  %s2818 = sphi 0, %s2887
                  %s2819 = sphi %s2680, %s2890
                  %s2820 = sphi %s2691, %s2891
                $region69: #{_lambda_.6} parent=65 // loop_header_branch
                  %2817 = sbr.rel (%p2814) target = $region73
                $region70: #{_lambda_.6} parent=65 // loop_body
                  %v2821 = vld [vmem:[%s2819] sm:%s2810]
                  %2822 = vst [vmem:[%s2820] sm:%s2810] %v2821
                  %v2823 = vld [vmem:[%s2819 + $0x4] sm:%s2810]
                  %2824 = vst [vmem:[%s2820 + $0x4] sm:%s2810] %v2823
                  %v2825 = vld [vmem:[%s2819 + $0x8] sm:%s2810]
                  %2826 = vst [vmem:[%s2820 + $0x8] sm:%s2810] %v2825
                  %v2827 = vld [vmem:[%s2819 + $0xc] sm:%s2810]
                  %2828 = vst [vmem:[%s2820 + $0xc] sm:%s2810] %v2827
                  %v2829 = vld [vmem:[%s2819 + $0x10] sm:%s2810]
                  %2830 = vst [vmem:[%s2820 + $0x10] sm:%s2810] %v2829
                  %v2831 = vld [vmem:[%s2819 + $0x14] sm:%s2810]
                  %2832 = vst [vmem:[%s2820 + $0x14] sm:%s2810] %v2831
                  %v2833 = vld [vmem:[%s2819 + $0x18] sm:%s2810]
                  %2834 = vst [vmem:[%s2820 + $0x18] sm:%s2810] %v2833
                  %v2835 = vld [vmem:[%s2819 + $0x1c] sm:%s2810]
                  %2836 = vst [vmem:[%s2820 + $0x1c] sm:%s2810] %v2835
                  %v2837 = vld [vmem:[%s2819 + $0x20] sm:%s2810]
                  %2838 = vst [vmem:[%s2820 + $0x20] sm:%s2810] %v2837
                  %v2839 = vld [vmem:[%s2819 + $0x24] sm:%s2810]
                  %2840 = vst [vmem:[%s2820 + $0x24] sm:%s2810] %v2839
                  %v2841 = vld [vmem:[%s2819 + $0x28] sm:%s2810]
                  %2842 = vst [vmem:[%s2820 + $0x28] sm:%s2810] %v2841
                  %v2843 = vld [vmem:[%s2819 + $0x2c] sm:%s2810]
                  %2844 = vst [vmem:[%s2820 + $0x2c] sm:%s2810] %v2843
                  %v2845 = vld [vmem:[%s2819 + $0x30] sm:%s2810]
                  %2846 = vst [vmem:[%s2820 + $0x30] sm:%s2810] %v2845
                  %v2847 = vld [vmem:[%s2819 + $0x34] sm:%s2810]
                  %2848 = vst [vmem:[%s2820 + $0x34] sm:%s2810] %v2847
                  %v2849 = vld [vmem:[%s2819 + $0x38] sm:%s2810]
                  %2850 = vst [vmem:[%s2820 + $0x38] sm:%s2810] %v2849
                  %v2851 = vld [vmem:[%s2819 + $0x3c] sm:%s2810]
                  %2852 = vst [vmem:[%s2820 + $0x3c] sm:%s2810] %v2851
                  %v2853 = vld [vmem:[%s2819 + $0x40] sm:%s2810]
                  %2854 = vst [vmem:[%s2820 + $0x40] sm:%s2810] %v2853
                  %v2855 = vld [vmem:[%s2819 + $0x44] sm:%s2810]
                  %2856 = vst [vmem:[%s2820 + $0x44] sm:%s2810] %v2855
                  %v2857 = vld [vmem:[%s2819 + $0x48] sm:%s2810]
                  %2858 = vst [vmem:[%s2820 + $0x48] sm:%s2810] %v2857
                  %v2859 = vld [vmem:[%s2819 + $0x4c] sm:%s2810]
                  %2860 = vst [vmem:[%s2820 + $0x4c] sm:%s2810] %v2859
                  %v2861 = vld [vmem:[%s2819 + $0x50] sm:%s2810]
                  %2862 = vst [vmem:[%s2820 + $0x50] sm:%s2810] %v2861
                  %v2863 = vld [vmem:[%s2819 + $0x54] sm:%s2810]
                  %2864 = vst [vmem:[%s2820 + $0x54] sm:%s2810] %v2863
                  %v2865 = vld [vmem:[%s2819 + $0x58] sm:%s2810]
                  %2866 = vst [vmem:[%s2820 + $0x58] sm:%s2810] %v2865
                  %v2867 = vld [vmem:[%s2819 + $0x5c] sm:%s2810]
                  %2868 = vst [vmem:[%s2820 + $0x5c] sm:%s2810] %v2867
                  %v2869 = vld [vmem:[%s2819 + $0x60] sm:%s2810]
                  %2870 = vst [vmem:[%s2820 + $0x60] sm:%s2810] %v2869
                  %v2871 = vld [vmem:[%s2819 + $0x64] sm:%s2810]
                  %2872 = vst [vmem:[%s2820 + $0x64] sm:%s2810] %v2871
                  %v2873 = vld [vmem:[%s2819 + $0x68] sm:%s2810]
                  %2874 = vst [vmem:[%s2820 + $0x68] sm:%s2810] %v2873
                  %v2875 = vld [vmem:[%s2819 + $0x6c] sm:%s2810]
                  %2876 = vst [vmem:[%s2820 + $0x6c] sm:%s2810] %v2875
                  %v2877 = vld [vmem:[%s2819 + $0x70] sm:%s2810]
                  %2878 = vst [vmem:[%s2820 + $0x70] sm:%s2810] %v2877
                  %v2879 = vld [vmem:[%s2819 + $0x74] sm:%s2810]
                  %2880 = vst [vmem:[%s2820 + $0x74] sm:%s2810] %v2879
                  %v2881 = vld [vmem:[%s2819 + $0x78] sm:%s2810]
                  %2882 = vst [vmem:[%s2820 + $0x78] sm:%s2810] %v2881
                  %v2883 = vld [vmem:[%s2819 + $0x7c] sm:%s2810]
                  %2884 = vst [vmem:[%s2820 + $0x7c] sm:%s2810] %v2883
                  %s2885 = sadd.s32 1, %s2818
                  %p2886 = scmp.ge.s32.totalorder %s2885, %s2811
                  %s2887 = scalar_select %p2886, 0, %s2885
                  %s2888 = smul.u32 %s2887, 128
                  %s2889 = smul.u32 %s2887, 128
                  %s2890 = scalar_lea.vmem %s2680, %s2888 [#allocation2]
                  %s2891 = scalar_lea.vmem %s2691, %s2889
                $region71: #{_lambda_.6} parent=65 // loop_footer
                  %s2815 = sadd.s32 %s2813, 1
                $region72: #{_lambda_.6} parent=65 // loop_footer_branch
                  %2812 = sbr.rel target = $region68
                $region73: #{_lambda_.6} parent=65 // loop_exit
                  _
                %s2892 = sshrl.u32 %s2687, 5
                %s2893 = sand.u32 %s2687, 31
                %s2894 = smul.u32 %s2892, 32
                %s2895 = smul.u32 4, %s2894
                %s2896 = scalar_lea.vmem %s2680, %s2895 [#allocation2]
                %s2897 = smul.u32 4, %s2894
                %s2898 = scalar_lea.vmem %s2691, %s2897
                // While loop
                $region74: #{_lambda_.6} parent=65 // loop_pre_header
                  _
                $region75: #{_lambda_.6} parent=65 // loop_header
                  %s2900 = sphi 0, %s2902
                  %p2901 = scmp.ge.s32.totalorder %s2900, %s2893
                  %s2905 = sphi 0, %s2912
                  %s2906 = sphi %s2896, %s2915
                  %s2907 = sphi %s2898, %s2916
                $region76: #{_lambda_.6} parent=65 // loop_header_branch
                  %2904 = sbr.rel (%p2901) target = $region80
                $region77: #{_lambda_.6} parent=65 // loop_body
                  %v2908 = vld [vmem:[%s2906] sm:%s2810]
                  %2909 = vst [vmem:[%s2907] sm:%s2810] %v2908
                  %s2910 = sadd.s32 1, %s2905
                  %p2911 = scmp.ge.s32.totalorder %s2910, %s2893
                  %s2912 = scalar_select %p2911, 0, %s2910
                  %s2913 = smul.u32 %s2912, 4
                  %s2914 = smul.u32 %s2912, 4
                  %s2915 = scalar_lea.vmem %s2896, %s2913 [#allocation2]
                  %s2916 = scalar_lea.vmem %s2898, %s2914
                $region78: #{_lambda_.6} parent=65 // loop_footer
                  %s2902 = sadd.s32 %s2900, 1
                $region79: #{_lambda_.6} parent=65 // loop_footer_branch
                  %2899 = sbr.rel target = $region75
                $region80: #{_lambda_.6} parent=65 // loop_exit
                  _
              $region66: #{_lambda_.6} parent=43 // pred_fallthru
                _
            $region44: #{_lambda_.6} parent=39 // pred_fallthru
              _
            // Predicated region
            $region45: #{_lambda_.6} parent=39 // pred_check
              _
            $region46: #{_lambda_.6} parent=39 // pred_check_branch
              %2698 = sbr.rel (0) target = $region48
            $region47: #{_lambda_.6} parent=39 // pred_region
              %s2700 = ssub.s32 16, 1
              %s2701 = sshrl.u32 %s2687, 5
              // While loop
              $region49: #{_lambda_.6} parent=47 // loop_pre_header
                _
              $region50: #{_lambda_.6} parent=47 // loop_header
                %s2703 = sphi 0, %s2705
                %p2704 = scmp.ge.s32.totalorder %s2703, %s2701
                %s2708 = sphi 0, %s2777
                %s2709 = sphi %s2680, %s2780
                %s2710 = sphi %s2691, %s2781
              $region51: #{_lambda_.6} parent=47 // loop_header_branch
                %2707 = sbr.rel (%p2704) target = $region55
              $region52: #{_lambda_.6} parent=47 // loop_body
                %v2711 = vld [vmem:[%s2709] sm:%s2700]
                %2712 = vst [vmem:[%s2710] sm:%s2700] %v2711
                %v2713 = vld [vmem:[%s2709 + $0x4] sm:%s2700]
                %2714 = vst [vmem:[%s2710 + $0x4] sm:%s2700] %v2713
                %v2715 = vld [vmem:[%s2709 + $0x8] sm:%s2700]
                %2716 = vst [vmem:[%s2710 + $0x8] sm:%s2700] %v2715
                %v2717 = vld [vmem:[%s2709 + $0xc] sm:%s2700]
                %2718 = vst [vmem:[%s2710 + $0xc] sm:%s2700] %v2717
                %v2719 = vld [vmem:[%s2709 + $0x10] sm:%s2700]
                %2720 = vst [vmem:[%s2710 + $0x10] sm:%s2700] %v2719
                %v2721 = vld [vmem:[%s2709 + $0x14] sm:%s2700]
                %2722 = vst [vmem:[%s2710 + $0x14] sm:%s2700] %v2721
                %v2723 = vld [vmem:[%s2709 + $0x18] sm:%s2700]
                %2724 = vst [vmem:[%s2710 + $0x18] sm:%s2700] %v2723
                %v2725 = vld [vmem:[%s2709 + $0x1c] sm:%s2700]
                %2726 = vst [vmem:[%s2710 + $0x1c] sm:%s2700] %v2725
                %v2727 = vld [vmem:[%s2709 + $0x20] sm:%s2700]
                %2728 = vst [vmem:[%s2710 + $0x20] sm:%s2700] %v2727
                %v2729 = vld [vmem:[%s2709 + $0x24] sm:%s2700]
                %2730 = vst [vmem:[%s2710 + $0x24] sm:%s2700] %v2729
                %v2731 = vld [vmem:[%s2709 + $0x28] sm:%s2700]
                %2732 = vst [vmem:[%s2710 + $0x28] sm:%s2700] %v2731
                %v2733 = vld [vmem:[%s2709 + $0x2c] sm:%s2700]
                %2734 = vst [vmem:[%s2710 + $0x2c] sm:%s2700] %v2733
                %v2735 = vld [vmem:[%s2709 + $0x30] sm:%s2700]
                %2736 = vst [vmem:[%s2710 + $0x30] sm:%s2700] %v2735
                %v2737 = vld [vmem:[%s2709 + $0x34] sm:%s2700]
                %2738 = vst [vmem:[%s2710 + $0x34] sm:%s2700] %v2737
                %v2739 = vld [vmem:[%s2709 + $0x38] sm:%s2700]
                %2740 = vst [vmem:[%s2710 + $0x38] sm:%s2700] %v2739
                %v2741 = vld [vmem:[%s2709 + $0x3c] sm:%s2700]
                %2742 = vst [vmem:[%s2710 + $0x3c] sm:%s2700] %v2741
                %v2743 = vld [vmem:[%s2709 + $0x40] sm:%s2700]
                %2744 = vst [vmem:[%s2710 + $0x40] sm:%s2700] %v2743
                %v2745 = vld [vmem:[%s2709 + $0x44] sm:%s2700]
                %2746 = vst [vmem:[%s2710 + $0x44] sm:%s2700] %v2745
                %v2747 = vld [vmem:[%s2709 + $0x48] sm:%s2700]
                %2748 = vst [vmem:[%s2710 + $0x48] sm:%s2700] %v2747
                %v2749 = vld [vmem:[%s2709 + $0x4c] sm:%s2700]
                %2750 = vst [vmem:[%s2710 + $0x4c] sm:%s2700] %v2749
                %v2751 = vld [vmem:[%s2709 + $0x50] sm:%s2700]
                %2752 = vst [vmem:[%s2710 + $0x50] sm:%s2700] %v2751
                %v2753 = vld [vmem:[%s2709 + $0x54] sm:%s2700]
                %2754 = vst [vmem:[%s2710 + $0x54] sm:%s2700] %v2753
                %v2755 = vld [vmem:[%s2709 + $0x58] sm:%s2700]
                %2756 = vst [vmem:[%s2710 + $0x58] sm:%s2700] %v2755
                %v2757 = vld [vmem:[%s2709 + $0x5c] sm:%s2700]
                %2758 = vst [vmem:[%s2710 + $0x5c] sm:%s2700] %v2757
                %v2759 = vld [vmem:[%s2709 + $0x60] sm:%s2700]
                %2760 = vst [vmem:[%s2710 + $0x60] sm:%s2700] %v2759
                %v2761 = vld [vmem:[%s2709 + $0x64] sm:%s2700]
                %2762 = vst [vmem:[%s2710 + $0x64] sm:%s2700] %v2761
                %v2763 = vld [vmem:[%s2709 + $0x68] sm:%s2700]
                %2764 = vst [vmem:[%s2710 + $0x68] sm:%s2700] %v2763
                %v2765 = vld [vmem:[%s2709 + $0x6c] sm:%s2700]
                %2766 = vst [vmem:[%s2710 + $0x6c] sm:%s2700] %v2765
                %v2767 = vld [vmem:[%s2709 + $0x70] sm:%s2700]
                %2768 = vst [vmem:[%s2710 + $0x70] sm:%s2700] %v2767
                %v2769 = vld [vmem:[%s2709 + $0x74] sm:%s2700]
                %2770 = vst [vmem:[%s2710 + $0x74] sm:%s2700] %v2769
                %v2771 = vld [vmem:[%s2709 + $0x78] sm:%s2700]
                %2772 = vst [vmem:[%s2710 + $0x78] sm:%s2700] %v2771
                %v2773 = vld [vmem:[%s2709 + $0x7c] sm:%s2700]
                %2774 = vst [vmem:[%s2710 + $0x7c] sm:%s2700] %v2773
                %s2775 = sadd.s32 1, %s2708
                %p2776 = scmp.ge.s32.totalorder %s2775, %s2701
                %s2777 = scalar_select %p2776, 0, %s2775
                %s2778 = smul.u32 %s2777, 128
                %s2779 = smul.u32 %s2777, 128
                %s2780 = scalar_lea.vmem %s2680, %s2778 [#allocation2]
                %s2781 = scalar_lea.vmem %s2691, %s2779
              $region53: #{_lambda_.6} parent=47 // loop_footer
                %s2705 = sadd.s32 %s2703, 1
              $region54: #{_lambda_.6} parent=47 // loop_footer_branch
                %2702 = sbr.rel target = $region50
              $region55: #{_lambda_.6} parent=47 // loop_exit
                _
              %s2782 = sshrl.u32 %s2687, 5
              %s2783 = sand.u32 %s2687, 31
              %s2784 = smul.u32 %s2782, 32
              %s2785 = smul.u32 4, %s2784
              %s2786 = scalar_lea.vmem %s2680, %s2785 [#allocation2]
              %s2787 = smul.u32 4, %s2784
              %s2788 = scalar_lea.vmem %s2691, %s2787
              // While loop
              $region56: #{_lambda_.6} parent=47 // loop_pre_header
                _
              $region57: #{_lambda_.6} parent=47 // loop_header
                %s2790 = sphi 0, %s2792
                %p2791 = scmp.ge.s32.totalorder %s2790, %s2783
                %s2795 = sphi 0, %s2802
                %s2796 = sphi %s2786, %s2805
                %s2797 = sphi %s2788, %s2806
              $region58: #{_lambda_.6} parent=47 // loop_header_branch
                %2794 = sbr.rel (%p2791) target = $region62
              $region59: #{_lambda_.6} parent=47 // loop_body
                %v2798 = vld [vmem:[%s2796] sm:%s2700]
                %2799 = vst [vmem:[%s2797] sm:%s2700] %v2798
                %s2800 = sadd.s32 1, %s2795
                %p2801 = scmp.ge.s32.totalorder %s2800, %s2783
                %s2802 = scalar_select %p2801, 0, %s2800
                %s2803 = smul.u32 %s2802, 4
                %s2804 = smul.u32 %s2802, 4
                %s2805 = scalar_lea.vmem %s2786, %s2803 [#allocation2]
                %s2806 = scalar_lea.vmem %s2788, %s2804
              $region60: #{_lambda_.6} parent=47 // loop_footer
                %s2792 = sadd.s32 %s2790, 1
              $region61: #{_lambda_.6} parent=47 // loop_footer_branch
                %2789 = sbr.rel target = $region57
              $region62: #{_lambda_.6} parent=47 // loop_exit
                _
            $region48: #{_lambda_.6} parent=39 // pred_fallthru
              _
          $region40: #{_lambda_.6} parent=35 // pred_fallthru
            _
          %2917 = vnop
        $region36: #{_lambda_.6} parent=31 // pred_fallthru
          _
      $region32: #{_lambda_.6} parent=5 // pred_fallthru
        _
      %p2918 = scmp.le.s32.totalorder 2, %s9
      // Predicated region
      $region81: #{_lambda_.6} parent=5 // pred_check
        %p2919 = pneg %p2918
      $region82: #{_lambda_.6} parent=5 // pred_check_branch
        %2921 = sbr.rel (%p2919) target = $region84
      $region83: #{_lambda_.6} parent=5 // pred_region
        %s2922 = ssub.s32 %s9, 2
        // Predicated region
        $region85: #{_lambda_.6} parent=83 // pred_check
          %p2923 = pneg %p106
        $region86: #{_lambda_.6} parent=83 // pred_check_branch
          %2925 = sbr.rel (%p2923) target = $region88
        $region87: #{_lambda_.6} parent=83 // pred_region
          %s2926 = sand.u32 %s91, 1
          %s2927 = sand.u32 %s91, 1
          %s2928 = smul.addr %s2927, 128
          %s2929 = scalar_lea.vmem [#allocation2], %s2928
        $region88: #{_lambda_.6} parent=83 // pred_fallthru
          _
      $region84: #{_lambda_.6} parent=5 // pred_fallthru
        _
    $region6: #{_lambda_.6} parent=1 // loop_footer
      %s13 = sadd.s32 1, %s9
    $region7: #{_lambda_.6} parent=1 // loop_footer_branch
      %8 = sbr.rel target = $region3
    $region8: #{_lambda_.6} parent=1 // loop_exit
      _

// kernel: _lambda_.9
$region0: #{_lambda_.9}
  #allocation0 [shape = 'u32[]', space=smem, size = 0x4, offset = 0x4, fixed_abs, tag = 'smem constant byte address 0x4 - core index']
  #allocation1 [shape = 'u32[144,128]{1,0:T(1,128)}', space=vmem, size = 0x12000, scoped, tag = 'internal scratch']
  %s0 = inlined_call_operand.vmem [shape: bf16[6,256], index: 0, kind: input, shape index: {}]
  %s1 = inlined_call_operand.vmem [shape: bf16[256,128], index: 1, kind: input, shape index: {}]
  %s2 = inlined_call_operand.vmem [shape: f32[1,128], index: 2, kind: input, shape index: {}]
  %s3 = inlined_call_operand.vmem [shape: bf16[128,128], index: 3, kind: input, shape index: {}]
  %s4 = inlined_call_operand.vmem [shape: f32[1,128], index: 4, kind: input, shape index: {}]
  %s5 = inlined_call_operand.vmem [shape: bf16[128,128], index: 5, kind: input, shape index: {}]
  %s6 = inlined_call_operand.vmem [shape: f32[1,128], index: 6, kind: input, shape index: {}]
  %s7 = inlined_call_operand.vmem [shape: f32[6,128], index: 7, kind: output, shape index: {}]
  %s8 = sld [smem:[#allocation0]]
  $region38: #{_lambda_.9} parent=0
    _
  %s10 = ssub.s32 1, %s8
  %s11 = scalar_select 0, %s10, %s8
  // Predicated region
  $region2: #{_lambda_.9} parent=0 // pred_check
    _
  $region3: #{_lambda_.9} parent=0 // pred_check_branch
    %13 = sbr.rel (0) target = $region5
  $region4: #{_lambda_.9} parent=0 // pred_region
    _
  $region5: #{_lambda_.9} parent=0 // pred_fallthru
    _
  // Predicated region
  $region6: #{_lambda_.9} parent=0 // pred_check
    _
  $region7: #{_lambda_.9} parent=0 // pred_check_branch
    %15 = sbr.rel (0) target = $region9
  $region8: #{_lambda_.9} parent=0 // pred_region
    _
  $region9: #{_lambda_.9} parent=0 // pred_fallthru
    _
  // Predicated region
  $region10: #{_lambda_.9} parent=0 // pred_check
    _
  $region11: #{_lambda_.9} parent=0 // pred_check_branch
    %17 = sbr.rel (0) target = $region13
  $region12: #{_lambda_.9} parent=0 // pred_region
    _
  $region13: #{_lambda_.9} parent=0 // pred_fallthru
    _
  // Predicated region
  $region14: #{_lambda_.9} parent=0 // pred_check
    _
  $region15: #{_lambda_.9} parent=0 // pred_check_branch
    %19 = sbr.rel (0) target = $region17
  $region16: #{_lambda_.9} parent=0 // pred_region
    _
  $region17: #{_lambda_.9} parent=0 // pred_fallthru
    _
  // Predicated region
  $region18: #{_lambda_.9} parent=0 // pred_check
    _
  $region19: #{_lambda_.9} parent=0 // pred_check_branch
    %21 = sbr.rel (0) target = $region21
  $region20: #{_lambda_.9} parent=0 // pred_region
    _
  $region21: #{_lambda_.9} parent=0 // pred_fallthru
    _
  // Predicated region
  $region22: #{_lambda_.9} parent=0 // pred_check
    _
  $region23: #{_lambda_.9} parent=0 // pred_check_branch
    %23 = sbr.rel (0) target = $region25
  $region24: #{_lambda_.9} parent=0 // pred_region
    _
  $region25: #{_lambda_.9} parent=0 // pred_fallthru
    _
  // Predicated region
  $region26: #{_lambda_.9} parent=0 // pred_check
    _
  $region27: #{_lambda_.9} parent=0 // pred_check_branch
    %25 = sbr.rel (0) target = $region29
  $region28: #{_lambda_.9} parent=0 // pred_region
    _
  $region29: #{_lambda_.9} parent=0 // pred_fallthru
    _
  %v27 = vld [vmem:[%s0] sm:$0x77]
  %v28 = vld [vmem:[%s1] sm:$0xf]
  %v29 = vld [vmem:[%s1 + $0x4] sm:$0xf]
  %v30 = vld [vmem:[%s1 + $0x8] sm:$0xf]
  %v31 = vld [vmem:[%s1 + $0xc] sm:$0xf]
  %v32 = vld [vmem:[%s1 + $0x10] sm:$0xf]
  %v33 = vld [vmem:[%s1 + $0x14] sm:$0xf]
  %v34 = vld [vmem:[%s1 + $0x18] sm:$0xf]
  %v35 = vld [vmem:[%s1 + $0x1c] sm:$0xf]
  %v36 = vld [vmem:[%s1 + $0x20] sm:$0xf]
  %v37 = vld [vmem:[%s1 + $0x24] sm:$0xf]
  %v38 = vld [vmem:[%s1 + $0x28] sm:$0xf]
  %v39 = vld [vmem:[%s1 + $0x2c] sm:$0xf]
  %v40 = vld [vmem:[%s1 + $0x30] sm:$0xf]
  %v41 = vld [vmem:[%s1 + $0x34] sm:$0xf]
  %v42 = vld [vmem:[%s1 + $0x38] sm:$0xf]
  %v43 = vld [vmem:[%s1 + $0x3c] sm:$0xf]
  %v44 = vld [vmem:[%s1 + $0x40] sm:$0xf]
  %v45 = vld [vmem:[%s1 + $0x44] sm:$0xf]
  %v46 = vld [vmem:[%s1 + $0x48] sm:$0xf]
  %v47 = vld [vmem:[%s1 + $0x4c] sm:$0xf]
  %v48 = vld [vmem:[%s1 + $0x50] sm:$0xf]
  %v49 = vld [vmem:[%s1 + $0x54] sm:$0xf]
  %v50 = vld [vmem:[%s1 + $0x58] sm:$0xf]
  %v51 = vld [vmem:[%s1 + $0x5c] sm:$0xf]
  %v52 = vld [vmem:[%s1 + $0x60] sm:$0xf]
  %v53 = vld [vmem:[%s1 + $0x64] sm:$0xf]
  %v54 = vld [vmem:[%s1 + $0x68] sm:$0xf]
  %v55 = vld [vmem:[%s1 + $0x6c] sm:$0xf]
  %v56 = vld [vmem:[%s1 + $0x70] sm:$0xf]
  %v57 = vld [vmem:[%s1 + $0x74] sm:$0xf]
  %v58 = vld [vmem:[%s1 + $0x78] sm:$0xf]
  %v59 = vld [vmem:[%s1 + $0x7c] sm:$0xf]
  %v60 = vld [vmem:[%s2] sm:$0x1]
  %v62 = vlaneseq
  %v63 = vshrl.u32 %v62, 7
  %v64 = vsub.s32 0, %v63
  %v65 = vrot.slane %v60, %v64
  %v68 = vunpack.c.l.b16 %v27
  %v69 = vunpack.c.h.b16 %v27
  %v70 = vpack.c.b16 %v68, %v68
  %v71 = vpack.c.b16 %v69, %v69
  %v106 = vunpack.c.l.b16 %v28
  %v107 = vunpack.c.l.b16 %v29
  %v108 = vunpack.c.l.b16 %v30
  %v109 = vunpack.c.l.b16 %v31
  %v110 = vunpack.c.l.b16 %v32
  %v111 = vunpack.c.l.b16 %v33
  %v112 = vunpack.c.l.b16 %v34
  %v113 = vunpack.c.l.b16 %v35
  %v114 = vunpack.c.l.b16 %v36
  %v115 = vunpack.c.l.b16 %v37
  %v116 = vunpack.c.l.b16 %v38
  %v117 = vunpack.c.l.b16 %v39
  %v118 = vunpack.c.l.b16 %v40
  %v119 = vunpack.c.l.b16 %v41
  %v120 = vunpack.c.l.b16 %v42
  %v121 = vunpack.c.l.b16 %v43
  %v122 = vunpack.c.l.b16 %v44
  %v123 = vunpack.c.l.b16 %v45
  %v124 = vunpack.c.l.b16 %v46
  %v125 = vunpack.c.l.b16 %v47
  %v126 = vunpack.c.l.b16 %v48
  %v127 = vunpack.c.l.b16 %v49
  %v128 = vunpack.c.l.b16 %v50
  %v129 = vunpack.c.l.b16 %v51
  %v130 = vunpack.c.l.b16 %v52
  %v131 = vunpack.c.l.b16 %v53
  %v132 = vunpack.c.l.b16 %v54
  %v133 = vunpack.c.l.b16 %v55
  %v134 = vunpack.c.l.b16 %v56
  %v135 = vunpack.c.l.b16 %v57
  %v136 = vunpack.c.l.b16 %v58
  %v137 = vunpack.c.l.b16 %v59
  %v138 = vpack.c.b16 %v107, %v106
  %v139 = vpack.c.b16 %v109, %v108
  %v140 = vpack.c.b16 %v111, %v110
  %v141 = vpack.c.b16 %v113, %v112
  %v142 = vpack.c.b16 %v115, %v114
  %v143 = vpack.c.b16 %v117, %v116
  %v144 = vpack.c.b16 %v119, %v118
  %v145 = vpack.c.b16 %v121, %v120
  %v146 = vpack.c.b16 %v123, %v122
  %v147 = vpack.c.b16 %v125, %v124
  %v148 = vpack.c.b16 %v127, %v126
  %v149 = vpack.c.b16 %v129, %v128
  %v150 = vpack.c.b16 %v131, %v130
  %v151 = vpack.c.b16 %v133, %v132
  %v152 = vpack.c.b16 %v135, %v134
  %v153 = vpack.c.b16 %v137, %v136
  %170 = vmatprep.subr.bf16.mxu0 0
  %171 = vmatpush1.bf16.msra.mxu0 %v145
  %172 = vmatprep.subr.bf16.mxu0 0
  %173 = vmatpush1.bf16.msra.mxu0 %v144
  %174 = vmatprep.subr.bf16.mxu0 0
  %175 = vmatpush1.bf16.msra.mxu0 %v143
  %176 = vmatprep.subr.bf16.mxu0 0
  %177 = vmatpush1.bf16.msra.mxu0 %v142
  %178 = vmatprep.subr.bf16.mxu0 0
  %179 = vmatpush1.bf16.msra.mxu0 %v141
  %180 = vmatprep.subr.bf16.mxu0 0
  %181 = vmatpush1.bf16.msra.mxu0 %v140
  %182 = vmatprep.subr.bf16.mxu0 0
  %183 = vmatpush1.bf16.msra.mxu0 %v139
  %184 = vmatprep.subr.bf16.mxu0 0
  %185 = vmatpush1.bf16.msra.mxu0 %v138
  %186 = vmatprep.subr.bf16.mxu0 0
  %187 = vmatpush2.bf16.msra.mxu0 %v153
  %188 = vmatprep.subr.bf16.mxu0 0
  %189 = vmatpush2.bf16.msra.mxu0 %v152
  %190 = vmatprep.subr.bf16.mxu0 0
  %191 = vmatpush2.bf16.msra.mxu0 %v151
  %192 = vmatprep.subr.bf16.mxu0 0
  %193 = vmatpush2.bf16.msra.mxu0 %v150
  %194 = vmatprep.subr.bf16.mxu0 0
  %195 = vmatpush2.bf16.msra.mxu0 %v149
  %196 = vmatprep.subr.bf16.mxu0 0
  %197 = vmatpush2.bf16.msra.mxu0 %v148
  %198 = vmatprep.subr.bf16.mxu0 0
  %199 = vmatpush2.bf16.msra.mxu0 %v147
  %200 = vmatprep.subr.bf16.mxu0 0
  %201 = vmatpush2.bf16.msra.mxu0 %v146
  %202 = vmatprep.mubr.bf16.mxu0 %v71
  %203 = vmatmul.mubr.bf16.gmra.mxu0 %v70
  %v204 = vpop.f32.mrf.mxu0
  %v205 = vadd.f32 %v65, %v204
  %v206 = vpop.f32.mrf.mxu0
  %v207 = vpop.f32.mrf.mxu0
  %v208 = vpop.f32.mrf.mxu0
  %209 = vdwg.mxu0
  %v210 = vmax.f32 %v205, 0.0
  %v211 = vpack.c.bf16 %v210, %v210
  %v212 = vld [vmem:[%s3] sm:$0xf]
  %v213 = vld [vmem:[%s3 + $0x4] sm:$0xf]
  %v214 = vld [vmem:[%s3 + $0x8] sm:$0xf]
  %v215 = vld [vmem:[%s3 + $0xc] sm:$0xf]
  %v216 = vld [vmem:[%s3 + $0x10] sm:$0xf]
  %v217 = vld [vmem:[%s3 + $0x14] sm:$0xf]
  %v218 = vld [vmem:[%s3 + $0x18] sm:$0xf]
  %v219 = vld [vmem:[%s3 + $0x1c] sm:$0xf]
  %v220 = vld [vmem:[%s3 + $0x20] sm:$0xf]
  %v221 = vld [vmem:[%s3 + $0x24] sm:$0xf]
  %v222 = vld [vmem:[%s3 + $0x28] sm:$0xf]
  %v223 = vld [vmem:[%s3 + $0x2c] sm:$0xf]
  %v224 = vld [vmem:[%s3 + $0x30] sm:$0xf]
  %v225 = vld [vmem:[%s3 + $0x34] sm:$0xf]
  %v226 = vld [vmem:[%s3 + $0x38] sm:$0xf]
  %v227 = vld [vmem:[%s3 + $0x3c] sm:$0xf]
  %v228 = vld [vmem:[%s4] sm:$0x1]
  %v230 = vlaneseq
  %v231 = vshrl.u32 %v230, 7
  %v232 = vsub.s32 0, %v231
  %v233 = vrot.slane %v228, %v232
  %v251 = vunpack.c.l.b16 %v212
  %v252 = vunpack.c.l.b16 %v213
  %v253 = vunpack.c.l.b16 %v214
  %v254 = vunpack.c.l.b16 %v215
  %v255 = vunpack.c.l.b16 %v216
  %v256 = vunpack.c.l.b16 %v217
  %v257 = vunpack.c.l.b16 %v218
  %v258 = vunpack.c.l.b16 %v219
  %v259 = vunpack.c.l.b16 %v220
  %v260 = vunpack.c.l.b16 %v221
  %v261 = vunpack.c.l.b16 %v222
  %v262 = vunpack.c.l.b16 %v223
  %v263 = vunpack.c.l.b16 %v224
  %v264 = vunpack.c.l.b16 %v225
  %v265 = vunpack.c.l.b16 %v226
  %v266 = vunpack.c.l.b16 %v227
  %v267 = vpack.c.b16 %v252, %v251
  %v268 = vpack.c.b16 %v254, %v253
  %v269 = vpack.c.b16 %v256, %v255
  %v270 = vpack.c.b16 %v258, %v257
  %v271 = vpack.c.b16 %v260, %v259
  %v272 = vpack.c.b16 %v262, %v261
  %v273 = vpack.c.b16 %v264, %v263
  %v274 = vpack.c.b16 %v266, %v265
  %283 = vmatprep.subr.bf16.mxu0 0
  %284 = vmatpush1.bf16.msra.mxu0 %v274
  %285 = vmatprep.subr.bf16.mxu0 0
  %286 = vmatpush1.bf16.msra.mxu0 %v273
  %287 = vmatprep.subr.bf16.mxu0 0
  %288 = vmatpush1.bf16.msra.mxu0 %v272
  %289 = vmatprep.subr.bf16.mxu0 0
  %290 = vmatpush1.bf16.msra.mxu0 %v271
  %291 = vmatprep.subr.bf16.mxu0 0
  %292 = vmatpush1.bf16.msra.mxu0 %v270
  %293 = vmatprep.subr.bf16.mxu0 0
  %294 = vmatpush1.bf16.msra.mxu0 %v269
  %295 = vmatprep.subr.bf16.mxu0 0
  %296 = vmatpush1.bf16.msra.mxu0 %v268
  %297 = vmatprep.subr.bf16.mxu0 0
  %298 = vmatpush1.bf16.msra.mxu0 %v267
  %299 = vmatprep.subr.bf16.mxu0 0
  %300 = vmatpush2.bf16.msra.mxu0 0
  %301 = vmatprep.subr.bf16.mxu0 0
  %302 = vmatpush2.bf16.msra.mxu0 0
  %303 = vmatprep.subr.bf16.mxu0 0
  %304 = vmatpush2.bf16.msra.mxu0 0
  %305 = vmatprep.subr.bf16.mxu0 0
  %306 = vmatpush2.bf16.msra.mxu0 0
  %307 = vmatprep.subr.bf16.mxu0 0
  %308 = vmatpush2.bf16.msra.mxu0 0
  %309 = vmatprep.subr.bf16.mxu0 0
  %310 = vmatpush2.bf16.msra.mxu0 0
  %311 = vmatprep.subr.bf16.mxu0 0
  %312 = vmatpush2.bf16.msra.mxu0 0
  %313 = vmatprep.subr.bf16.mxu0 0
  %314 = vmatpush2.bf16.msra.mxu0 0
  %315 = vmatprep.mubr.bf16.mxu0 0
  %316 = vmatmul.mubr.bf16.gmra.mxu0 %v211
  %v317 = vpop.f32.mrf.mxu0
  %v318 = vadd.f32 %v233, %v317
  %v319 = vpop.f32.mrf.mxu0
  %v320 = vpop.f32.mrf.mxu0
  %v321 = vpop.f32.mrf.mxu0
  %322 = vdwg.mxu0
  %v323 = vmax.f32 %v318, 0.0
  %v324 = vpack.c.bf16 %v323, %v323
  %v325 = vld [vmem:[%s5] sm:$0xf]
  %v326 = vld [vmem:[%s5 + $0x4] sm:$0xf]
  %v327 = vld [vmem:[%s5 + $0x8] sm:$0xf]
  %v328 = vld [vmem:[%s5 + $0xc] sm:$0xf]
  %v329 = vld [vmem:[%s5 + $0x10] sm:$0xf]
  %v330 = vld [vmem:[%s5 + $0x14] sm:$0xf]
  %v331 = vld [vmem:[%s5 + $0x18] sm:$0xf]
  %v332 = vld [vmem:[%s5 + $0x1c] sm:$0xf]
  %v333 = vld [vmem:[%s5 + $0x20] sm:$0xf]
  %v334 = vld [vmem:[%s5 + $0x24] sm:$0xf]
  %v335 = vld [vmem:[%s5 + $0x28] sm:$0xf]
  %v336 = vld [vmem:[%s5 + $0x2c] sm:$0xf]
  %v337 = vld [vmem:[%s5 + $0x30] sm:$0xf]
  %v338 = vld [vmem:[%s5 + $0x34] sm:$0xf]
  %v339 = vld [vmem:[%s5 + $0x38] sm:$0xf]
  %v340 = vld [vmem:[%s5 + $0x3c] sm:$0xf]
  %v341 = vld [vmem:[%s6] sm:$0x1]
  %v343 = vlaneseq
  %v344 = vshrl.u32 %v343, 7
  %v345 = vsub.s32 0, %v344
  %v346 = vrot.slane %v341, %v345
  %v364 = vunpack.c.l.b16 %v325
  %v365 = vunpack.c.l.b16 %v326
  %v366 = vunpack.c.l.b16 %v327
  %v367 = vunpack.c.l.b16 %v328
  %v368 = vunpack.c.l.b16 %v329
  %v369 = vunpack.c.l.b16 %v330
  %v370 = vunpack.c.l.b16 %v331
  %v371 = vunpack.c.l.b16 %v332
  %v372 = vunpack.c.l.b16 %v333
  %v373 = vunpack.c.l.b16 %v334
  %v374 = vunpack.c.l.b16 %v335
  %v375 = vunpack.c.l.b16 %v336
  %v376 = vunpack.c.l.b16 %v337
  %v377 = vunpack.c.l.b16 %v338
  %v378 = vunpack.c.l.b16 %v339
  %v379 = vunpack.c.l.b16 %v340
  %v380 = vpack.c.b16 %v365, %v364
  %v381 = vpack.c.b16 %v367, %v366
  %v382 = vpack.c.b16 %v369, %v368
  %v383 = vpack.c.b16 %v371, %v370
  %v384 = vpack.c.b16 %v373, %v372
  %v385 = vpack.c.b16 %v375, %v374
  %v386 = vpack.c.b16 %v377, %v376
  %v387 = vpack.c.b16 %v379, %v378
  %396 = vmatprep.subr.bf16.mxu0 0
  %397 = vmatpush1.bf16.msra.mxu0 %v387
  %398 = vmatprep.subr.bf16.mxu0 0
  %399 = vmatpush1.bf16.msra.mxu0 %v386
  %400 = vmatprep.subr.bf16.mxu0 0
  %401 = vmatpush1.bf16.msra.mxu0 %v385
  %402 = vmatprep.subr.bf16.mxu0 0
  %403 = vmatpush1.bf16.msra.mxu0 %v384
  %404 = vmatprep.subr.bf16.mxu0 0
  %405 = vmatpush1.bf16.msra.mxu0 %v383
  %406 = vmatprep.subr.bf16.mxu0 0
  %407 = vmatpush1.bf16.msra.mxu0 %v382
  %408 = vmatprep.subr.bf16.mxu0 0
  %409 = vmatpush1.bf16.msra.mxu0 %v381
  %410 = vmatprep.subr.bf16.mxu0 0
  %411 = vmatpush1.bf16.msra.mxu0 %v380
  %412 = vmatprep.subr.bf16.mxu0 0
  %413 = vmatpush2.bf16.msra.mxu0 0
  %414 = vmatprep.subr.bf16.mxu0 0
  %415 = vmatpush2.bf16.msra.mxu0 0
  %416 = vmatprep.subr.bf16.mxu0 0
  %417 = vmatpush2.bf16.msra.mxu0 0
  %418 = vmatprep.subr.bf16.mxu0 0
  %419 = vmatpush2.bf16.msra.mxu0 0
  %420 = vmatprep.subr.bf16.mxu0 0
  %421 = vmatpush2.bf16.msra.mxu0 0
  %422 = vmatprep.subr.bf16.mxu0 0
  %423 = vmatpush2.bf16.msra.mxu0 0
  %424 = vmatprep.subr.bf16.mxu0 0
  %425 = vmatpush2.bf16.msra.mxu0 0
  %426 = vmatprep.subr.bf16.mxu0 0
  %427 = vmatpush2.bf16.msra.mxu0 0
  %428 = vmatprep.mubr.bf16.mxu0 0
  %429 = vmatmul.mubr.bf16.gmra.mxu0 %v324
  %v430 = vpop.f32.mrf.mxu0
  %v431 = vadd.f32 %v346, %v430
  %v432 = vpop.f32.mrf.mxu0
  %v433 = vpop.f32.mrf.mxu0
  %v434 = vpop.f32.mrf.mxu0
  %435 = vdwg.mxu0
  %436 = vst [vmem:[%s7] sm:$0x3f] %v431
  // Predicated region
  $region30: #{_lambda_.9} parent=0 // pred_check
    _
  $region31: #{_lambda_.9} parent=0 // pred_check_branch
    %438 = sbr.rel (0) target = $region33
  $region32: #{_lambda_.9} parent=0 // pred_region
    _
  $region33: #{_lambda_.9} parent=0 // pred_fallthru
    _
  // Predicated region
  $region34: #{_lambda_.9} parent=0 // pred_check
    _
  $region35: #{_lambda_.9} parent=0 // pred_check_branch
    %440 = sbr.rel (0) target = $region37
  $region36: #{_lambda_.9} parent=0 // pred_region
    _
  $region37: #{_lambda_.9} parent=0 // pred_fallthru
    _

// kernel: _lambda_.7
$region0: #{_lambda_.7}
  #allocation0 [shape = 'u32[]', space=smem, size = 0x4, offset = 0x4, fixed_abs, tag = 'smem constant byte address 0x4 - core index']
  #allocation1 [shape = 'u32[144,128]{1,0:T(1,128)}', space=vmem, size = 0x12000, scoped, tag = 'internal scratch']
  %s0 = inlined_call_operand.vmem [shape: bf16[54,1152], index: 0, kind: input, shape index: {}]
  %s1 = inlined_call_operand.vmem [shape: bf16[1152,128], index: 1, kind: input, shape index: {}]
  %s2 = inlined_call_operand.vmem [shape: f32[1,128], index: 2, kind: input, shape index: {}]
  %s3 = inlined_call_operand.vmem [shape: bf16[54,128], index: 3, kind: output, shape index: {}]
  %s4 = sld [smem:[#allocation0]]
  $region22: #{_lambda_.7} parent=0
    _
  %s6 = ssub.s32 1, %s4
  %s7 = scalar_select 0, %s6, %s4
  // Predicated region
  $region2: #{_lambda_.7} parent=0 // pred_check
    _
  $region3: #{_lambda_.7} parent=0 // pred_check_branch
    %9 = sbr.rel (0) target = $region5
  $region4: #{_lambda_.7} parent=0 // pred_region
    _
  $region5: #{_lambda_.7} parent=0 // pred_fallthru
    _
  // Predicated region
  $region6: #{_lambda_.7} parent=0 // pred_check
    _
  $region7: #{_lambda_.7} parent=0 // pred_check_branch
    %11 = sbr.rel (0) target = $region9
  $region8: #{_lambda_.7} parent=0 // pred_region
    _
  $region9: #{_lambda_.7} parent=0 // pred_fallthru
    _
  // Predicated region
  $region10: #{_lambda_.7} parent=0 // pred_check
    _
  $region11: #{_lambda_.7} parent=0 // pred_check_branch
    %13 = sbr.rel (0) target = $region13
  $region12: #{_lambda_.7} parent=0 // pred_region
    _
  $region13: #{_lambda_.7} parent=0 // pred_fallthru
    _
  %v15 = vld [vmem:[%s0] sm:$0xff]
  %v16 = vld [vmem:[%s0 + $0x8] sm:$0xff]
  %v17 = vld [vmem:[%s0 + $0x10] sm:$0xff]
  %v18 = vld [vmem:[%s0 + $0x18] sm:$0xff]
  %v19 = vld [vmem:[%s0 + $0x20] sm:$0xf]
  %v20 = vld [vmem:[%s0 + $0x24] sm:$0xff]
  %v21 = vld [vmem:[%s0 + $0x2c] sm:$0xff]
  %v22 = vld [vmem:[%s0 + $0x34] sm:$0xff]
  %v23 = vld [vmem:[%s0 + $0x3c] sm:$0xff]
  %v24 = vld [vmem:[%s0 + $0x44] sm:$0xf]
  %v25 = vld [vmem:[%s0 + $0x48] sm:$0xff]
  %v26 = vld [vmem:[%s0 + $0x50] sm:$0xff]
  %v27 = vld [vmem:[%s0 + $0x58] sm:$0xff]
  %v28 = vld [vmem:[%s0 + $0x60] sm:$0xff]
  %v29 = vld [vmem:[%s0 + $0x68] sm:$0xf]
  %v30 = vld [vmem:[%s0 + $0x6c] sm:$0xff]
  %v31 = vld [vmem:[%s0 + $0x74] sm:$0xff]
  %v32 = vld [vmem:[%s0 + $0x7c] sm:$0xff]
  %v33 = vld [vmem:[%s0 + $0x84] sm:$0xff]
  %v34 = vld [vmem:[%s0 + $0x8c] sm:$0xf]
  %v35 = vld [vmem:[%s0 + $0x90] sm:$0xff]
  %v36 = vld [vmem:[%s0 + $0x98] sm:$0xff]
  %v37 = vld [vmem:[%s0 + $0xa0] sm:$0xff]
  %v38 = vld [vmem:[%s0 + $0xa8] sm:$0xff]
  %v39 = vld [vmem:[%s0 + $0xb0] sm:$0xf]
  %v40 = vld [vmem:[%s0 + $0xb4] sm:$0xff]
  %v41 = vld [vmem:[%s0 + $0xbc] sm:$0xff]
  %v42 = vld [vmem:[%s0 + $0xc4] sm:$0xff]
  %v43 = vld [vmem:[%s0 + $0xcc] sm:$0xff]
  %v44 = vld [vmem:[%s0 + $0xd4] sm:$0xf]
  %v45 = vld [vmem:[%s0 + $0xd8] sm:$0x77]
  %v46 = vld [vmem:[%s0 + $0xe0] sm:$0x77]
  %v47 = vld [vmem:[%s0 + $0xe8] sm:$0x77]
  %v48 = vld [vmem:[%s0 + $0xf0] sm:$0x77]
  %v49 = vld [vmem:[%s0 + $0xf8] sm:$0x7]
  %v50 = vld [vmem:[%s1] sm:$0xf]
  %v51 = vld [vmem:[%s1 + $0x4] sm:$0xf]
  %v52 = vld [vmem:[%s1 + $0x8] sm:$0xf]
  %v53 = vld [vmem:[%s1 + $0xc] sm:$0xf]
  %v54 = vld [vmem:[%s1 + $0x10] sm:$0xf]
  %v55 = vld [vmem:[%s1 + $0x14] sm:$0xf]
  %v56 = vld [vmem:[%s1 + $0x18] sm:$0xf]
  %v57 = vld [vmem:[%s1 + $0x1c] sm:$0xf]
  %v58 = vld [vmem:[%s1 + $0x20] sm:$0xf]
  %v59 = vld [vmem:[%s1 + $0x24] sm:$0xf]
  %v60 = vld [vmem:[%s1 + $0x28] sm:$0xf]
  %v61 = vld [vmem:[%s1 + $0x2c] sm:$0xf]
  %v62 = vld [vmem:[%s1 + $0x30] sm:$0xf]
  %v63 = vld [vmem:[%s1 + $0x34] sm:$0xf]
  %v64 = vld [vmem:[%s1 + $0x38] sm:$0xf]
  %v65 = vld [vmem:[%s1 + $0x3c] sm:$0xf]
  %v66 = vld [vmem:[%s1 + $0x40] sm:$0xf]
  %v67 = vld [vmem:[%s1 + $0x44] sm:$0xf]
  %v68 = vld [vmem:[%s1 + $0x48] sm:$0xf]
  %v69 = vld [vmem:[%s1 + $0x4c] sm:$0xf]
  %v70 = vld [vmem:[%s1 + $0x50] sm:$0xf]
  %v71 = vld [vmem:[%s1 + $0x54] sm:$0xf]
  %v72 = vld [vmem:[%s1 + $0x58] sm:$0xf]
  %v73 = vld [vmem:[%s1 + $0x5c] sm:$0xf]
  %v74 = vld [vmem:[%s1 + $0x60] sm:$0xf]
  %v75 = vld [vmem:[%s1 + $0x64] sm:$0xf]
  %v76 = vld [vmem:[%s1 + $0x68] sm:$0xf]
  %v77 = vld [vmem:[%s1 + $0x6c] sm:$0xf]
  %v78 = vld [vmem:[%s1 + $0x70] sm:$0xf]
  %v79 = vld [vmem:[%s1 + $0x74] sm:$0xf]
  %v80 = vld [vmem:[%s1 + $0x78] sm:$0xf]
  %v81 = vld [vmem:[%s1 + $0x7c] sm:$0xf]
  %v82 = vld [vmem:[%s1 + $0x80] sm:$0xf]
  %v83 = vld [vmem:[%s1 + $0x84] sm:$0xf]
  %v84 = vld [vmem:[%s1 + $0x88] sm:$0xf]
  %v85 = vld [vmem:[%s1 + $0x8c] sm:$0xf]
  %v86 = vld [vmem:[%s1 + $0x90] sm:$0xf]
  %v87 = vld [vmem:[%s1 + $0x94] sm:$0xf]
  %v88 = vld [vmem:[%s1 + $0x98] sm:$0xf]
  %v89 = vld [vmem:[%s1 + $0x9c] sm:$0xf]
  %v90 = vld [vmem:[%s1 + $0xa0] sm:$0xf]
  %v91 = vld [vmem:[%s1 + $0xa4] sm:$0xf]
  %v92 = vld [vmem:[%s1 + $0xa8] sm:$0xf]
  %v93 = vld [vmem:[%s1 + $0xac] sm:$0xf]
  %v94 = vld [vmem:[%s1 + $0xb0] sm:$0xf]
  %v95 = vld [vmem:[%s1 + $0xb4] sm:$0xf]
  %v96 = vld [vmem:[%s1 + $0xb8] sm:$0xf]
  %v97 = vld [vmem:[%s1 + $0xbc] sm:$0xf]
  %v98 = vld [vmem:[%s1 + $0xc0] sm:$0xf]
  %v99 = vld [vmem:[%s1 + $0xc4] sm:$0xf]
  %v100 = vld [vmem:[%s1 + $0xc8] sm:$0xf]
  %v101 = vld [vmem:[%s1 + $0xcc] sm:$0xf]
  %v102 = vld [vmem:[%s1 + $0xd0] sm:$0xf]
  %v103 = vld [vmem:[%s1 + $0xd4] sm:$0xf]
  %v104 = vld [vmem:[%s1 + $0xd8] sm:$0xf]
  %v105 = vld [vmem:[%s1 + $0xdc] sm:$0xf]
  %v106 = vld [vmem:[%s1 + $0xe0] sm:$0xf]
  %v107 = vld [vmem:[%s1 + $0xe4] sm:$0xf]
  %v108 = vld [vmem:[%s1 + $0xe8] sm:$0xf]
  %v109 = vld [vmem:[%s1 + $0xec] sm:$0xf]
  %v110 = vld [vmem:[%s1 + $0xf0] sm:$0xf]
  %v111 = vld [vmem:[%s1 + $0xf4] sm:$0xf]
  %v112 = vld [vmem:[%s1 + $0xf8] sm:$0xf]
  %v113 = vld [vmem:[%s1 + $0xfc] sm:$0xf]
  %v114 = vld [vmem:[%s1 + $0x100] sm:$0xf]
  %v115 = vld [vmem:[%s1 + $0x104] sm:$0xf]
  %v116 = vld [vmem:[%s1 + $0x108] sm:$0xf]
  %v117 = vld [vmem:[%s1 + $0x10c] sm:$0xf]
  %v118 = vld [vmem:[%s1 + $0x110] sm:$0xf]
  %v119 = vld [vmem:[%s1 + $0x114] sm:$0xf]
  %v120 = vld [vmem:[%s1 + $0x118] sm:$0xf]
  %v121 = vld [vmem:[%s1 + $0x11c] sm:$0xf]
  %v122 = vld [vmem:[%s1 + $0x120] sm:$0xf]
  %v123 = vld [vmem:[%s1 + $0x124] sm:$0xf]
  %v124 = vld [vmem:[%s1 + $0x128] sm:$0xf]
  %v125 = vld [vmem:[%s1 + $0x12c] sm:$0xf]
  %v126 = vld [vmem:[%s1 + $0x130] sm:$0xf]
  %v127 = vld [vmem:[%s1 + $0x134] sm:$0xf]
  %v128 = vld [vmem:[%s1 + $0x138] sm:$0xf]
  %v129 = vld [vmem:[%s1 + $0x13c] sm:$0xf]
  %v130 = vld [vmem:[%s1 + $0x140] sm:$0xf]
  %v131 = vld [vmem:[%s1 + $0x144] sm:$0xf]
  %v132 = vld [vmem:[%s1 + $0x148] sm:$0xf]
  %v133 = vld [vmem:[%s1 + $0x14c] sm:$0xf]
  %v134 = vld [vmem:[%s1 + $0x150] sm:$0xf]
  %v135 = vld [vmem:[%s1 + $0x154] sm:$0xf]
  %v136 = vld [vmem:[%s1 + $0x158] sm:$0xf]
  %v137 = vld [vmem:[%s1 + $0x15c] sm:$0xf]
  %v138 = vld [vmem:[%s1 + $0x160] sm:$0xf]
  %v139 = vld [vmem:[%s1 + $0x164] sm:$0xf]
  %v140 = vld [vmem:[%s1 + $0x168] sm:$0xf]
  %v141 = vld [vmem:[%s1 + $0x16c] sm:$0xf]
  %v142 = vld [vmem:[%s1 + $0x170] sm:$0xf]
  %v143 = vld [vmem:[%s1 + $0x174] sm:$0xf]
  %v144 = vld [vmem:[%s1 + $0x178] sm:$0xf]
  %v145 = vld [vmem:[%s1 + $0x17c] sm:$0xf]
  %v146 = vld [vmem:[%s1 + $0x180] sm:$0xf]
  %v147 = vld [vmem:[%s1 + $0x184] sm:$0xf]
  %v148 = vld [vmem:[%s1 + $0x188] sm:$0xf]
  %v149 = vld [vmem:[%s1 + $0x18c] sm:$0xf]
  %v150 = vld [vmem:[%s1 + $0x190] sm:$0xf]
  %v151 = vld [vmem:[%s1 + $0x194] sm:$0xf]
  %v152 = vld [vmem:[%s1 + $0x198] sm:$0xf]
  %v153 = vld [vmem:[%s1 + $0x19c] sm:$0xf]
  %v154 = vld [vmem:[%s1 + $0x1a0] sm:$0xf]
  %v155 = vld [vmem:[%s1 + $0x1a4] sm:$0xf]
  %v156 = vld [vmem:[%s1 + $0x1a8] sm:$0xf]
  %v157 = vld [vmem:[%s1 + $0x1ac] sm:$0xf]
  %v158 = vld [vmem:[%s1 + $0x1b0] sm:$0xf]
  %v159 = vld [vmem:[%s1 + $0x1b4] sm:$0xf]
  %v160 = vld [vmem:[%s1 + $0x1b8] sm:$0xf]
  %v161 = vld [vmem:[%s1 + $0x1bc] sm:$0xf]
  %v162 = vld [vmem:[%s1 + $0x1c0] sm:$0xf]
  %v163 = vld [vmem:[%s1 + $0x1c4] sm:$0xf]
  %v164 = vld [vmem:[%s1 + $0x1c8] sm:$0xf]
  %v165 = vld [vmem:[%s1 + $0x1cc] sm:$0xf]
  %v166 = vld [vmem:[%s1 + $0x1d0] sm:$0xf]
  %v167 = vld [vmem:[%s1 + $0x1d4] sm:$0xf]
  %v168 = vld [vmem:[%s1 + $0x1d8] sm:$0xf]
  %v169 = vld [vmem:[%s1 + $0x1dc] sm:$0xf]
  %v170 = vld [vmem:[%s1 + $0x1e0] sm:$0xf]
  %v171 = vld [vmem:[%s1 + $0x1e4] sm:$0xf]
  %v172 = vld [vmem:[%s1 + $0x1e8] sm:$0xf]
  %v173 = vld [vmem:[%s1 + $0x1ec] sm:$0xf]
  %v174 = vld [vmem:[%s1 + $0x1f0] sm:$0xf]
  %v175 = vld [vmem:[%s1 + $0x1f4] sm:$0xf]
  %v176 = vld [vmem:[%s1 + $0x1f8] sm:$0xf]
  %v177 = vld [vmem:[%s1 + $0x1fc] sm:$0xf]
  %v178 = vld [vmem:[%s1 + $0x200] sm:$0xf]
  %v179 = vld [vmem:[%s1 + $0x204] sm:$0xf]
  %v180 = vld [vmem:[%s1 + $0x208] sm:$0xf]
  %v181 = vld [vmem:[%s1 + $0x20c] sm:$0xf]
  %v182 = vld [vmem:[%s1 + $0x210] sm:$0xf]
  %v183 = vld [vmem:[%s1 + $0x214] sm:$0xf]
  %v184 = vld [vmem:[%s1 + $0x218] sm:$0xf]
  %v185 = vld [vmem:[%s1 + $0x21c] sm:$0xf]
  %v186 = vld [vmem:[%s1 + $0x220] sm:$0xf]
  %v187 = vld [vmem:[%s1 + $0x224] sm:$0xf]
  %v188 = vld [vmem:[%s1 + $0x228] sm:$0xf]
  %v189 = vld [vmem:[%s1 + $0x22c] sm:$0xf]
  %v190 = vld [vmem:[%s1 + $0x230] sm:$0xf]
  %v191 = vld [vmem:[%s1 + $0x234] sm:$0xf]
  %v192 = vld [vmem:[%s1 + $0x238] sm:$0xf]
  %v193 = vld [vmem:[%s1 + $0x23c] sm:$0xf]
  %v194 = vld [vmem:[%s2] sm:$0x1]
  %v196 = vlaneseq
  %v197 = vshrl.u32 %v196, 7
  %v198 = vsub.s32 0, %v197
  %v199 = vrot.slane %v194, %v198
  %v236 = vunpack.c.l.b16 %v15
  %v237 = vunpack.c.h.b16 %v15
  %v238 = vunpack.c.l.b16 %v16
  %v239 = vunpack.c.h.b16 %v16
  %v240 = vunpack.c.l.b16 %v17
  %v241 = vunpack.c.h.b16 %v17
  %v242 = vunpack.c.l.b16 %v18
  %v243 = vunpack.c.h.b16 %v18
  %v244 = vunpack.c.l.b16 %v19
  %v245 = vunpack.c.l.b16 %v20
  %v246 = vunpack.c.h.b16 %v20
  %v247 = vunpack.c.l.b16 %v21
  %v248 = vunpack.c.h.b16 %v21
  %v249 = vunpack.c.l.b16 %v22
  %v250 = vunpack.c.h.b16 %v22
  %v251 = vunpack.c.l.b16 %v23
  %v252 = vunpack.c.h.b16 %v23
  %v253 = vunpack.c.l.b16 %v24
  %v254 = vunpack.c.l.b16 %v25
  %v255 = vunpack.c.h.b16 %v25
  %v256 = vunpack.c.l.b16 %v26
  %v257 = vunpack.c.h.b16 %v26
  %v258 = vunpack.c.l.b16 %v27
  %v259 = vunpack.c.h.b16 %v27
  %v260 = vunpack.c.l.b16 %v28
  %v261 = vunpack.c.h.b16 %v28
  %v262 = vunpack.c.l.b16 %v29
  %v263 = vunpack.c.l.b16 %v30
  %v264 = vunpack.c.h.b16 %v30
  %v265 = vunpack.c.l.b16 %v31
  %v266 = vunpack.c.h.b16 %v31
  %v267 = vunpack.c.l.b16 %v32
  %v268 = vunpack.c.h.b16 %v32
  %v269 = vunpack.c.l.b16 %v33
  %v270 = vunpack.c.h.b16 %v33
  %v271 = vunpack.c.l.b16 %v34
  %v272 = vunpack.c.l.b16 %v35
  %v273 = vunpack.c.h.b16 %v35
  %v274 = vunpack.c.l.b16 %v36
  %v275 = vunpack.c.h.b16 %v36
  %v276 = vunpack.c.l.b16 %v37
  %v277 = vunpack.c.h.b16 %v37
  %v278 = vunpack.c.l.b16 %v38
  %v279 = vunpack.c.h.b16 %v38
  %v280 = vunpack.c.l.b16 %v39
  %v281 = vunpack.c.l.b16 %v40
  %v282 = vunpack.c.h.b16 %v40
  %v283 = vunpack.c.l.b16 %v41
  %v284 = vunpack.c.h.b16 %v41
  %v285 = vunpack.c.l.b16 %v42
  %v286 = vunpack.c.h.b16 %v42
  %v287 = vunpack.c.l.b16 %v43
  %v288 = vunpack.c.h.b16 %v43
  %v289 = vunpack.c.l.b16 %v44
  %v290 = vunpack.c.l.b16 %v45
  %v291 = vunpack.c.h.b16 %v45
  %v292 = vunpack.c.l.b16 %v46
  %v293 = vunpack.c.h.b16 %v46
  %v294 = vunpack.c.l.b16 %v47
  %v295 = vunpack.c.h.b16 %v47
  %v296 = vunpack.c.l.b16 %v48
  %v297 = vunpack.c.h.b16 %v48
  %v298 = vunpack.c.l.b16 %v49
  %v299 = vpack.c.b16 %v245, %v236
  %v300 = vpack.c.b16 %v246, %v237
  %v301 = vpack.c.b16 %v247, %v238
  %v302 = vpack.c.b16 %v248, %v239
  %v303 = vpack.c.b16 %v249, %v240
  %v304 = vpack.c.b16 %v250, %v241
  %v305 = vpack.c.b16 %v251, %v242
  %v306 = vpack.c.b16 %v252, %v243
  %v307 = vpack.c.b16 %v253, %v244
  %v308 = vpack.c.b16 %v263, %v254
  %v309 = vpack.c.b16 %v264, %v255
  %v310 = vpack.c.b16 %v265, %v256
  %v311 = vpack.c.b16 %v266, %v257
  %v312 = vpack.c.b16 %v267, %v258
  %v313 = vpack.c.b16 %v268, %v259
  %v314 = vpack.c.b16 %v269, %v260
  %v315 = vpack.c.b16 %v270, %v261
  %v316 = vpack.c.b16 %v271, %v262
  %v317 = vpack.c.b16 %v281, %v272
  %v318 = vpack.c.b16 %v282, %v273
  %v319 = vpack.c.b16 %v283, %v274
  %v320 = vpack.c.b16 %v284, %v275
  %v321 = vpack.c.b16 %v285, %v276
  %v322 = vpack.c.b16 %v286, %v277
  %v323 = vpack.c.b16 %v287, %v278
  %v324 = vpack.c.b16 %v288, %v279
  %v325 = vpack.c.b16 %v289, %v280
  %v326 = vpack.c.b16 %v290, %v290
  %v327 = vpack.c.b16 %v291, %v291
  %v328 = vpack.c.b16 %v292, %v292
  %v329 = vpack.c.b16 %v293, %v293
  %v330 = vpack.c.b16 %v294, %v294
  %v331 = vpack.c.b16 %v295, %v295
  %v332 = vpack.c.b16 %v296, %v296
  %v333 = vpack.c.b16 %v297, %v297
  %v334 = vpack.c.b16 %v298, %v298
  %v515 = vunpack.c.l.b16 %v50
  %v516 = vunpack.c.l.b16 %v51
  %v517 = vunpack.c.l.b16 %v52
  %v518 = vunpack.c.l.b16 %v53
  %v519 = vunpack.c.l.b16 %v54
  %v520 = vunpack.c.l.b16 %v55
  %v521 = vunpack.c.l.b16 %v56
  %v522 = vunpack.c.l.b16 %v57
  %v523 = vunpack.c.l.b16 %v58
  %v524 = vunpack.c.l.b16 %v59
  %v525 = vunpack.c.l.b16 %v60
  %v526 = vunpack.c.l.b16 %v61
  %v527 = vunpack.c.l.b16 %v62
  %v528 = vunpack.c.l.b16 %v63
  %v529 = vunpack.c.l.b16 %v64
  %v530 = vunpack.c.l.b16 %v65
  %v531 = vunpack.c.l.b16 %v66
  %v532 = vunpack.c.l.b16 %v67
  %v533 = vunpack.c.l.b16 %v68
  %v534 = vunpack.c.l.b16 %v69
  %v535 = vunpack.c.l.b16 %v70
  %v536 = vunpack.c.l.b16 %v71
  %v537 = vunpack.c.l.b16 %v72
  %v538 = vunpack.c.l.b16 %v73
  %v539 = vunpack.c.l.b16 %v74
  %v540 = vunpack.c.l.b16 %v75
  %v541 = vunpack.c.l.b16 %v76
  %v542 = vunpack.c.l.b16 %v77
  %v543 = vunpack.c.l.b16 %v78
  %v544 = vunpack.c.l.b16 %v79
  %v545 = vunpack.c.l.b16 %v80
  %v546 = vunpack.c.l.b16 %v81
  %v547 = vunpack.c.l.b16 %v82
  %v548 = vunpack.c.l.b16 %v83
  %v549 = vunpack.c.l.b16 %v84
  %v550 = vunpack.c.l.b16 %v85
  %v551 = vunpack.c.l.b16 %v86
  %v552 = vunpack.c.l.b16 %v87
  %v553 = vunpack.c.l.b16 %v88
  %v554 = vunpack.c.l.b16 %v89
  %v555 = vunpack.c.l.b16 %v90
  %v556 = vunpack.c.l.b16 %v91
  %v557 = vunpack.c.l.b16 %v92
  %v558 = vunpack.c.l.b16 %v93
  %v559 = vunpack.c.l.b16 %v94
  %v560 = vunpack.c.l.b16 %v95
  %v561 = vunpack.c.l.b16 %v96
  %v562 = vunpack.c.l.b16 %v97
  %v563 = vunpack.c.l.b16 %v98
  %v564 = vunpack.c.l.b16 %v99
  %v565 = vunpack.c.l.b16 %v100
  %v566 = vunpack.c.l.b16 %v101
  %v567 = vunpack.c.l.b16 %v102
  %v568 = vunpack.c.l.b16 %v103
  %v569 = vunpack.c.l.b16 %v104
  %v570 = vunpack.c.l.b16 %v105
  %v571 = vunpack.c.l.b16 %v106
  %v572 = vunpack.c.l.b16 %v107
  %v573 = vunpack.c.l.b16 %v108
  %v574 = vunpack.c.l.b16 %v109
  %v575 = vunpack.c.l.b16 %v110
  %v576 = vunpack.c.l.b16 %v111
  %v577 = vunpack.c.l.b16 %v112
  %v578 = vunpack.c.l.b16 %v113
  %v579 = vunpack.c.l.b16 %v114
  %v580 = vunpack.c.l.b16 %v115
  %v581 = vunpack.c.l.b16 %v116
  %v582 = vunpack.c.l.b16 %v117
  %v583 = vunpack.c.l.b16 %v118
  %v584 = vunpack.c.l.b16 %v119
  %v585 = vunpack.c.l.b16 %v120
  %v586 = vunpack.c.l.b16 %v121
  %v587 = vunpack.c.l.b16 %v122
  %v588 = vunpack.c.l.b16 %v123
  %v589 = vunpack.c.l.b16 %v124
  %v590 = vunpack.c.l.b16 %v125
  %v591 = vunpack.c.l.b16 %v126
  %v592 = vunpack.c.l.b16 %v127
  %v593 = vunpack.c.l.b16 %v128
  %v594 = vunpack.c.l.b16 %v129
  %v595 = vunpack.c.l.b16 %v130
  %v596 = vunpack.c.l.b16 %v131
  %v597 = vunpack.c.l.b16 %v132
  %v598 = vunpack.c.l.b16 %v133
  %v599 = vunpack.c.l.b16 %v134
  %v600 = vunpack.c.l.b16 %v135
  %v601 = vunpack.c.l.b16 %v136
  %v602 = vunpack.c.l.b16 %v137
  %v603 = vunpack.c.l.b16 %v138
  %v604 = vunpack.c.l.b16 %v139
  %v605 = vunpack.c.l.b16 %v140
  %v606 = vunpack.c.l.b16 %v141
  %v607 = vunpack.c.l.b16 %v142
  %v608 = vunpack.c.l.b16 %v143
  %v609 = vunpack.c.l.b16 %v144
  %v610 = vunpack.c.l.b16 %v145
  %v611 = vunpack.c.l.b16 %v146
  %v612 = vunpack.c.l.b16 %v147
  %v613 = vunpack.c.l.b16 %v148
  %v614 = vunpack.c.l.b16 %v149
  %v615 = vunpack.c.l.b16 %v150
  %v616 = vunpack.c.l.b16 %v151
  %v617 = vunpack.c.l.b16 %v152
  %v618 = vunpack.c.l.b16 %v153
  %v619 = vunpack.c.l.b16 %v154
  %v620 = vunpack.c.l.b16 %v155
  %v621 = vunpack.c.l.b16 %v156
  %v622 = vunpack.c.l.b16 %v157
  %v623 = vunpack.c.l.b16 %v158
  %v624 = vunpack.c.l.b16 %v159
  %v625 = vunpack.c.l.b16 %v160
  %v626 = vunpack.c.l.b16 %v161
  %v627 = vunpack.c.l.b16 %v162
  %v628 = vunpack.c.l.b16 %v163
  %v629 = vunpack.c.l.b16 %v164
  %v630 = vunpack.c.l.b16 %v165
  %v631 = vunpack.c.l.b16 %v166
  %v632 = vunpack.c.l.b16 %v167
  %v633 = vunpack.c.l.b16 %v168
  %v634 = vunpack.c.l.b16 %v169
  %v635 = vunpack.c.l.b16 %v170
  %v636 = vunpack.c.l.b16 %v171
  %v637 = vunpack.c.l.b16 %v172
  %v638 = vunpack.c.l.b16 %v173
  %v639 = vunpack.c.l.b16 %v174
  %v640 = vunpack.c.l.b16 %v175
  %v641 = vunpack.c.l.b16 %v176
  %v642 = vunpack.c.l.b16 %v177
  %v643 = vunpack.c.l.b16 %v178
  %v644 = vunpack.c.l.b16 %v179
  %v645 = vunpack.c.l.b16 %v180
  %v646 = vunpack.c.l.b16 %v181
  %v647 = vunpack.c.l.b16 %v182
  %v648 = vunpack.c.l.b16 %v183
  %v649 = vunpack.c.l.b16 %v184
  %v650 = vunpack.c.l.b16 %v185
  %v651 = vunpack.c.l.b16 %v186
  %v652 = vunpack.c.l.b16 %v187
  %v653 = vunpack.c.l.b16 %v188
  %v654 = vunpack.c.l.b16 %v189
  %v655 = vunpack.c.l.b16 %v190
  %v656 = vunpack.c.l.b16 %v191
  %v657 = vunpack.c.l.b16 %v192
  %v658 = vunpack.c.l.b16 %v193
  %v659 = vpack.c.b16 %v516, %v515
  %v660 = vpack.c.b16 %v518, %v517
  %v661 = vpack.c.b16 %v520, %v519
  %v662 = vpack.c.b16 %v522, %v521
  %v663 = vpack.c.b16 %v524, %v523
  %v664 = vpack.c.b16 %v526, %v525
  %v665 = vpack.c.b16 %v528, %v527
  %v666 = vpack.c.b16 %v530, %v529
  %v667 = vpack.c.b16 %v532, %v531
  %v668 = vpack.c.b16 %v534, %v533
  %v669 = vpack.c.b16 %v536, %v535
  %v670 = vpack.c.b16 %v538, %v537
  %v671 = vpack.c.b16 %v540, %v539
  %v672 = vpack.c.b16 %v542, %v541
  %v673 = vpack.c.b16 %v544, %v543
  %v674 = vpack.c.b16 %v546, %v545
  %v675 = vpack.c.b16 %v548, %v547
  %v676 = vpack.c.b16 %v550, %v549
  %v677 = vpack.c.b16 %v552, %v551
  %v678 = vpack.c.b16 %v554, %v553
  %v679 = vpack.c.b16 %v556, %v555
  %v680 = vpack.c.b16 %v558, %v557
  %v681 = vpack.c.b16 %v560, %v559
  %v682 = vpack.c.b16 %v562, %v561
  %v683 = vpack.c.b16 %v564, %v563
  %v684 = vpack.c.b16 %v566, %v565
  %v685 = vpack.c.b16 %v568, %v567
  %v686 = vpack.c.b16 %v570, %v569
  %v687 = vpack.c.b16 %v572, %v571
  %v688 = vpack.c.b16 %v574, %v573
  %v689 = vpack.c.b16 %v576, %v575
  %v690 = vpack.c.b16 %v578, %v577
  %v691 = vpack.c.b16 %v580, %v579
  %v692 = vpack.c.b16 %v582, %v581
  %v693 = vpack.c.b16 %v584, %v583
  %v694 = vpack.c.b16 %v586, %v585
  %v695 = vpack.c.b16 %v588, %v587
  %v696 = vpack.c.b16 %v590, %v589
  %v697 = vpack.c.b16 %v592, %v591
  %v698 = vpack.c.b16 %v594, %v593
  %v699 = vpack.c.b16 %v596, %v595
  %v700 = vpack.c.b16 %v598, %v597
  %v701 = vpack.c.b16 %v600, %v599
  %v702 = vpack.c.b16 %v602, %v601
  %v703 = vpack.c.b16 %v604, %v603
  %v704 = vpack.c.b16 %v606, %v605
  %v705 = vpack.c.b16 %v608, %v607
  %v706 = vpack.c.b16 %v610, %v609
  %v707 = vpack.c.b16 %v612, %v611
  %v708 = vpack.c.b16 %v614, %v613
  %v709 = vpack.c.b16 %v616, %v615
  %v710 = vpack.c.b16 %v618, %v617
  %v711 = vpack.c.b16 %v620, %v619
  %v712 = vpack.c.b16 %v622, %v621
  %v713 = vpack.c.b16 %v624, %v623
  %v714 = vpack.c.b16 %v626, %v625
  %v715 = vpack.c.b16 %v628, %v627
  %v716 = vpack.c.b16 %v630, %v629
  %v717 = vpack.c.b16 %v632, %v631
  %v718 = vpack.c.b16 %v634, %v633
  %v719 = vpack.c.b16 %v636, %v635
  %v720 = vpack.c.b16 %v638, %v637
  %v721 = vpack.c.b16 %v640, %v639
  %v722 = vpack.c.b16 %v642, %v641
  %v723 = vpack.c.b16 %v644, %v643
  %v724 = vpack.c.b16 %v646, %v645
  %v725 = vpack.c.b16 %v648, %v647
  %v726 = vpack.c.b16 %v650, %v649
  %v727 = vpack.c.b16 %v652, %v651
  %v728 = vpack.c.b16 %v654, %v653
  %v729 = vpack.c.b16 %v656, %v655
  %v730 = vpack.c.b16 %v658, %v657
  %803 = vmatprep.subr.bf16.mxu0 0
  %804 = vmatpush1.bf16.msra.mxu0 %v666
  %805 = vmatprep.subr.bf16.mxu0 0
  %806 = vmatpush1.bf16.msra.mxu0 %v665
  %807 = vmatprep.subr.bf16.mxu0 0
  %808 = vmatpush1.bf16.msra.mxu0 %v664
  %809 = vmatprep.subr.bf16.mxu0 0
  %810 = vmatpush1.bf16.msra.mxu0 %v663
  %811 = vmatprep.subr.bf16.mxu0 0
  %812 = vmatpush1.bf16.msra.mxu0 %v662
  %813 = vmatprep.subr.bf16.mxu0 0
  %814 = vmatpush1.bf16.msra.mxu0 %v661
  %815 = vmatprep.subr.bf16.mxu0 0
  %816 = vmatpush1.bf16.msra.mxu0 %v660
  %817 = vmatprep.subr.bf16.mxu0 0
  %818 = vmatpush1.bf16.msra.mxu0 %v659
  %819 = vmatprep.subr.bf16.mxu0 0
  %820 = vmatpush2.bf16.msra.mxu0 %v674
  %821 = vmatprep.subr.bf16.mxu0 0
  %822 = vmatpush2.bf16.msra.mxu0 %v673
  %823 = vmatprep.subr.bf16.mxu0 0
  %824 = vmatpush2.bf16.msra.mxu0 %v672
  %825 = vmatprep.subr.bf16.mxu0 0
  %826 = vmatpush2.bf16.msra.mxu0 %v671
  %827 = vmatprep.subr.bf16.mxu0 0
  %828 = vmatpush2.bf16.msra.mxu0 %v670
  %829 = vmatprep.subr.bf16.mxu0 0
  %830 = vmatpush2.bf16.msra.mxu0 %v669
  %831 = vmatprep.subr.bf16.mxu0 0
  %832 = vmatpush2.bf16.msra.mxu0 %v668
  %833 = vmatprep.subr.bf16.mxu0 0
  %834 = vmatpush2.bf16.msra.mxu0 %v667
  %835 = vmatprep.mubr.bf16.mxu0 %v300
  %836 = vmatmul.mubr.bf16.gmra.mxu0 %v299
  %v837 = vpop.f32.mrf.mxu0
  %v838 = vadd.f32 %v199, %v837
  %v839 = vpop.f32.mrf.mxu0
  %v840 = vpop.f32.mrf.mxu0
  %v841 = vadd.f32 %v199, %v840
  %v842 = vpop.f32.mrf.mxu0
  %843 = vmatprep.mubr.bf16.mxu0 %v309
  %844 = vmatmul.mubr.bf16.gmra.mxu0 %v308
  %v845 = vpop.f32.mrf.mxu0
  %v846 = vadd.f32 %v199, %v845
  %v847 = vpop.f32.mrf.mxu0
  %v848 = vpop.f32.mrf.mxu0
  %v849 = vadd.f32 %v199, %v848
  %v850 = vpop.f32.mrf.mxu0
  %851 = vmatprep.mubr.bf16.mxu0 %v318
  %852 = vmatmul.mubr.bf16.gmra.mxu0 %v317
  %v853 = vpop.f32.mrf.mxu0
  %v854 = vadd.f32 %v199, %v853
  %v855 = vpop.f32.mrf.mxu0
  %v856 = vpop.f32.mrf.mxu0
  %v857 = vadd.f32 %v199, %v856
  %v858 = vpop.f32.mrf.mxu0
  %859 = vmatprep.mubr.bf16.mxu0 %v327
  %860 = vmatmul.mubr.bf16.gmra.mxu0 %v326
  %v861 = vpop.f32.mrf.mxu0
  %v862 = vadd.f32 %v199, %v861
  %v863 = vpop.f32.mrf.mxu0
  %v864 = vpop.f32.mrf.mxu0
  %v865 = vpop.f32.mrf.mxu0
  %866 = vdwg.mxu0
  %867 = vmatprep.subr.bf16.mxu0 0
  %868 = vmatpush1.bf16.msra.mxu0 %v682
  %869 = vmatprep.subr.bf16.mxu0 0
  %870 = vmatpush1.bf16.msra.mxu0 %v681
  %871 = vmatprep.subr.bf16.mxu0 0
  %872 = vmatpush1.bf16.msra.mxu0 %v680
  %873 = vmatprep.subr.bf16.mxu0 0
  %874 = vmatpush1.bf16.msra.mxu0 %v679
  %875 = vmatprep.subr.bf16.mxu0 0
  %876 = vmatpush1.bf16.msra.mxu0 %v678
  %877 = vmatprep.subr.bf16.mxu0 0
  %878 = vmatpush1.bf16.msra.mxu0 %v677
  %879 = vmatprep.subr.bf16.mxu0 0
  %880 = vmatpush1.bf16.msra.mxu0 %v676
  %881 = vmatprep.subr.bf16.mxu0 0
  %882 = vmatpush1.bf16.msra.mxu0 %v675
  %883 = vmatprep.subr.bf16.mxu0 0
  %884 = vmatpush2.bf16.msra.mxu0 %v690
  %885 = vmatprep.subr.bf16.mxu0 0
  %886 = vmatpush2.bf16.msra.mxu0 %v689
  %887 = vmatprep.subr.bf16.mxu0 0
  %888 = vmatpush2.bf16.msra.mxu0 %v688
  %889 = vmatprep.subr.bf16.mxu0 0
  %890 = vmatpush2.bf16.msra.mxu0 %v687
  %891 = vmatprep.subr.bf16.mxu0 0
  %892 = vmatpush2.bf16.msra.mxu0 %v686
  %893 = vmatprep.subr.bf16.mxu0 0
  %894 = vmatpush2.bf16.msra.mxu0 %v685
  %895 = vmatprep.subr.bf16.mxu0 0
  %896 = vmatpush2.bf16.msra.mxu0 %v684
  %897 = vmatprep.subr.bf16.mxu0 0
  %898 = vmatpush2.bf16.msra.mxu0 %v683
  %899 = vmatprep.mubr.bf16.mxu0 %v302
  %900 = vmatmul.mubr.bf16.gmra.mxu0 %v301
  %v901 = vpop.f32.mrf.mxu0
  %v902 = vadd.f32 %v838, %v901
  %v903 = vpop.f32.mrf.mxu0
  %v904 = vpop.f32.mrf.mxu0
  %v905 = vadd.f32 %v841, %v904
  %v906 = vpop.f32.mrf.mxu0
  %907 = vmatprep.mubr.bf16.mxu0 %v311
  %908 = vmatmul.mubr.bf16.gmra.mxu0 %v310
  %v909 = vpop.f32.mrf.mxu0
  %v910 = vadd.f32 %v846, %v909
  %v911 = vpop.f32.mrf.mxu0
  %v912 = vpop.f32.mrf.mxu0
  %v913 = vadd.f32 %v849, %v912
  %v914 = vpop.f32.mrf.mxu0
  %915 = vmatprep.mubr.bf16.mxu0 %v320
  %916 = vmatmul.mubr.bf16.gmra.mxu0 %v319
  %v917 = vpop.f32.mrf.mxu0
  %v918 = vadd.f32 %v854, %v917
  %v919 = vpop.f32.mrf.mxu0
  %v920 = vpop.f32.mrf.mxu0
  %v921 = vadd.f32 %v857, %v920
  %v922 = vpop.f32.mrf.mxu0
  %923 = vmatprep.mubr.bf16.mxu0 %v329
  %924 = vmatmul.mubr.bf16.gmra.mxu0 %v328
  %v925 = vpop.f32.mrf.mxu0
  %v926 = vadd.f32 %v862, %v925
  %v927 = vpop.f32.mrf.mxu0
  %v928 = vpop.f32.mrf.mxu0
  %v929 = vpop.f32.mrf.mxu0
  %930 = vdwg.mxu0
  %931 = vmatprep.subr.bf16.mxu0 0
  %932 = vmatpush1.bf16.msra.mxu0 %v698
  %933 = vmatprep.subr.bf16.mxu0 0
  %934 = vmatpush1.bf16.msra.mxu0 %v697
  %935 = vmatprep.subr.bf16.mxu0 0
  %936 = vmatpush1.bf16.msra.mxu0 %v696
  %937 = vmatprep.subr.bf16.mxu0 0
  %938 = vmatpush1.bf16.msra.mxu0 %v695
  %939 = vmatprep.subr.bf16.mxu0 0
  %940 = vmatpush1.bf16.msra.mxu0 %v694
  %941 = vmatprep.subr.bf16.mxu0 0
  %942 = vmatpush1.bf16.msra.mxu0 %v693
  %943 = vmatprep.subr.bf16.mxu0 0
  %944 = vmatpush1.bf16.msra.mxu0 %v692
  %945 = vmatprep.subr.bf16.mxu0 0
  %946 = vmatpush1.bf16.msra.mxu0 %v691
  %947 = vmatprep.subr.bf16.mxu0 0
  %948 = vmatpush2.bf16.msra.mxu0 %v706
  %949 = vmatprep.subr.bf16.mxu0 0
  %950 = vmatpush2.bf16.msra.mxu0 %v705
  %951 = vmatprep.subr.bf16.mxu0 0
  %952 = vmatpush2.bf16.msra.mxu0 %v704
  %953 = vmatprep.subr.bf16.mxu0 0
  %954 = vmatpush2.bf16.msra.mxu0 %v703
  %955 = vmatprep.subr.bf16.mxu0 0
  %956 = vmatpush2.bf16.msra.mxu0 %v702
  %957 = vmatprep.subr.bf16.mxu0 0
  %958 = vmatpush2.bf16.msra.mxu0 %v701
  %959 = vmatprep.subr.bf16.mxu0 0
  %960 = vmatpush2.bf16.msra.mxu0 %v700
  %961 = vmatprep.subr.bf16.mxu0 0
  %962 = vmatpush2.bf16.msra.mxu0 %v699
  %963 = vmatprep.mubr.bf16.mxu0 %v304
  %964 = vmatmul.mubr.bf16.gmra.mxu0 %v303
  %v965 = vpop.f32.mrf.mxu0
  %v966 = vadd.f32 %v902, %v965
  %v967 = vpop.f32.mrf.mxu0
  %v968 = vpop.f32.mrf.mxu0
  %v969 = vadd.f32 %v905, %v968
  %v970 = vpop.f32.mrf.mxu0
  %971 = vmatprep.mubr.bf16.mxu0 %v313
  %972 = vmatmul.mubr.bf16.gmra.mxu0 %v312
  %v973 = vpop.f32.mrf.mxu0
  %v974 = vadd.f32 %v910, %v973
  %v975 = vpop.f32.mrf.mxu0
  %v976 = vpop.f32.mrf.mxu0
  %v977 = vadd.f32 %v913, %v976
  %v978 = vpop.f32.mrf.mxu0
  %979 = vmatprep.mubr.bf16.mxu0 %v322
  %980 = vmatmul.mubr.bf16.gmra.mxu0 %v321
  %v981 = vpop.f32.mrf.mxu0
  %v982 = vadd.f32 %v918, %v981
  %v983 = vpop.f32.mrf.mxu0
  %v984 = vpop.f32.mrf.mxu0
  %v985 = vadd.f32 %v921, %v984
  %v986 = vpop.f32.mrf.mxu0
  %987 = vmatprep.mubr.bf16.mxu0 %v331
  %988 = vmatmul.mubr.bf16.gmra.mxu0 %v330
  %v989 = vpop.f32.mrf.mxu0
  %v990 = vadd.f32 %v926, %v989
  %v991 = vpop.f32.mrf.mxu0
  %v992 = vpop.f32.mrf.mxu0
  %v993 = vpop.f32.mrf.mxu0
  %994 = vdwg.mxu0
  %995 = vmatprep.subr.bf16.mxu0 0
  %996 = vmatpush1.bf16.msra.mxu0 %v714
  %997 = vmatprep.subr.bf16.mxu0 0
  %998 = vmatpush1.bf16.msra.mxu0 %v713
  %999 = vmatprep.subr.bf16.mxu0 0
  %1000 = vmatpush1.bf16.msra.mxu0 %v712
  %1001 = vmatprep.subr.bf16.mxu0 0
  %1002 = vmatpush1.bf16.msra.mxu0 %v711
  %1003 = vmatprep.subr.bf16.mxu0 0
  %1004 = vmatpush1.bf16.msra.mxu0 %v710
  %1005 = vmatprep.subr.bf16.mxu0 0
  %1006 = vmatpush1.bf16.msra.mxu0 %v709
  %1007 = vmatprep.subr.bf16.mxu0 0
  %1008 = vmatpush1.bf16.msra.mxu0 %v708
  %1009 = vmatprep.subr.bf16.mxu0 0
  %1010 = vmatpush1.bf16.msra.mxu0 %v707
  %1011 = vmatprep.subr.bf16.mxu0 0
  %1012 = vmatpush2.bf16.msra.mxu0 %v722
  %1013 = vmatprep.subr.bf16.mxu0 0
  %1014 = vmatpush2.bf16.msra.mxu0 %v721
  %1015 = vmatprep.subr.bf16.mxu0 0
  %1016 = vmatpush2.bf16.msra.mxu0 %v720
  %1017 = vmatprep.subr.bf16.mxu0 0
  %1018 = vmatpush2.bf16.msra.mxu0 %v719
  %1019 = vmatprep.subr.bf16.mxu0 0
  %1020 = vmatpush2.bf16.msra.mxu0 %v718
  %1021 = vmatprep.subr.bf16.mxu0 0
  %1022 = vmatpush2.bf16.msra.mxu0 %v717
  %1023 = vmatprep.subr.bf16.mxu0 0
  %1024 = vmatpush2.bf16.msra.mxu0 %v716
  %1025 = vmatprep.subr.bf16.mxu0 0
  %1026 = vmatpush2.bf16.msra.mxu0 %v715
  %1027 = vmatprep.mubr.bf16.mxu0 %v306
  %1028 = vmatmul.mubr.bf16.gmra.mxu0 %v305
  %v1029 = vpop.f32.mrf.mxu0
  %v1030 = vadd.f32 %v966, %v1029
  %v1031 = vpop.f32.mrf.mxu0
  %v1032 = vpop.f32.mrf.mxu0
  %v1033 = vadd.f32 %v969, %v1032
  %v1034 = vpop.f32.mrf.mxu0
  %1035 = vmatprep.mubr.bf16.mxu0 %v315
  %1036 = vmatmul.mubr.bf16.gmra.mxu0 %v314
  %v1037 = vpop.f32.mrf.mxu0
  %v1038 = vadd.f32 %v974, %v1037
  %v1039 = vpop.f32.mrf.mxu0
  %v1040 = vpop.f32.mrf.mxu0
  %v1041 = vadd.f32 %v977, %v1040
  %v1042 = vpop.f32.mrf.mxu0
  %1043 = vmatprep.mubr.bf16.mxu0 %v324
  %1044 = vmatmul.mubr.bf16.gmra.mxu0 %v323
  %v1045 = vpop.f32.mrf.mxu0
  %v1046 = vadd.f32 %v982, %v1045
  %v1047 = vpop.f32.mrf.mxu0
  %v1048 = vpop.f32.mrf.mxu0
  %v1049 = vadd.f32 %v985, %v1048
  %v1050 = vpop.f32.mrf.mxu0
  %1051 = vmatprep.mubr.bf16.mxu0 %v333
  %1052 = vmatmul.mubr.bf16.gmra.mxu0 %v332
  %v1053 = vpop.f32.mrf.mxu0
  %v1054 = vadd.f32 %v990, %v1053
  %v1055 = vpop.f32.mrf.mxu0
  %v1056 = vpop.f32.mrf.mxu0
  %v1057 = vpop.f32.mrf.mxu0
  %1058 = vdwg.mxu0
  %1059 = vmatprep.subr.bf16.mxu0 0
  %1060 = vmatpush1.bf16.msra.mxu0 %v730
  %1061 = vmatprep.subr.bf16.mxu0 0
  %1062 = vmatpush1.bf16.msra.mxu0 %v729
  %1063 = vmatprep.subr.bf16.mxu0 0
  %1064 = vmatpush1.bf16.msra.mxu0 %v728
  %1065 = vmatprep.subr.bf16.mxu0 0
  %1066 = vmatpush1.bf16.msra.mxu0 %v727
  %1067 = vmatprep.subr.bf16.mxu0 0
  %1068 = vmatpush1.bf16.msra.mxu0 %v726
  %1069 = vmatprep.subr.bf16.mxu0 0
  %1070 = vmatpush1.bf16.msra.mxu0 %v725
  %1071 = vmatprep.subr.bf16.mxu0 0
  %1072 = vmatpush1.bf16.msra.mxu0 %v724
  %1073 = vmatprep.subr.bf16.mxu0 0
  %1074 = vmatpush1.bf16.msra.mxu0 %v723
  %1075 = vmatprep.subr.bf16.mxu0 0
  %1076 = vmatpush2.bf16.msra.mxu0 0
  %1077 = vmatprep.subr.bf16.mxu0 0
  %1078 = vmatpush2.bf16.msra.mxu0 0
  %1079 = vmatprep.subr.bf16.mxu0 0
  %1080 = vmatpush2.bf16.msra.mxu0 0
  %1081 = vmatprep.subr.bf16.mxu0 0
  %1082 = vmatpush2.bf16.msra.mxu0 0
  %1083 = vmatprep.subr.bf16.mxu0 0
  %1084 = vmatpush2.bf16.msra.mxu0 0
  %1085 = vmatprep.subr.bf16.mxu0 0
  %1086 = vmatpush2.bf16.msra.mxu0 0
  %1087 = vmatprep.subr.bf16.mxu0 0
  %1088 = vmatpush2.bf16.msra.mxu0 0
  %1089 = vmatprep.subr.bf16.mxu0 0
  %1090 = vmatpush2.bf16.msra.mxu0 0
  %1091 = vmatprep.mubr.bf16.mxu0 0
  %1092 = vmatmul.mubr.bf16.gmra.mxu0 %v307
  %v1093 = vpop.f32.mrf.mxu0
  %v1094 = vadd.f32 %v1030, %v1093
  %v1095 = vpop.f32.mrf.mxu0
  %v1096 = vpop.f32.mrf.mxu0
  %v1097 = vadd.f32 %v1033, %v1096
  %v1098 = vpop.f32.mrf.mxu0
  %1099 = vmatprep.mubr.bf16.mxu0 0
  %1100 = vmatmul.mubr.bf16.gmra.mxu0 %v316
  %v1101 = vpop.f32.mrf.mxu0
  %v1102 = vadd.f32 %v1038, %v1101
  %v1103 = vpop.f32.mrf.mxu0
  %v1104 = vpop.f32.mrf.mxu0
  %v1105 = vadd.f32 %v1041, %v1104
  %v1106 = vpop.f32.mrf.mxu0
  %1107 = vmatprep.mubr.bf16.mxu0 0
  %1108 = vmatmul.mubr.bf16.gmra.mxu0 %v325
  %v1109 = vpop.f32.mrf.mxu0
  %v1110 = vadd.f32 %v1046, %v1109
  %v1111 = vpop.f32.mrf.mxu0
  %v1112 = vpop.f32.mrf.mxu0
  %v1113 = vadd.f32 %v1049, %v1112
  %v1114 = vpop.f32.mrf.mxu0
  %1115 = vmatprep.mubr.bf16.mxu0 0
  %1116 = vmatmul.mubr.bf16.gmra.mxu0 %v334
  %v1117 = vpop.f32.mrf.mxu0
  %v1118 = vadd.f32 %v1054, %v1117
  %v1119 = vpop.f32.mrf.mxu0
  %v1120 = vpop.f32.mrf.mxu0
  %v1121 = vpop.f32.mrf.mxu0
  %1122 = vdwg.mxu0
  %v1123 = vmax.f32 %v1094, 0.0
  %v1124 = vmax.f32 %v1097, 0.0
  %v1125 = vmax.f32 %v1102, 0.0
  %v1126 = vmax.f32 %v1105, 0.0
  %v1127 = vmax.f32 %v1110, 0.0
  %v1128 = vmax.f32 %v1113, 0.0
  %v1129 = vmax.f32 %v1118, 0.0
  %v1130 = vpack.c.bf16 %v1124, %v1123
  %v1131 = vpack.c.bf16 %v1126, %v1125
  %v1132 = vpack.c.bf16 %v1128, %v1127
  %v1133 = vpack.c.bf16 %v1129, %v1129
  %v1138 = vunpack.c.l.b16 %v1130
  %v1139 = vunpack.c.h.b16 %v1130
  %v1140 = vunpack.c.l.b16 %v1131
  %v1141 = vunpack.c.h.b16 %v1131
  %v1142 = vunpack.c.l.b16 %v1132
  %v1143 = vunpack.c.h.b16 %v1132
  %v1144 = vunpack.c.l.b16 %v1133
  %v1145 = vpack.c.b16 %v1138, %v1138
  %v1146 = vpack.c.b16 %v1139, %v1139
  %v1147 = vpack.c.b16 %v1140, %v1140
  %v1148 = vpack.c.b16 %v1141, %v1141
  %v1149 = vpack.c.b16 %v1142, %v1142
  %v1150 = vpack.c.b16 %v1143, %v1143
  %v1151 = vpack.c.b16 %v1144, %v1144
  %1159 = vst [vmem:[%s3] sm:$0xf] %v1145
  %1160 = vst [vmem:[%s3 + $0x4] sm:$0xf] %v1146
  %1161 = vst [vmem:[%s3 + $0x8] sm:$0xf] %v1147
  %1162 = vst [vmem:[%s3 + $0xc] sm:$0xf] %v1148
  %1163 = vst [vmem:[%s3 + $0x10] sm:$0xf] %v1149
  %1164 = vst [vmem:[%s3 + $0x14] sm:$0xf] %v1150
  %1165 = vst [vmem:[%s3 + $0x18] sm:$0x7] %v1151
  // Predicated region
  $region14: #{_lambda_.7} parent=0 // pred_check
    _
  $region15: #{_lambda_.7} parent=0 // pred_check_branch
    %1167 = sbr.rel (0) target = $region17
  $region16: #{_lambda_.7} parent=0 // pred_region
    _
  $region17: #{_lambda_.7} parent=0 // pred_fallthru
    _
  // Predicated region
  $region18: #{_lambda_.7} parent=0 // pred_check
    _
  $region19: #{_lambda_.7} parent=0 // pred_check_branch
    %1169 = sbr.rel (0) target = $region21
  $region20: #{_lambda_.7} parent=0 // pred_region
    _
  $region21: #{_lambda_.7} parent=0 // pred_fallthru
    _

// kernel: _lambda_.8
$region0: #{_lambda_.8}
  #allocation0 [shape = 'u32[]', space=smem, size = 0x4, offset = 0x4, fixed_abs, tag = 'smem constant byte address 0x4 - core index']
  #allocation1 [shape = 'u32[144,128]{1,0:T(1,128)}', space=vmem, size = 0x12000, scoped, tag = 'internal scratch']
  %s0 = inlined_call_operand.vmem [shape: bf16[6,1152], index: 0, kind: input, shape index: {}]
  %s1 = inlined_call_operand.vmem [shape: bf16[1152,256], index: 1, kind: input, shape index: {}]
  %s2 = inlined_call_operand.vmem [shape: f32[1,256], index: 2, kind: input, shape index: {}]
  %s3 = inlined_call_operand.vmem [shape: bf16[6,256], index: 3, kind: output, shape index: {}]
  %s4 = sld [smem:[#allocation0]]
  $region22: #{_lambda_.8} parent=0
    _
  %s6 = ssub.s32 1, %s4
  %s7 = scalar_select 0, %s6, %s4
  // Predicated region
  $region2: #{_lambda_.8} parent=0 // pred_check
    _
  $region3: #{_lambda_.8} parent=0 // pred_check_branch
    %9 = sbr.rel (0) target = $region5
  $region4: #{_lambda_.8} parent=0 // pred_region
    _
  $region5: #{_lambda_.8} parent=0 // pred_fallthru
    _
  // Predicated region
  $region6: #{_lambda_.8} parent=0 // pred_check
    _
  $region7: #{_lambda_.8} parent=0 // pred_check_branch
    %11 = sbr.rel (0) target = $region9
  $region8: #{_lambda_.8} parent=0 // pred_region
    _
  $region9: #{_lambda_.8} parent=0 // pred_fallthru
    _
  // Predicated region
  $region10: #{_lambda_.8} parent=0 // pred_check
    _
  $region11: #{_lambda_.8} parent=0 // pred_check_branch
    %13 = sbr.rel (0) target = $region13
  $region12: #{_lambda_.8} parent=0 // pred_region
    _
  $region13: #{_lambda_.8} parent=0 // pred_fallthru
    _
  %v15 = vld [vmem:[%s0] sm:$0x77]
  %v16 = vld [vmem:[%s0 + $0x8] sm:$0x77]
  %v17 = vld [vmem:[%s0 + $0x10] sm:$0x77]
  %v18 = vld [vmem:[%s0 + $0x18] sm:$0x77]
  %v19 = vld [vmem:[%s0 + $0x20] sm:$0x7]
  %v20 = vld [vmem:[%s1] sm:$0xff]
  %v21 = vld [vmem:[%s1 + $0x8] sm:$0xff]
  %v22 = vld [vmem:[%s1 + $0x10] sm:$0xff]
  %v23 = vld [vmem:[%s1 + $0x18] sm:$0xff]
  %v24 = vld [vmem:[%s1 + $0x20] sm:$0xff]
  %v25 = vld [vmem:[%s1 + $0x28] sm:$0xff]
  %v26 = vld [vmem:[%s1 + $0x30] sm:$0xff]
  %v27 = vld [vmem:[%s1 + $0x38] sm:$0xff]
  %v28 = vld [vmem:[%s1 + $0x40] sm:$0xff]
  %v29 = vld [vmem:[%s1 + $0x48] sm:$0xff]
  %v30 = vld [vmem:[%s1 + $0x50] sm:$0xff]
  %v31 = vld [vmem:[%s1 + $0x58] sm:$0xff]
  %v32 = vld [vmem:[%s1 + $0x60] sm:$0xff]
  %v33 = vld [vmem:[%s1 + $0x68] sm:$0xff]
  %v34 = vld [vmem:[%s1 + $0x70] sm:$0xff]
  %v35 = vld [vmem:[%s1 + $0x78] sm:$0xff]
  %v36 = vld [vmem:[%s1 + $0x80] sm:$0xff]
  %v37 = vld [vmem:[%s1 + $0x88] sm:$0xff]
  %v38 = vld [vmem:[%s1 + $0x90] sm:$0xff]
  %v39 = vld [vmem:[%s1 + $0x98] sm:$0xff]
  %v40 = vld [vmem:[%s1 + $0xa0] sm:$0xff]
  %v41 = vld [vmem:[%s1 + $0xa8] sm:$0xff]
  %v42 = vld [vmem:[%s1 + $0xb0] sm:$0xff]
  %v43 = vld [vmem:[%s1 + $0xb8] sm:$0xff]
  %v44 = vld [vmem:[%s1 + $0xc0] sm:$0xff]
  %v45 = vld [vmem:[%s1 + $0xc8] sm:$0xff]
  %v46 = vld [vmem:[%s1 + $0xd0] sm:$0xff]
  %v47 = vld [vmem:[%s1 + $0xd8] sm:$0xff]
  %v48 = vld [vmem:[%s1 + $0xe0] sm:$0xff]
  %v49 = vld [vmem:[%s1 + $0xe8] sm:$0xff]
  %v50 = vld [vmem:[%s1 + $0xf0] sm:$0xff]
  %v51 = vld [vmem:[%s1 + $0xf8] sm:$0xff]
  %v52 = vld [vmem:[%s1 + $0x100] sm:$0xff]
  %v53 = vld [vmem:[%s1 + $0x108] sm:$0xff]
  %v54 = vld [vmem:[%s1 + $0x110] sm:$0xff]
  %v55 = vld [vmem:[%s1 + $0x118] sm:$0xff]
  %v56 = vld [vmem:[%s1 + $0x120] sm:$0xff]
  %v57 = vld [vmem:[%s1 + $0x128] sm:$0xff]
  %v58 = vld [vmem:[%s1 + $0x130] sm:$0xff]
  %v59 = vld [vmem:[%s1 + $0x138] sm:$0xff]
  %v60 = vld [vmem:[%s1 + $0x140] sm:$0xff]
  %v61 = vld [vmem:[%s1 + $0x148] sm:$0xff]
  %v62 = vld [vmem:[%s1 + $0x150] sm:$0xff]
  %v63 = vld [vmem:[%s1 + $0x158] sm:$0xff]
  %v64 = vld [vmem:[%s1 + $0x160] sm:$0xff]
  %v65 = vld [vmem:[%s1 + $0x168] sm:$0xff]
  %v66 = vld [vmem:[%s1 + $0x170] sm:$0xff]
  %v67 = vld [vmem:[%s1 + $0x178] sm:$0xff]
  %v68 = vld [vmem:[%s1 + $0x180] sm:$0xff]
  %v69 = vld [vmem:[%s1 + $0x188] sm:$0xff]
  %v70 = vld [vmem:[%s1 + $0x190] sm:$0xff]
  %v71 = vld [vmem:[%s1 + $0x198] sm:$0xff]
  %v72 = vld [vmem:[%s1 + $0x1a0] sm:$0xff]
  %v73 = vld [vmem:[%s1 + $0x1a8] sm:$0xff]
  %v74 = vld [vmem:[%s1 + $0x1b0] sm:$0xff]
  %v75 = vld [vmem:[%s1 + $0x1b8] sm:$0xff]
  %v76 = vld [vmem:[%s1 + $0x1c0] sm:$0xff]
  %v77 = vld [vmem:[%s1 + $0x1c8] sm:$0xff]
  %v78 = vld [vmem:[%s1 + $0x1d0] sm:$0xff]
  %v79 = vld [vmem:[%s1 + $0x1d8] sm:$0xff]
  %v80 = vld [vmem:[%s1 + $0x1e0] sm:$0xff]
  %v81 = vld [vmem:[%s1 + $0x1e8] sm:$0xff]
  %v82 = vld [vmem:[%s1 + $0x1f0] sm:$0xff]
  %v83 = vld [vmem:[%s1 + $0x1f8] sm:$0xff]
  %v84 = vld [vmem:[%s1 + $0x200] sm:$0xff]
  %v85 = vld [vmem:[%s1 + $0x208] sm:$0xff]
  %v86 = vld [vmem:[%s1 + $0x210] sm:$0xff]
  %v87 = vld [vmem:[%s1 + $0x218] sm:$0xff]
  %v88 = vld [vmem:[%s1 + $0x220] sm:$0xff]
  %v89 = vld [vmem:[%s1 + $0x228] sm:$0xff]
  %v90 = vld [vmem:[%s1 + $0x230] sm:$0xff]
  %v91 = vld [vmem:[%s1 + $0x238] sm:$0xff]
  %v92 = vld [vmem:[%s1 + $0x240] sm:$0xff]
  %v93 = vld [vmem:[%s1 + $0x248] sm:$0xff]
  %v94 = vld [vmem:[%s1 + $0x250] sm:$0xff]
  %v95 = vld [vmem:[%s1 + $0x258] sm:$0xff]
  %v96 = vld [vmem:[%s1 + $0x260] sm:$0xff]
  %v97 = vld [vmem:[%s1 + $0x268] sm:$0xff]
  %v98 = vld [vmem:[%s1 + $0x270] sm:$0xff]
  %v99 = vld [vmem:[%s1 + $0x278] sm:$0xff]
  %v100 = vld [vmem:[%s1 + $0x280] sm:$0xff]
  %v101 = vld [vmem:[%s1 + $0x288] sm:$0xff]
  %v102 = vld [vmem:[%s1 + $0x290] sm:$0xff]
  %v103 = vld [vmem:[%s1 + $0x298] sm:$0xff]
  %v104 = vld [vmem:[%s1 + $0x2a0] sm:$0xff]
  %v105 = vld [vmem:[%s1 + $0x2a8] sm:$0xff]
  %v106 = vld [vmem:[%s1 + $0x2b0] sm:$0xff]
  %v107 = vld [vmem:[%s1 + $0x2b8] sm:$0xff]
  %v108 = vld [vmem:[%s1 + $0x2c0] sm:$0xff]
  %v109 = vld [vmem:[%s1 + $0x2c8] sm:$0xff]
  %v110 = vld [vmem:[%s1 + $0x2d0] sm:$0xff]
  %v111 = vld [vmem:[%s1 + $0x2d8] sm:$0xff]
  %v112 = vld [vmem:[%s1 + $0x2e0] sm:$0xff]
  %v113 = vld [vmem:[%s1 + $0x2e8] sm:$0xff]
  %v114 = vld [vmem:[%s1 + $0x2f0] sm:$0xff]
  %v115 = vld [vmem:[%s1 + $0x2f8] sm:$0xff]
  %v116 = vld [vmem:[%s1 + $0x300] sm:$0xff]
  %v117 = vld [vmem:[%s1 + $0x308] sm:$0xff]
  %v118 = vld [vmem:[%s1 + $0x310] sm:$0xff]
  %v119 = vld [vmem:[%s1 + $0x318] sm:$0xff]
  %v120 = vld [vmem:[%s1 + $0x320] sm:$0xff]
  %v121 = vld [vmem:[%s1 + $0x328] sm:$0xff]
  %v122 = vld [vmem:[%s1 + $0x330] sm:$0xff]
  %v123 = vld [vmem:[%s1 + $0x338] sm:$0xff]
  %v124 = vld [vmem:[%s1 + $0x340] sm:$0xff]
  %v125 = vld [vmem:[%s1 + $0x348] sm:$0xff]
  %v126 = vld [vmem:[%s1 + $0x350] sm:$0xff]
  %v127 = vld [vmem:[%s1 + $0x358] sm:$0xff]
  %v128 = vld [vmem:[%s1 + $0x360] sm:$0xff]
  %v129 = vld [vmem:[%s1 + $0x368] sm:$0xff]
  %v130 = vld [vmem:[%s1 + $0x370] sm:$0xff]
  %v131 = vld [vmem:[%s1 + $0x378] sm:$0xff]
  %v132 = vld [vmem:[%s1 + $0x380] sm:$0xff]
  %v133 = vld [vmem:[%s1 + $0x388] sm:$0xff]
  %v134 = vld [vmem:[%s1 + $0x390] sm:$0xff]
  %v135 = vld [vmem:[%s1 + $0x398] sm:$0xff]
  %v136 = vld [vmem:[%s1 + $0x3a0] sm:$0xff]
  %v137 = vld [vmem:[%s1 + $0x3a8] sm:$0xff]
  %v138 = vld [vmem:[%s1 + $0x3b0] sm:$0xff]
  %v139 = vld [vmem:[%s1 + $0x3b8] sm:$0xff]
  %v140 = vld [vmem:[%s1 + $0x3c0] sm:$0xff]
  %v141 = vld [vmem:[%s1 + $0x3c8] sm:$0xff]
  %v142 = vld [vmem:[%s1 + $0x3d0] sm:$0xff]
  %v143 = vld [vmem:[%s1 + $0x3d8] sm:$0xff]
  %v144 = vld [vmem:[%s1 + $0x3e0] sm:$0xff]
  %v145 = vld [vmem:[%s1 + $0x3e8] sm:$0xff]
  %v146 = vld [vmem:[%s1 + $0x3f0] sm:$0xff]
  %v147 = vld [vmem:[%s1 + $0x3f8] sm:$0xff]
  %v148 = vld [vmem:[%s1 + $0x400] sm:$0xff]
  %v149 = vld [vmem:[%s1 + $0x408] sm:$0xff]
  %v150 = vld [vmem:[%s1 + $0x410] sm:$0xff]
  %v151 = vld [vmem:[%s1 + $0x418] sm:$0xff]
  %v152 = vld [vmem:[%s1 + $0x420] sm:$0xff]
  %v153 = vld [vmem:[%s1 + $0x428] sm:$0xff]
  %v154 = vld [vmem:[%s1 + $0x430] sm:$0xff]
  %v155 = vld [vmem:[%s1 + $0x438] sm:$0xff]
  %v156 = vld [vmem:[%s1 + $0x440] sm:$0xff]
  %v157 = vld [vmem:[%s1 + $0x448] sm:$0xff]
  %v158 = vld [vmem:[%s1 + $0x450] sm:$0xff]
  %v159 = vld [vmem:[%s1 + $0x458] sm:$0xff]
  %v160 = vld [vmem:[%s1 + $0x460] sm:$0xff]
  %v161 = vld [vmem:[%s1 + $0x468] sm:$0xff]
  %v162 = vld [vmem:[%s1 + $0x470] sm:$0xff]
  %v163 = vld [vmem:[%s1 + $0x478] sm:$0xff]
  %v164 = vld [vmem:[%s2] sm:$0x3]
  %v166 = vlaneseq
  %v167 = vshrl.u32 %v166, 7
  %v168 = vsub.s32 0, %v167
  %v169 = vrot.slane %v164, %v168
  %v170 = vlaneseq
  %v171 = vshrl.u32 %v170, 7
  %v172 = vsub.s32 1, %v171
  %v173 = vrot.slane %v164, %v172
  %v181 = vunpack.c.l.b16 %v15
  %v182 = vunpack.c.h.b16 %v15
  %v183 = vunpack.c.l.b16 %v16
  %v184 = vunpack.c.h.b16 %v16
  %v185 = vunpack.c.l.b16 %v17
  %v186 = vunpack.c.h.b16 %v17
  %v187 = vunpack.c.l.b16 %v18
  %v188 = vunpack.c.h.b16 %v18
  %v189 = vunpack.c.l.b16 %v19
  %v190 = vpack.c.b16 %v181, %v181
  %v191 = vpack.c.b16 %v182, %v182
  %v192 = vpack.c.b16 %v183, %v183
  %v193 = vpack.c.b16 %v184, %v184
  %v194 = vpack.c.b16 %v185, %v185
  %v195 = vpack.c.b16 %v186, %v186
  %v196 = vpack.c.b16 %v187, %v187
  %v197 = vpack.c.b16 %v188, %v188
  %v198 = vpack.c.b16 %v189, %v189
  %v352 = vunpack.c.l.b16 %v20
  %v353 = vunpack.c.h.b16 %v20
  %v354 = vunpack.c.l.b16 %v21
  %v355 = vunpack.c.h.b16 %v21
  %v356 = vunpack.c.l.b16 %v22
  %v357 = vunpack.c.h.b16 %v22
  %v358 = vunpack.c.l.b16 %v23
  %v359 = vunpack.c.h.b16 %v23
  %v360 = vunpack.c.l.b16 %v24
  %v361 = vunpack.c.h.b16 %v24
  %v362 = vunpack.c.l.b16 %v25
  %v363 = vunpack.c.h.b16 %v25
  %v364 = vunpack.c.l.b16 %v26
  %v365 = vunpack.c.h.b16 %v26
  %v366 = vunpack.c.l.b16 %v27
  %v367 = vunpack.c.h.b16 %v27
  %v368 = vunpack.c.l.b16 %v28
  %v369 = vunpack.c.h.b16 %v28
  %v370 = vunpack.c.l.b16 %v29
  %v371 = vunpack.c.h.b16 %v29
  %v372 = vunpack.c.l.b16 %v30
  %v373 = vunpack.c.h.b16 %v30
  %v374 = vunpack.c.l.b16 %v31
  %v375 = vunpack.c.h.b16 %v31
  %v376 = vunpack.c.l.b16 %v32
  %v377 = vunpack.c.h.b16 %v32
  %v378 = vunpack.c.l.b16 %v33
  %v379 = vunpack.c.h.b16 %v33
  %v380 = vunpack.c.l.b16 %v34
  %v381 = vunpack.c.h.b16 %v34
  %v382 = vunpack.c.l.b16 %v35
  %v383 = vunpack.c.h.b16 %v35
  %v384 = vunpack.c.l.b16 %v36
  %v385 = vunpack.c.h.b16 %v36
  %v386 = vunpack.c.l.b16 %v37
  %v387 = vunpack.c.h.b16 %v37
  %v388 = vunpack.c.l.b16 %v38
  %v389 = vunpack.c.h.b16 %v38
  %v390 = vunpack.c.l.b16 %v39
  %v391 = vunpack.c.h.b16 %v39
  %v392 = vunpack.c.l.b16 %v40
  %v393 = vunpack.c.h.b16 %v40
  %v394 = vunpack.c.l.b16 %v41
  %v395 = vunpack.c.h.b16 %v41
  %v396 = vunpack.c.l.b16 %v42
  %v397 = vunpack.c.h.b16 %v42
  %v398 = vunpack.c.l.b16 %v43
  %v399 = vunpack.c.h.b16 %v43
  %v400 = vunpack.c.l.b16 %v44
  %v401 = vunpack.c.h.b16 %v44
  %v402 = vunpack.c.l.b16 %v45
  %v403 = vunpack.c.h.b16 %v45
  %v404 = vunpack.c.l.b16 %v46
  %v405 = vunpack.c.h.b16 %v46
  %v406 = vunpack.c.l.b16 %v47
  %v407 = vunpack.c.h.b16 %v47
  %v408 = vunpack.c.l.b16 %v48
  %v409 = vunpack.c.h.b16 %v48
  %v410 = vunpack.c.l.b16 %v49
  %v411 = vunpack.c.h.b16 %v49
  %v412 = vunpack.c.l.b16 %v50
  %v413 = vunpack.c.h.b16 %v50
  %v414 = vunpack.c.l.b16 %v51
  %v415 = vunpack.c.h.b16 %v51
  %v416 = vunpack.c.l.b16 %v52
  %v417 = vunpack.c.h.b16 %v52
  %v418 = vunpack.c.l.b16 %v53
  %v419 = vunpack.c.h.b16 %v53
  %v420 = vunpack.c.l.b16 %v54
  %v421 = vunpack.c.h.b16 %v54
  %v422 = vunpack.c.l.b16 %v55
  %v423 = vunpack.c.h.b16 %v55
  %v424 = vunpack.c.l.b16 %v56
  %v425 = vunpack.c.h.b16 %v56
  %v426 = vunpack.c.l.b16 %v57
  %v427 = vunpack.c.h.b16 %v57
  %v428 = vunpack.c.l.b16 %v58
  %v429 = vunpack.c.h.b16 %v58
  %v430 = vunpack.c.l.b16 %v59
  %v431 = vunpack.c.h.b16 %v59
  %v432 = vunpack.c.l.b16 %v60
  %v433 = vunpack.c.h.b16 %v60
  %v434 = vunpack.c.l.b16 %v61
  %v435 = vunpack.c.h.b16 %v61
  %v436 = vunpack.c.l.b16 %v62
  %v437 = vunpack.c.h.b16 %v62
  %v438 = vunpack.c.l.b16 %v63
  %v439 = vunpack.c.h.b16 %v63
  %v440 = vunpack.c.l.b16 %v64
  %v441 = vunpack.c.h.b16 %v64
  %v442 = vunpack.c.l.b16 %v65
  %v443 = vunpack.c.h.b16 %v65
  %v444 = vunpack.c.l.b16 %v66
  %v445 = vunpack.c.h.b16 %v66
  %v446 = vunpack.c.l.b16 %v67
  %v447 = vunpack.c.h.b16 %v67
  %v448 = vunpack.c.l.b16 %v68
  %v449 = vunpack.c.h.b16 %v68
  %v450 = vunpack.c.l.b16 %v69
  %v451 = vunpack.c.h.b16 %v69
  %v452 = vunpack.c.l.b16 %v70
  %v453 = vunpack.c.h.b16 %v70
  %v454 = vunpack.c.l.b16 %v71
  %v455 = vunpack.c.h.b16 %v71
  %v456 = vunpack.c.l.b16 %v72
  %v457 = vunpack.c.h.b16 %v72
  %v458 = vunpack.c.l.b16 %v73
  %v459 = vunpack.c.h.b16 %v73
  %v460 = vunpack.c.l.b16 %v74
  %v461 = vunpack.c.h.b16 %v74
  %v462 = vunpack.c.l.b16 %v75
  %v463 = vunpack.c.h.b16 %v75
  %v464 = vunpack.c.l.b16 %v76
  %v465 = vunpack.c.h.b16 %v76
  %v466 = vunpack.c.l.b16 %v77
  %v467 = vunpack.c.h.b16 %v77
  %v468 = vunpack.c.l.b16 %v78
  %v469 = vunpack.c.h.b16 %v78
  %v470 = vunpack.c.l.b16 %v79
  %v471 = vunpack.c.h.b16 %v79
  %v472 = vunpack.c.l.b16 %v80
  %v473 = vunpack.c.h.b16 %v80
  %v474 = vunpack.c.l.b16 %v81
  %v475 = vunpack.c.h.b16 %v81
  %v476 = vunpack.c.l.b16 %v82
  %v477 = vunpack.c.h.b16 %v82
  %v478 = vunpack.c.l.b16 %v83
  %v479 = vunpack.c.h.b16 %v83
  %v480 = vunpack.c.l.b16 %v84
  %v481 = vunpack.c.h.b16 %v84
  %v482 = vunpack.c.l.b16 %v85
  %v483 = vunpack.c.h.b16 %v85
  %v484 = vunpack.c.l.b16 %v86
  %v485 = vunpack.c.h.b16 %v86
  %v486 = vunpack.c.l.b16 %v87
  %v487 = vunpack.c.h.b16 %v87
  %v488 = vunpack.c.l.b16 %v88
  %v489 = vunpack.c.h.b16 %v88
  %v490 = vunpack.c.l.b16 %v89
  %v491 = vunpack.c.h.b16 %v89
  %v492 = vunpack.c.l.b16 %v90
  %v493 = vunpack.c.h.b16 %v90
  %v494 = vunpack.c.l.b16 %v91
  %v495 = vunpack.c.h.b16 %v91
  %v496 = vunpack.c.l.b16 %v92
  %v497 = vunpack.c.h.b16 %v92
  %v498 = vunpack.c.l.b16 %v93
  %v499 = vunpack.c.h.b16 %v93
  %v500 = vunpack.c.l.b16 %v94
  %v501 = vunpack.c.h.b16 %v94
  %v502 = vunpack.c.l.b16 %v95
  %v503 = vunpack.c.h.b16 %v95
  %v504 = vunpack.c.l.b16 %v96
  %v505 = vunpack.c.h.b16 %v96
  %v506 = vunpack.c.l.b16 %v97
  %v507 = vunpack.c.h.b16 %v97
  %v508 = vunpack.c.l.b16 %v98
  %v509 = vunpack.c.h.b16 %v98
  %v510 = vunpack.c.l.b16 %v99
  %v511 = vunpack.c.h.b16 %v99
  %v512 = vunpack.c.l.b16 %v100
  %v513 = vunpack.c.h.b16 %v100
  %v514 = vunpack.c.l.b16 %v101
  %v515 = vunpack.c.h.b16 %v101
  %v516 = vunpack.c.l.b16 %v102
  %v517 = vunpack.c.h.b16 %v102
  %v518 = vunpack.c.l.b16 %v103
  %v519 = vunpack.c.h.b16 %v103
  %v520 = vunpack.c.l.b16 %v104
  %v521 = vunpack.c.h.b16 %v104
  %v522 = vunpack.c.l.b16 %v105
  %v523 = vunpack.c.h.b16 %v105
  %v524 = vunpack.c.l.b16 %v106
  %v525 = vunpack.c.h.b16 %v106
  %v526 = vunpack.c.l.b16 %v107
  %v527 = vunpack.c.h.b16 %v107
  %v528 = vunpack.c.l.b16 %v108
  %v529 = vunpack.c.h.b16 %v108
  %v530 = vunpack.c.l.b16 %v109
  %v531 = vunpack.c.h.b16 %v109
  %v532 = vunpack.c.l.b16 %v110
  %v533 = vunpack.c.h.b16 %v110
  %v534 = vunpack.c.l.b16 %v111
  %v535 = vunpack.c.h.b16 %v111
  %v536 = vunpack.c.l.b16 %v112
  %v537 = vunpack.c.h.b16 %v112
  %v538 = vunpack.c.l.b16 %v113
  %v539 = vunpack.c.h.b16 %v113
  %v540 = vunpack.c.l.b16 %v114
  %v541 = vunpack.c.h.b16 %v114
  %v542 = vunpack.c.l.b16 %v115
  %v543 = vunpack.c.h.b16 %v115
  %v544 = vunpack.c.l.b16 %v116
  %v545 = vunpack.c.h.b16 %v116
  %v546 = vunpack.c.l.b16 %v117
  %v547 = vunpack.c.h.b16 %v117
  %v548 = vunpack.c.l.b16 %v118
  %v549 = vunpack.c.h.b16 %v118
  %v550 = vunpack.c.l.b16 %v119
  %v551 = vunpack.c.h.b16 %v119
  %v552 = vunpack.c.l.b16 %v120
  %v553 = vunpack.c.h.b16 %v120
  %v554 = vunpack.c.l.b16 %v121
  %v555 = vunpack.c.h.b16 %v121
  %v556 = vunpack.c.l.b16 %v122
  %v557 = vunpack.c.h.b16 %v122
  %v558 = vunpack.c.l.b16 %v123
  %v559 = vunpack.c.h.b16 %v123
  %v560 = vunpack.c.l.b16 %v124
  %v561 = vunpack.c.h.b16 %v124
  %v562 = vunpack.c.l.b16 %v125
  %v563 = vunpack.c.h.b16 %v125
  %v564 = vunpack.c.l.b16 %v126
  %v565 = vunpack.c.h.b16 %v126
  %v566 = vunpack.c.l.b16 %v127
  %v567 = vunpack.c.h.b16 %v127
  %v568 = vunpack.c.l.b16 %v128
  %v569 = vunpack.c.h.b16 %v128
  %v570 = vunpack.c.l.b16 %v129
  %v571 = vunpack.c.h.b16 %v129
  %v572 = vunpack.c.l.b16 %v130
  %v573 = vunpack.c.h.b16 %v130
  %v574 = vunpack.c.l.b16 %v131
  %v575 = vunpack.c.h.b16 %v131
  %v576 = vunpack.c.l.b16 %v132
  %v577 = vunpack.c.h.b16 %v132
  %v578 = vunpack.c.l.b16 %v133
  %v579 = vunpack.c.h.b16 %v133
  %v580 = vunpack.c.l.b16 %v134
  %v581 = vunpack.c.h.b16 %v134
  %v582 = vunpack.c.l.b16 %v135
  %v583 = vunpack.c.h.b16 %v135
  %v584 = vunpack.c.l.b16 %v136
  %v585 = vunpack.c.h.b16 %v136
  %v586 = vunpack.c.l.b16 %v137
  %v587 = vunpack.c.h.b16 %v137
  %v588 = vunpack.c.l.b16 %v138
  %v589 = vunpack.c.h.b16 %v138
  %v590 = vunpack.c.l.b16 %v139
  %v591 = vunpack.c.h.b16 %v139
  %v592 = vunpack.c.l.b16 %v140
  %v593 = vunpack.c.h.b16 %v140
  %v594 = vunpack.c.l.b16 %v141
  %v595 = vunpack.c.h.b16 %v141
  %v596 = vunpack.c.l.b16 %v142
  %v597 = vunpack.c.h.b16 %v142
  %v598 = vunpack.c.l.b16 %v143
  %v599 = vunpack.c.h.b16 %v143
  %v600 = vunpack.c.l.b16 %v144
  %v601 = vunpack.c.h.b16 %v144
  %v602 = vunpack.c.l.b16 %v145
  %v603 = vunpack.c.h.b16 %v145
  %v604 = vunpack.c.l.b16 %v146
  %v605 = vunpack.c.h.b16 %v146
  %v606 = vunpack.c.l.b16 %v147
  %v607 = vunpack.c.h.b16 %v147
  %v608 = vunpack.c.l.b16 %v148
  %v609 = vunpack.c.h.b16 %v148
  %v610 = vunpack.c.l.b16 %v149
  %v611 = vunpack.c.h.b16 %v149
  %v612 = vunpack.c.l.b16 %v150
  %v613 = vunpack.c.h.b16 %v150
  %v614 = vunpack.c.l.b16 %v151
  %v615 = vunpack.c.h.b16 %v151
  %v616 = vunpack.c.l.b16 %v152
  %v617 = vunpack.c.h.b16 %v152
  %v618 = vunpack.c.l.b16 %v153
  %v619 = vunpack.c.h.b16 %v153
  %v620 = vunpack.c.l.b16 %v154
  %v621 = vunpack.c.h.b16 %v154
  %v622 = vunpack.c.l.b16 %v155
  %v623 = vunpack.c.h.b16 %v155
  %v624 = vunpack.c.l.b16 %v156
  %v625 = vunpack.c.h.b16 %v156
  %v626 = vunpack.c.l.b16 %v157
  %v627 = vunpack.c.h.b16 %v157
  %v628 = vunpack.c.l.b16 %v158
  %v629 = vunpack.c.h.b16 %v158
  %v630 = vunpack.c.l.b16 %v159
  %v631 = vunpack.c.h.b16 %v159
  %v632 = vunpack.c.l.b16 %v160
  %v633 = vunpack.c.h.b16 %v160
  %v634 = vunpack.c.l.b16 %v161
  %v635 = vunpack.c.h.b16 %v161
  %v636 = vunpack.c.l.b16 %v162
  %v637 = vunpack.c.h.b16 %v162
  %v638 = vunpack.c.l.b16 %v163
  %v639 = vunpack.c.h.b16 %v163
  %v640 = vpack.c.b16 %v354, %v352
  %v641 = vpack.c.b16 %v355, %v353
  %v642 = vpack.c.b16 %v358, %v356
  %v643 = vpack.c.b16 %v359, %v357
  %v644 = vpack.c.b16 %v362, %v360
  %v645 = vpack.c.b16 %v363, %v361
  %v646 = vpack.c.b16 %v366, %v364
  %v647 = vpack.c.b16 %v367, %v365
  %v648 = vpack.c.b16 %v370, %v368
  %v649 = vpack.c.b16 %v371, %v369
  %v650 = vpack.c.b16 %v374, %v372
  %v651 = vpack.c.b16 %v375, %v373
  %v652 = vpack.c.b16 %v378, %v376
  %v653 = vpack.c.b16 %v379, %v377
  %v654 = vpack.c.b16 %v382, %v380
  %v655 = vpack.c.b16 %v383, %v381
  %v656 = vpack.c.b16 %v386, %v384
  %v657 = vpack.c.b16 %v387, %v385
  %v658 = vpack.c.b16 %v390, %v388
  %v659 = vpack.c.b16 %v391, %v389
  %v660 = vpack.c.b16 %v394, %v392
  %v661 = vpack.c.b16 %v395, %v393
  %v662 = vpack.c.b16 %v398, %v396
  %v663 = vpack.c.b16 %v399, %v397
  %v664 = vpack.c.b16 %v402, %v400
  %v665 = vpack.c.b16 %v403, %v401
  %v666 = vpack.c.b16 %v406, %v404
  %v667 = vpack.c.b16 %v407, %v405
  %v668 = vpack.c.b16 %v410, %v408
  %v669 = vpack.c.b16 %v411, %v409
  %v670 = vpack.c.b16 %v414, %v412
  %v671 = vpack.c.b16 %v415, %v413
  %v672 = vpack.c.b16 %v418, %v416
  %v673 = vpack.c.b16 %v419, %v417
  %v674 = vpack.c.b16 %v422, %v420
  %v675 = vpack.c.b16 %v423, %v421
  %v676 = vpack.c.b16 %v426, %v424
  %v677 = vpack.c.b16 %v427, %v425
  %v678 = vpack.c.b16 %v430, %v428
  %v679 = vpack.c.b16 %v431, %v429
  %v680 = vpack.c.b16 %v434, %v432
  %v681 = vpack.c.b16 %v435, %v433
  %v682 = vpack.c.b16 %v438, %v436
  %v683 = vpack.c.b16 %v439, %v437
  %v684 = vpack.c.b16 %v442, %v440
  %v685 = vpack.c.b16 %v443, %v441
  %v686 = vpack.c.b16 %v446, %v444
  %v687 = vpack.c.b16 %v447, %v445
  %v688 = vpack.c.b16 %v450, %v448
  %v689 = vpack.c.b16 %v451, %v449
  %v690 = vpack.c.b16 %v454, %v452
  %v691 = vpack.c.b16 %v455, %v453
  %v692 = vpack.c.b16 %v458, %v456
  %v693 = vpack.c.b16 %v459, %v457
  %v694 = vpack.c.b16 %v462, %v460
  %v695 = vpack.c.b16 %v463, %v461
  %v696 = vpack.c.b16 %v466, %v464
  %v697 = vpack.c.b16 %v467, %v465
  %v698 = vpack.c.b16 %v470, %v468
  %v699 = vpack.c.b16 %v471, %v469
  %v700 = vpack.c.b16 %v474, %v472
  %v701 = vpack.c.b16 %v475, %v473
  %v702 = vpack.c.b16 %v478, %v476
  %v703 = vpack.c.b16 %v479, %v477
  %v704 = vpack.c.b16 %v482, %v480
  %v705 = vpack.c.b16 %v483, %v481
  %v706 = vpack.c.b16 %v486, %v484
  %v707 = vpack.c.b16 %v487, %v485
  %v708 = vpack.c.b16 %v490, %v488
  %v709 = vpack.c.b16 %v491, %v489
  %v710 = vpack.c.b16 %v494, %v492
  %v711 = vpack.c.b16 %v495, %v493
  %v712 = vpack.c.b16 %v498, %v496
  %v713 = vpack.c.b16 %v499, %v497
  %v714 = vpack.c.b16 %v502, %v500
  %v715 = vpack.c.b16 %v503, %v501
  %v716 = vpack.c.b16 %v506, %v504
  %v717 = vpack.c.b16 %v507, %v505
  %v718 = vpack.c.b16 %v510, %v508
  %v719 = vpack.c.b16 %v511, %v509
  %v720 = vpack.c.b16 %v514, %v512
  %v721 = vpack.c.b16 %v515, %v513
  %v722 = vpack.c.b16 %v518, %v516
  %v723 = vpack.c.b16 %v519, %v517
  %v724 = vpack.c.b16 %v522, %v520
  %v725 = vpack.c.b16 %v523, %v521
  %v726 = vpack.c.b16 %v526, %v524
  %v727 = vpack.c.b16 %v527, %v525
  %v728 = vpack.c.b16 %v530, %v528
  %v729 = vpack.c.b16 %v531, %v529
  %v730 = vpack.c.b16 %v534, %v532
  %v731 = vpack.c.b16 %v535, %v533
  %v732 = vpack.c.b16 %v538, %v536
  %v733 = vpack.c.b16 %v539, %v537
  %v734 = vpack.c.b16 %v542, %v540
  %v735 = vpack.c.b16 %v543, %v541
  %v736 = vpack.c.b16 %v546, %v544
  %v737 = vpack.c.b16 %v547, %v545
  %v738 = vpack.c.b16 %v550, %v548
  %v739 = vpack.c.b16 %v551, %v549
  %v740 = vpack.c.b16 %v554, %v552
  %v741 = vpack.c.b16 %v555, %v553
  %v742 = vpack.c.b16 %v558, %v556
  %v743 = vpack.c.b16 %v559, %v557
  %v744 = vpack.c.b16 %v562, %v560
  %v745 = vpack.c.b16 %v563, %v561
  %v746 = vpack.c.b16 %v566, %v564
  %v747 = vpack.c.b16 %v567, %v565
  %v748 = vpack.c.b16 %v570, %v568
  %v749 = vpack.c.b16 %v571, %v569
  %v750 = vpack.c.b16 %v574, %v572
  %v751 = vpack.c.b16 %v575, %v573
  %v752 = vpack.c.b16 %v578, %v576
  %v753 = vpack.c.b16 %v579, %v577
  %v754 = vpack.c.b16 %v582, %v580
  %v755 = vpack.c.b16 %v583, %v581
  %v756 = vpack.c.b16 %v586, %v584
  %v757 = vpack.c.b16 %v587, %v585
  %v758 = vpack.c.b16 %v590, %v588
  %v759 = vpack.c.b16 %v591, %v589
  %v760 = vpack.c.b16 %v594, %v592
  %v761 = vpack.c.b16 %v595, %v593
  %v762 = vpack.c.b16 %v598, %v596
  %v763 = vpack.c.b16 %v599, %v597
  %v764 = vpack.c.b16 %v602, %v600
  %v765 = vpack.c.b16 %v603, %v601
  %v766 = vpack.c.b16 %v606, %v604
  %v767 = vpack.c.b16 %v607, %v605
  %v768 = vpack.c.b16 %v610, %v608
  %v769 = vpack.c.b16 %v611, %v609
  %v770 = vpack.c.b16 %v614, %v612
  %v771 = vpack.c.b16 %v615, %v613
  %v772 = vpack.c.b16 %v618, %v616
  %v773 = vpack.c.b16 %v619, %v617
  %v774 = vpack.c.b16 %v622, %v620
  %v775 = vpack.c.b16 %v623, %v621
  %v776 = vpack.c.b16 %v626, %v624
  %v777 = vpack.c.b16 %v627, %v625
  %v778 = vpack.c.b16 %v630, %v628
  %v779 = vpack.c.b16 %v631, %v629
  %v780 = vpack.c.b16 %v634, %v632
  %v781 = vpack.c.b16 %v635, %v633
  %v782 = vpack.c.b16 %v638, %v636
  %v783 = vpack.c.b16 %v639, %v637
  %928 = vmatprep.subr.bf16.mxu0 %v655
  %929 = vmatpush1.bf16.msra.mxu0 %v654
  %930 = vmatprep.subr.bf16.mxu0 %v653
  %931 = vmatpush1.bf16.msra.mxu0 %v652
  %932 = vmatprep.subr.bf16.mxu0 %v651
  %933 = vmatpush1.bf16.msra.mxu0 %v650
  %934 = vmatprep.subr.bf16.mxu0 %v649
  %935 = vmatpush1.bf16.msra.mxu0 %v648
  %936 = vmatprep.subr.bf16.mxu0 %v647
  %937 = vmatpush1.bf16.msra.mxu0 %v646
  %938 = vmatprep.subr.bf16.mxu0 %v645
  %939 = vmatpush1.bf16.msra.mxu0 %v644
  %940 = vmatprep.subr.bf16.mxu0 %v643
  %941 = vmatpush1.bf16.msra.mxu0 %v642
  %942 = vmatprep.subr.bf16.mxu0 %v641
  %943 = vmatpush1.bf16.msra.mxu0 %v640
  %944 = vmatprep.subr.bf16.mxu0 %v671
  %945 = vmatpush2.bf16.msra.mxu0 %v670
  %946 = vmatprep.subr.bf16.mxu0 %v669
  %947 = vmatpush2.bf16.msra.mxu0 %v668
  %948 = vmatprep.subr.bf16.mxu0 %v667
  %949 = vmatpush2.bf16.msra.mxu0 %v666
  %950 = vmatprep.subr.bf16.mxu0 %v665
  %951 = vmatpush2.bf16.msra.mxu0 %v664
  %952 = vmatprep.subr.bf16.mxu0 %v663
  %953 = vmatpush2.bf16.msra.mxu0 %v662
  %954 = vmatprep.subr.bf16.mxu0 %v661
  %955 = vmatpush2.bf16.msra.mxu0 %v660
  %956 = vmatprep.subr.bf16.mxu0 %v659
  %957 = vmatpush2.bf16.msra.mxu0 %v658
  %958 = vmatprep.subr.bf16.mxu0 %v657
  %959 = vmatpush2.bf16.msra.mxu0 %v656
  %960 = vmatprep.mubr.bf16.mxu0 %v191
  %961 = vmatmul.mubr.bf16.gmra.mxu0 %v190
  %v962 = vpop.f32.mrf.mxu0
  %v963 = vadd.f32 %v169, %v962
  %v964 = vpop.f32.mrf.mxu0
  %v965 = vadd.f32 %v173, %v964
  %v966 = vpop.f32.mrf.mxu0
  %v967 = vpop.f32.mrf.mxu0
  %968 = vdwg.mxu0
  %969 = vmatprep.subr.bf16.mxu0 %v687
  %970 = vmatpush1.bf16.msra.mxu0 %v686
  %971 = vmatprep.subr.bf16.mxu0 %v685
  %972 = vmatpush1.bf16.msra.mxu0 %v684
  %973 = vmatprep.subr.bf16.mxu0 %v683
  %974 = vmatpush1.bf16.msra.mxu0 %v682
  %975 = vmatprep.subr.bf16.mxu0 %v681
  %976 = vmatpush1.bf16.msra.mxu0 %v680
  %977 = vmatprep.subr.bf16.mxu0 %v679
  %978 = vmatpush1.bf16.msra.mxu0 %v678
  %979 = vmatprep.subr.bf16.mxu0 %v677
  %980 = vmatpush1.bf16.msra.mxu0 %v676
  %981 = vmatprep.subr.bf16.mxu0 %v675
  %982 = vmatpush1.bf16.msra.mxu0 %v674
  %983 = vmatprep.subr.bf16.mxu0 %v673
  %984 = vmatpush1.bf16.msra.mxu0 %v672
  %985 = vmatprep.subr.bf16.mxu0 %v703
  %986 = vmatpush2.bf16.msra.mxu0 %v702
  %987 = vmatprep.subr.bf16.mxu0 %v701
  %988 = vmatpush2.bf16.msra.mxu0 %v700
  %989 = vmatprep.subr.bf16.mxu0 %v699
  %990 = vmatpush2.bf16.msra.mxu0 %v698
  %991 = vmatprep.subr.bf16.mxu0 %v697
  %992 = vmatpush2.bf16.msra.mxu0 %v696
  %993 = vmatprep.subr.bf16.mxu0 %v695
  %994 = vmatpush2.bf16.msra.mxu0 %v694
  %995 = vmatprep.subr.bf16.mxu0 %v693
  %996 = vmatpush2.bf16.msra.mxu0 %v692
  %997 = vmatprep.subr.bf16.mxu0 %v691
  %998 = vmatpush2.bf16.msra.mxu0 %v690
  %999 = vmatprep.subr.bf16.mxu0 %v689
  %1000 = vmatpush2.bf16.msra.mxu0 %v688
  %1001 = vmatprep.mubr.bf16.mxu0 %v193
  %1002 = vmatmul.mubr.bf16.gmra.mxu0 %v192
  %v1003 = vpop.f32.mrf.mxu0
  %v1004 = vadd.f32 %v963, %v1003
  %v1005 = vpop.f32.mrf.mxu0
  %v1006 = vadd.f32 %v965, %v1005
  %v1007 = vpop.f32.mrf.mxu0
  %v1008 = vpop.f32.mrf.mxu0
  %1009 = vdwg.mxu0
  %1010 = vmatprep.subr.bf16.mxu0 %v719
  %1011 = vmatpush1.bf16.msra.mxu0 %v718
  %1012 = vmatprep.subr.bf16.mxu0 %v717
  %1013 = vmatpush1.bf16.msra.mxu0 %v716
  %1014 = vmatprep.subr.bf16.mxu0 %v715
  %1015 = vmatpush1.bf16.msra.mxu0 %v714
  %1016 = vmatprep.subr.bf16.mxu0 %v713
  %1017 = vmatpush1.bf16.msra.mxu0 %v712
  %1018 = vmatprep.subr.bf16.mxu0 %v711
  %1019 = vmatpush1.bf16.msra.mxu0 %v710
  %1020 = vmatprep.subr.bf16.mxu0 %v709
  %1021 = vmatpush1.bf16.msra.mxu0 %v708
  %1022 = vmatprep.subr.bf16.mxu0 %v707
  %1023 = vmatpush1.bf16.msra.mxu0 %v706
  %1024 = vmatprep.subr.bf16.mxu0 %v705
  %1025 = vmatpush1.bf16.msra.mxu0 %v704
  %1026 = vmatprep.subr.bf16.mxu0 %v735
  %1027 = vmatpush2.bf16.msra.mxu0 %v734
  %1028 = vmatprep.subr.bf16.mxu0 %v733
  %1029 = vmatpush2.bf16.msra.mxu0 %v732
  %1030 = vmatprep.subr.bf16.mxu0 %v731
  %1031 = vmatpush2.bf16.msra.mxu0 %v730
  %1032 = vmatprep.subr.bf16.mxu0 %v729
  %1033 = vmatpush2.bf16.msra.mxu0 %v728
  %1034 = vmatprep.subr.bf16.mxu0 %v727
  %1035 = vmatpush2.bf16.msra.mxu0 %v726
  %1036 = vmatprep.subr.bf16.mxu0 %v725
  %1037 = vmatpush2.bf16.msra.mxu0 %v724
  %1038 = vmatprep.subr.bf16.mxu0 %v723
  %1039 = vmatpush2.bf16.msra.mxu0 %v722
  %1040 = vmatprep.subr.bf16.mxu0 %v721
  %1041 = vmatpush2.bf16.msra.mxu0 %v720
  %1042 = vmatprep.mubr.bf16.mxu0 %v195
  %1043 = vmatmul.mubr.bf16.gmra.mxu0 %v194
  %v1044 = vpop.f32.mrf.mxu0
  %v1045 = vadd.f32 %v1004, %v1044
  %v1046 = vpop.f32.mrf.mxu0
  %v1047 = vadd.f32 %v1006, %v1046
  %v1048 = vpop.f32.mrf.mxu0
  %v1049 = vpop.f32.mrf.mxu0
  %1050 = vdwg.mxu0
  %1051 = vmatprep.subr.bf16.mxu0 %v751
  %1052 = vmatpush1.bf16.msra.mxu0 %v750
  %1053 = vmatprep.subr.bf16.mxu0 %v749
  %1054 = vmatpush1.bf16.msra.mxu0 %v748
  %1055 = vmatprep.subr.bf16.mxu0 %v747
  %1056 = vmatpush1.bf16.msra.mxu0 %v746
  %1057 = vmatprep.subr.bf16.mxu0 %v745
  %1058 = vmatpush1.bf16.msra.mxu0 %v744
  %1059 = vmatprep.subr.bf16.mxu0 %v743
  %1060 = vmatpush1.bf16.msra.mxu0 %v742
  %1061 = vmatprep.subr.bf16.mxu0 %v741
  %1062 = vmatpush1.bf16.msra.mxu0 %v740
  %1063 = vmatprep.subr.bf16.mxu0 %v739
  %1064 = vmatpush1.bf16.msra.mxu0 %v738
  %1065 = vmatprep.subr.bf16.mxu0 %v737
  %1066 = vmatpush1.bf16.msra.mxu0 %v736
  %1067 = vmatprep.subr.bf16.mxu0 %v767
  %1068 = vmatpush2.bf16.msra.mxu0 %v766
  %1069 = vmatprep.subr.bf16.mxu0 %v765
  %1070 = vmatpush2.bf16.msra.mxu0 %v764
  %1071 = vmatprep.subr.bf16.mxu0 %v763
  %1072 = vmatpush2.bf16.msra.mxu0 %v762
  %1073 = vmatprep.subr.bf16.mxu0 %v761
  %1074 = vmatpush2.bf16.msra.mxu0 %v760
  %1075 = vmatprep.subr.bf16.mxu0 %v759
  %1076 = vmatpush2.bf16.msra.mxu0 %v758
  %1077 = vmatprep.subr.bf16.mxu0 %v757
  %1078 = vmatpush2.bf16.msra.mxu0 %v756
  %1079 = vmatprep.subr.bf16.mxu0 %v755
  %1080 = vmatpush2.bf16.msra.mxu0 %v754
  %1081 = vmatprep.subr.bf16.mxu0 %v753
  %1082 = vmatpush2.bf16.msra.mxu0 %v752
  %1083 = vmatprep.mubr.bf16.mxu0 %v197
  %1084 = vmatmul.mubr.bf16.gmra.mxu0 %v196
  %v1085 = vpop.f32.mrf.mxu0
  %v1086 = vadd.f32 %v1045, %v1085
  %v1087 = vpop.f32.mrf.mxu0
  %v1088 = vadd.f32 %v1047, %v1087
  %v1089 = vpop.f32.mrf.mxu0
  %v1090 = vpop.f32.mrf.mxu0
  %1091 = vdwg.mxu0
  %1092 = vmatprep.subr.bf16.mxu0 %v783
  %1093 = vmatpush1.bf16.msra.mxu0 %v782
  %1094 = vmatprep.subr.bf16.mxu0 %v781
  %1095 = vmatpush1.bf16.msra.mxu0 %v780
  %1096 = vmatprep.subr.bf16.mxu0 %v779
  %1097 = vmatpush1.bf16.msra.mxu0 %v778
  %1098 = vmatprep.subr.bf16.mxu0 %v777
  %1099 = vmatpush1.bf16.msra.mxu0 %v776
  %1100 = vmatprep.subr.bf16.mxu0 %v775
  %1101 = vmatpush1.bf16.msra.mxu0 %v774
  %1102 = vmatprep.subr.bf16.mxu0 %v773
  %1103 = vmatpush1.bf16.msra.mxu0 %v772
  %1104 = vmatprep.subr.bf16.mxu0 %v771
  %1105 = vmatpush1.bf16.msra.mxu0 %v770
  %1106 = vmatprep.subr.bf16.mxu0 %v769
  %1107 = vmatpush1.bf16.msra.mxu0 %v768
  %1108 = vmatprep.subr.bf16.mxu0 0
  %1109 = vmatpush2.bf16.msra.mxu0 0
  %1110 = vmatprep.subr.bf16.mxu0 0
  %1111 = vmatpush2.bf16.msra.mxu0 0
  %1112 = vmatprep.subr.bf16.mxu0 0
  %1113 = vmatpush2.bf16.msra.mxu0 0
  %1114 = vmatprep.subr.bf16.mxu0 0
  %1115 = vmatpush2.bf16.msra.mxu0 0
  %1116 = vmatprep.subr.bf16.mxu0 0
  %1117 = vmatpush2.bf16.msra.mxu0 0
  %1118 = vmatprep.subr.bf16.mxu0 0
  %1119 = vmatpush2.bf16.msra.mxu0 0
  %1120 = vmatprep.subr.bf16.mxu0 0
  %1121 = vmatpush2.bf16.msra.mxu0 0
  %1122 = vmatprep.subr.bf16.mxu0 0
  %1123 = vmatpush2.bf16.msra.mxu0 0
  %1124 = vmatprep.mubr.bf16.mxu0 0
  %1125 = vmatmul.mubr.bf16.gmra.mxu0 %v198
  %v1126 = vpop.f32.mrf.mxu0
  %v1127 = vadd.f32 %v1086, %v1126
  %v1128 = vpop.f32.mrf.mxu0
  %v1129 = vadd.f32 %v1088, %v1128
  %v1130 = vpop.f32.mrf.mxu0
  %v1131 = vpop.f32.mrf.mxu0
  %1132 = vdwg.mxu0
  %v1133 = vmax.f32 %v1127, 0.0
  %v1134 = vmax.f32 %v1129, 0.0
  %v1135 = vpack.c.bf16 %v1133, %v1133
  %v1136 = vpack.c.bf16 %v1134, %v1134
  %v1139 = vunpack.c.l.b16 %v1135
  %v1140 = vunpack.c.l.b16 %v1136
  %v1141 = vpack.c.b16 %v1140, %v1139
  %1143 = vst [vmem:[%s3] sm:$0x77] %v1141
  // Predicated region
  $region14: #{_lambda_.8} parent=0 // pred_check
    _
  $region15: #{_lambda_.8} parent=0 // pred_check_branch
    %1145 = sbr.rel (0) target = $region17
  $region16: #{_lambda_.8} parent=0 // pred_region
    _
  $region17: #{_lambda_.8} parent=0 // pred_fallthru
    _
  // Predicated region
  $region18: #{_lambda_.8} parent=0 // pred_check
    _
  $region19: #{_lambda_.8} parent=0 // pred_check_branch
    %1147 = sbr.rel (0) target = $region21
  $region20: #{_lambda_.8} parent=0 // pred_region
    _
  $region21: #{_lambda_.8} parent=0 // pred_fallthru
    _

</llo_original>
